<compile_context>
chip_gen: v7x
topology: tpu7x:2x2x1
jax: 0.10.0
libtpu: 0.0.40
codegen_flags: <defaults>
</compile_context>

<pallas_src>
import math
from functools import partial

import jax
import jax.numpy as jnp
from jax.experimental import pallas as pl
from jax.experimental.pallas import tpu as pltpu

_NEG_INF = float("-inf")


def _eca_kernel_size(channels, gamma=2, b=1):
    k = int(abs((math.log(channels, 2) + b) / gamma))
    return k if k % 2 else k + 1


def efr_kernel(x_ref, w1_ref, w2_ref, b2_ref, o_ref, *, k, C, H, W, HWp, c_chunk):
    """One block of Bt batch images, lane-dense (Bt, C, HWp) layout.

    x_ref / o_ref: (Bt, C, HWp) VMEM blocks (HWp = H*W rounded up to 128, zero-padded).
    w1 (k,), w2 (2*49,), b2 (1,): SMEM scalars.
    The VMEM input block is re-read chunk-by-chunk in three passes so the full
    (Bt, C, HWp) f32 `out1` slab is never materialized (lower peak VMEM).
    """
    Bt = x_ref.shape[0]
    HW = H * W
    f32 = jnp.float32

    # Hoisted broadcasts / masks (never rebuild inside loops).
    hw_valid = None
    if HWp != HW:
        hw_valid = jax.lax.broadcasted_iota(jnp.int32, (1, 1, HWp), 2) < HW
    col = jax.lax.broadcasted_iota(jnp.int32, (1, HWp), 1) % W

    # ---------- Pass 1: per-channel HW mean + max (one traversal per chunk) ----------
    pooled = []
    for c0 in range(0, C, c_chunk):
        xc = x_ref[:, c0:c0 + c_chunk, :].astype(f32)            # (Bt, Cc, HWp)
        s = jnp.sum(xc, axis=2, keepdims=True) * f32(1.0 / HW)   # zero pad lanes don't bias sum
        xm = xc if hw_valid is None else jnp.where(hw_valid, xc, f32(_NEG_INF))
        m = jnp.max(xm, axis=2, keepdims=True)
        pooled.append(s + m)                                     # (Bt, Cc, 1)
    v = pooled[0] if len(pooled) == 1 else jnp.concatenate(pooled, axis=1)   # (Bt, C, 1)

    # ---------- ECA conv1d over channels (sublane axis -> no lane relayout) ----------
    pad = (k - 1) // 2
    vp = jnp.pad(v, ((0, 0), (pad, pad), (0, 0)))
    w1 = [w1_ref[j] for j in range(k)]                           # hoist SMEM scalar reads
    conv = w1[0] * vp[:, 0:C, :]
    for j in range(1, k):
        conv = conv + w1[j] * vp[:, j:j + C, :]
    gate = jax.nn.sigmoid(conv)                                  # (Bt, C, 1): broadcasts over lanes

    # ---------- Pass 2: fused C-mean / C-max of gate*x (out1 never materialized) -----
    avgout = jnp.zeros((Bt, HWp), f32)
    maxout = jnp.full((Bt, HWp), _NEG_INF, f32)
    for c0 in range(0, C, c_chunk):
        xc = x_ref[:, c0:c0 + c_chunk, :].astype(f32)
        oc = xc * gate[:, c0:c0 + c_chunk, :]                    # chunk of out1
        avgout = avgout + jnp.sum(oc, axis=1)
        maxout = jnp.maximum(maxout, jnp.max(oc, axis=1))
    avgout = avgout * f32(1.0 / C)
    # Padded lanes of avgout/maxout are exactly 0 (x is zero-padded there), which is
    # precisely the zero row-extension the flattened conv below relies on.

    # ---------- Spatial 7x7 conv on flattened, zero-extended planes -------------------
    off = 3 * W + 3
    pa = jnp.pad(avgout, ((0, 0), (off, off)))                   # (Bt, HWp + 6W + 6)
    pm = jnp.pad(maxout, ((0, 0), (off, off)))
    w2 = [w2_ref[t] for t in range(2 * 49)]                      # hoist SMEM scalar reads

    # TODO(synk): on v7x with very large Bt*HWp blocks, convert the inner i-loop to
    # lax.fori_loop (dynamic SMEM weight index + dynamic band load) to bound live
    # ranges; kept statically unrolled here because default v7x blocks are sized small
    # and static lane offsets lower most robustly.
    acc = jnp.zeros((Bt, HWp), f32)
    for j in range(7):
        dj = j - 3
        inner = jnp.zeros((Bt, HWp), f32)
        for i in range(7):
            di = i - 3
            s0 = off + di * W + dj                               # one static lane shift per tap
            inner = inner + w2[i * 7 + j] * pa[:, s0:s0 + HWp]
            inner = inner + w2[49 + i * 7 + j] * pm[:, s0:s0 + HWp]
        valid = jnp.logical_and(col + dj >= 0, col + dj < W)
        acc = acc + jnp.where(valid, inner, f32(0.0))

    sgm = jax.nn.sigmoid(acc + b2_ref[0])
    attn = jnp.where(sgm >= f32(0.2), sgm, f32(0.0))             # (Bt, HWp)
    attn_b = attn[:, None, :]

    # ---------- Pass 3: o = x * gate * attn, written chunk-by-chunk -------------------
    for c0 in range(0, C, c_chunk):
        xc = x_ref[:, c0:c0 + c_chunk, :].astype(f32)
        o_ref[:, c0:c0 + c_chunk, :] = (
            xc * gate[:, c0:c0 + c_chunk, :] * attn_b
        ).astype(o_ref.dtype)


def _tpu_vmem_and_cores():
    """(per-core VMEM bytes, has-two-tensorcores?) with safe fallbacks."""
    vmem = None
    try:
        info = pltpu.get_tpu_info()
        vmem = int(getattr(info, "vmem_capacity_bytes", 0)) or None
    except Exception:
        vmem = None
    kind = ""
    try:
        kind = jax.devices()[0].device_kind.lower().replace(" ", "")
    except Exception:
        pass
    if vmem is None:
        vmem = 64 << 20                       # conservative default (v7x per-TC size)
    two_tc = (vmem <= (64 << 20)) or ("tpu7" in kind) or ("v7" in kind)
    return vmem, two_tc


def _pick_batch_tile(B, per_image_bytes, budget_bytes, two_tc):
    """Largest batch tile whose x-block fits the budget.  On 2-TC chips (v7x) prefer
    an even number of grid steps (both TensorCores get equal work); on single-TC
    chips simply maximize the tile (fewer, bigger steps)."""
    divs = [d for d in range(1, B + 1) if B % d == 0]
    fits = [d for d in divs if d * per_image_bytes <= budget_bytes] or [1]
    if not two_tc:
        return max(fits)
    even_steps = [d for d in fits if (B // d) % 2 == 0]
    if even_steps:
        return max(even_steps)
    multi_steps = [d for d in fits if B // d >= 2]
    if multi_steps:
        return max(multi_steps)
    return max(fits)


def _pick_c_chunk(C, block_b, hwp, chunk_budget=2 << 20, max_chunks=16):
    """Divisor of C: chunks small enough to bound the per-pass f32 working set, but
    not so small that the static chunk loops blow up the trace."""
    divs = [d for d in range(1, C + 1) if C % d == 0]
    under = [d for d in divs if block_b * d * hwp * 4 <= chunk_budget]
    c_chunk = max(under) if under else divs[0]
    while C // c_chunk > max_chunks:
        bigger = [d for d in divs if d > c_chunk]
        c_chunk = bigger[0] if bigger else C
    return c_chunk


def efr_forward(x, w1, w2_flat, b2, *, block_b=None):
    B, C, H, W = x.shape
    HW = H * W
    HWp = ((HW + 127) // 128) * 128           # lane-dense minor dim -> unmasked vld/vst
    k = w1.shape[0]
    itemsize = jnp.dtype(x.dtype).itemsize

    vmem_bytes, two_tc = _tpu_vmem_and_cores()
    # Generation-aware input-block budget: big blocks on 128 MiB chips (v5e/v6e),
    # modest blocks on v7x (64 MiB/TC) to keep spill headroom.
    block_budget = (4 << 20) if vmem_bytes <= (64 << 20) else (12 << 20)

    per_image_bytes = C * HWp * itemsize
    if block_b is None:
        block_b = _pick_batch_tile(B, per_image_bytes, block_budget, two_tc)
    assert B % block_b == 0

    c_chunk = _pick_c_chunk(C, block_b, HWp)

    # Explicit VMEM budget: double-buffered in/out blocks + f32 temporaries
    # (pooled planes, pa/pm, acc/attn, one x chunk in f32) + 25% margin.
    in_block = block_b * per_image_bytes
    plane = block_b * HWp * 4
    chunk_bytes = block_b * c_chunk * HWp * 4
    needed = 4 * in_block + 10 * plane + 4 * chunk_bytes
    vmem_limit = int(min(int(0.85 * vmem_bytes),
                         max(16 << 20, needed + (needed >> 2))))

    x_flat = x.reshape(B, C, HW)
    if HWp != HW:
        x_flat = jnp.pad(x_flat, ((0, 0), (0, 0), (0, HWp - HW)))

    kernel = partial(efr_kernel, k=k, C=C, H=H, W=W, HWp=HWp, c_chunk=c_chunk)
    out_flat = pl.pallas_call(
        kernel,
        out_shape=jax.ShapeDtypeStruct((B, C, HWp), x.dtype),
        grid=(B // block_b,),
        in_specs=[
            pl.BlockSpec((block_b, C, HWp), lambda b: (b, 0, 0)),
            pl.BlockSpec(memory_space=pltpu.MemorySpace.SMEM),   # conv1d weight (k,)
            pl.BlockSpec(memory_space=pltpu.MemorySpace.SMEM),   # conv2d weight (98,)
            pl.BlockSpec(memory_space=pltpu.MemorySpace.SMEM),   # conv2d bias (1,)
        ],
        out_specs=pl.BlockSpec((block_b, C, HWp), lambda b: (b, 0, 0)),
        compiler_params=pltpu.CompilerParams(
            dimension_semantics=("parallel",),
            vmem_limit_bytes=vmem_limit,
        ),
    )(x_flat, w1, w2_flat, b2)
    return out_flat[:, :, :HW].reshape(B, C, H, W)


def efr_reference(x, w1, w2_flat, b2):
    """Pure-JAX reference mirroring the PyTorch forward."""
    B, C, H, W = x.shape
    k = w1.shape[0]
    pad = (k - 1) // 2
    avg = jnp.mean(x, axis=(2, 3))
    mx = jnp.max(x, axis=(2, 3))
    v = avg + mx                                     # (B, C)
    vp = jnp.pad(v, ((0, 0), (pad, pad)))
    conv = sum(w1[j] * vp[:, j:j + C] for j in range(k))
    gate = jax.nn.sigmoid(conv)
    out1 = x * gate[:, :, None, None]
    a = jnp.mean(out1, axis=1)
    m = jnp.max(out1, axis=1)
    pa = jnp.pad(a, ((0, 0), (3, 3), (3, 3)))
    pm = jnp.pad(m, ((0, 0), (3, 3), (3, 3)))
    w2r = w2_flat.reshape(2, 7, 7)
    acc = jnp.zeros((B, H, W), jnp.float32)
    for i in range(7):
        for j in range(7):
            acc = acc + w2r[0, i, j] * pa[:, i:i + H, j:j + W]
            acc = acc + w2r[1, i, j] * pm[:, i:i + H, j:j + W]
    s = jax.nn.sigmoid(acc + b2[0])
    attn = jnp.where(s >= 0.2, s, 0.0)
    return attn[:, None] * out1


if __name__ == "__main__":
    def _run_case(B, C, H, W, case):
        k = _eca_kernel_size(C)
        key = jax.random.fold_in(jax.random.PRNGKey(0), case)
        kx, k1, k2, kb = jax.random.split(key, 4)
        x = jax.random.normal(kx, (B, C, H, W), jnp.float32)
        # nn.Conv1d(1, 1, k, bias=False): weight (1,1,k) -> flattened (k,)
        w1 = jax.random.normal(k1, (k,), jnp.float32) * (1.0 / math.sqrt(k))
        # nn.Conv2d(2, 1, 7, padding=3): weight (1,2,7,7) -> flattened (98,), bias (1,)
        w2 = jax.random.normal(k2, (2 * 7 * 7,), jnp.float32) * (1.0 / math.sqrt(2 * 49))
        b2 = jax.random.normal(kb, (1,), jnp.float32) * 0.1
        out = efr_forward(x, w1, w2, b2)
        jax.block_until_ready(out)
        ref = efr_reference(x, w1, w2, b2)
        err = float(jnp.max(jnp.abs(out - ref)))
        assert jnp.allclose(out, ref, atol=1e-4, rtol=1e-4), \
            f"case ({B},{C},{H},{W}): max abs err {err}"

    _run_case(2, 8, 16, 16, 0)     # HW = 256: already lane-aligned (ECA k=3)
    _run_case(2, 8, 10, 10, 1)     # HW = 100: padded to 128 lanes (pad path, k=3)
    _run_case(2, 128, 8, 8, 2)     # HW = 64: padded lanes + wider C (ECA k=5)
    print("KERNEL_OK")
</pallas_src>

<mosaic_0001>
module attributes {stable_mosaic.version = 11 : i64} {
  func.func @efr_kernel(%arg0: i32, %arg1: memref<1x8x256xf32, #tpu.memory_space<vmem>>, %arg2: memref<3xf32, #tpu.memory_space<smem>>, %arg3: memref<98xf32, #tpu.memory_space<smem>>, %arg4: memref<1xf32, #tpu.memory_space<smem>>, %arg5: memref<1x8x256xf32, #tpu.memory_space<vmem>>) attributes {dimension_semantics = [#tpu.dimension_semantics<parallel>], iteration_bounds = array<i64: 2>, scalar_prefetch = 0 : i64, scratch_operands = 0 : i64, tpu.core_type = #tpu.core_type<tc>, window_params = [{transform_indices = @transform_0, window_bounds = array<i64: 1, 8, 256>}, {transform_indices = @transform_1, window_bounds = array<i64: 3>}, {transform_indices = @transform_2, window_bounds = array<i64: 98>}, {transform_indices = @transform_3, window_bounds = array<i64: 1>}, {transform_indices = @transform_4, window_bounds = array<i64: 1, 8, 256>}]} {
    %0 = tpu.iota {dimensions = array<i32: 1>} : vector<1x256xi32>
    %c16_i32 = arith.constant 16 : i32
    %c0_i32 = arith.constant 0 : i32
    %1 = arith.cmpi eq, %c16_i32, %c0_i32 : i32
    %c1_i32 = arith.constant 1 : i32
    %2 = arith.select %1, %c1_i32, %c16_i32 : i32
    %3 = vector.broadcast %2 : i32 to vector<1x256xi32>
    %4 = arith.remsi %0, %3 : vector<1x256xi32>
    %c0_i32_0 = arith.constant 0 : i32
    %5 = vector.broadcast %c0_i32_0 : i32 to vector<1x256xi32>
    %6 = arith.cmpi ne, %4, %5 : vector<1x256xi32>
    %c0_i32_1 = arith.constant 0 : i32
    %7 = vector.broadcast %c0_i32_1 : i32 to vector<1x256xi32>
    %8 = arith.cmpi slt, %4, %7 : vector<1x256xi32>
    %c0_i32_2 = arith.constant 0 : i32
    %9 = arith.cmpi slt, %2, %c0_i32_2 : i32
    %10 = vector.broadcast %9 : i1 to vector<1x256xi1>
    %11 = vector.broadcast %10 : vector<1x256xi1> to vector<1x256xi1>
    %12 = arith.xori %8, %11 : vector<1x256xi1>
    %13 = arith.andi %12, %6 : vector<1x256xi1>
    %14 = vector.broadcast %2 : i32 to vector<1x256xi32>
    %15 = arith.addi %4, %14 : vector<1x256xi32>
    %16 = arith.select %13, %15, %4 : vector<1x256xi1>, vector<1x256xi32>
    %c0 = arith.constant 0 : index
    %c0_3 = arith.constant 0 : index
    %c0_4 = arith.constant 0 : index
    %17 = vector.load %arg1[%c0, %c0_3, %c0_4] : memref<1x8x256xf32, #tpu.memory_space<vmem>>, vector<1x8x256xf32>
    %cst = arith.constant dense<0.000000e+00> : vector<1x8xf32>
    %18 = vector.multi_reduction <add>, %17, %cst [2] : vector<1x8x256xf32> to vector<1x8xf32>
    %19 = vector.shape_cast %18 : vector<1x8xf32> to vector<1x8x1xf32>
    %cst_5 = arith.constant 3.906250e-03 : f32
    %20 = vector.broadcast %cst_5 : f32 to vector<1x8x1xf32>
    %21 = arith.mulf %19, %20 : vector<1x8x1xf32>
    %cst_6 = arith.constant dense<0xFF800000> : vector<1x8xf32>
    %22 = vector.multi_reduction <maximumf>, %17, %cst_6 [2] : vector<1x8x256xf32> to vector<1x8xf32>
    %23 = vector.shape_cast %22 : vector<1x8xf32> to vector<1x8x1xf32>
    %24 = arith.addf %21, %23 : vector<1x8x1xf32>
    %c0_i32_7 = arith.constant 0 : i32
    %25 = arith.sitofp %c0_i32_7 : i32 to f32
    %26 = vector.broadcast %25 : f32 to vector<1x1x1xf32>
    %27 = tpu.concatenate %26, %24 in 1 : vector<1x1x1xf32>, vector<1x8x1xf32> -> vector<1x9x1xf32>
    %28 = vector.broadcast %25 : f32 to vector<1x1x1xf32>
    %29 = tpu.concatenate %27, %28 in 1 : vector<1x9x1xf32>, vector<1x1x1xf32> -> vector<1x10x1xf32>
    %c0_8 = arith.constant 0 : index
    %30 = memref.load %arg2[%c0_8] : memref<3xf32, #tpu.memory_space<smem>>
    %c1 = arith.constant 1 : index
    %31 = memref.load %arg2[%c1] : memref<3xf32, #tpu.memory_space<smem>>
    %c2 = arith.constant 2 : index
    %32 = memref.load %arg2[%c2] : memref<3xf32, #tpu.memory_space<smem>>
    %33 = vector.extract_strided_slice %29 {offsets = [0, 0, 0], sizes = [1, 8, 1], strides = [1, 1, 1]} : vector<1x10x1xf32> to vector<1x8x1xf32>
    %34 = vector.broadcast %30 : f32 to vector<1x8x1xf32>
    %35 = arith.mulf %34, %33 : vector<1x8x1xf32>
    %36 = vector.extract_strided_slice %29 {offsets = [0, 1, 0], sizes = [1, 8, 1], strides = [1, 1, 1]} : vector<1x10x1xf32> to vector<1x8x1xf32>
    %37 = vector.broadcast %31 : f32 to vector<1x8x1xf32>
    %38 = arith.mulf %37, %36 : vector<1x8x1xf32>
    %39 = arith.addf %35, %38 : vector<1x8x1xf32>
    %40 = vector.extract_strided_slice %29 {offsets = [0, 2, 0], sizes = [1, 8, 1], strides = [1, 1, 1]} : vector<1x10x1xf32> to vector<1x8x1xf32>
    %41 = vector.broadcast %32 : f32 to vector<1x8x1xf32>
    %42 = arith.mulf %41, %40 : vector<1x8x1xf32>
    %43 = arith.addf %39, %42 : vector<1x8x1xf32>
    %44 = arith.negf %43 : vector<1x8x1xf32>
    %45 = math.exp %44 : vector<1x8x1xf32>
    %cst_9 = arith.constant 1.000000e+00 : f32
    %46 = vector.broadcast %cst_9 : f32 to vector<1x8x1xf32>
    %47 = arith.addf %46, %45 : vector<1x8x1xf32>
    %48 = arith.divf %46, %47 : vector<1x8x1xf32>
    %cst_10 = arith.constant 0.000000e+00 : f32
    %49 = vector.broadcast %cst_10 : f32 to vector<1x256xf32>
    %cst_11 = arith.constant 0xFF800000 : f32
    %50 = vector.broadcast %cst_11 : f32 to vector<1x256xf32>
    %c0_12 = arith.constant 0 : index
    %c0_13 = arith.constant 0 : index
    %c0_14 = arith.constant 0 : index
    %51 = vector.load %arg1[%c0_12, %c0_13, %c0_14] : memref<1x8x256xf32, #tpu.memory_space<vmem>>, vector<1x8x256xf32>
    %52 = vector.broadcast %48 : vector<1x8x1xf32> to vector<1x8x256xf32>
    %53 = arith.mulf %51, %52 : vector<1x8x256xf32>
    %cst_15 = arith.constant dense<0.000000e+00> : vector<1x256xf32>
    %54 = vector.multi_reduction <add>, %53, %cst_15 [1] : vector<1x8x256xf32> to vector<1x256xf32>
    %55 = arith.addf %49, %54 : vector<1x256xf32>
    %cst_16 = arith.constant dense<0xFF800000> : vector<1x256xf32>
    %56 = vector.multi_reduction <maximumf>, %53, %cst_16 [1] : vector<1x8x256xf32> to vector<1x256xf32>
    %57 = arith.maximumf %50, %56 : vector<1x256xf32>
    %cst_17 = arith.constant 1.250000e-01 : f32
    %58 = vector.broadcast %cst_17 : f32 to vector<1x256xf32>
    %59 = arith.mulf %55, %58 : vector<1x256xf32>
    %c0_i32_18 = arith.constant 0 : i32
    %60 = arith.sitofp %c0_i32_18 : i32 to f32
    %61 = vector.broadcast %60 : f32 to vector<1x51xf32>
    %62 = tpu.concatenate %61, %59 in 1 : vector<1x51xf32>, vector<1x256xf32> -> vector<1x307xf32>
    %63 = vector.broadcast %60 : f32 to vector<1x51xf32>
    %64 = tpu.concatenate %62, %63 in 1 : vector<1x307xf32>, vector<1x51xf32> -> vector<1x358xf32>
    %c0_i32_19 = arith.constant 0 : i32
    %65 = arith.sitofp %c0_i32_19 : i32 to f32
    %66 = vector.broadcast %65 : f32 to vector<1x51xf32>
    %67 = tpu.concatenate %66, %57 in 1 : vector<1x51xf32>, vector<1x256xf32> -> vector<1x307xf32>
    %68 = vector.broadcast %65 : f32 to vector<1x51xf32>
    %69 = tpu.concatenate %67, %68 in 1 : vector<1x307xf32>, vector<1x51xf32> -> vector<1x358xf32>
    %c0_20 = arith.constant 0 : index
    %70 = memref.load %arg3[%c0_20] : memref<98xf32, #tpu.memory_space<smem>>
    %c1_21 = arith.constant 1 : index
    %71 = memref.load %arg3[%c1_21] : memref<98xf32, #tpu.memory_space<smem>>
    %c2_22 = arith.constant 2 : index
    %72 = memref.load %arg3[%c2_22] : memref<98xf32, #tpu.memory_space<smem>>
    %c3 = arith.constant 3 : index
    %73 = memref.load %arg3[%c3] : memref<98xf32, #tpu.memory_space<smem>>
    %c4 = arith.constant 4 : index
    %74 = memref.load %arg3[%c4] : memref<98xf32, #tpu.memory_space<smem>>
    %c5 = arith.constant 5 : index
    %75 = memref.load %arg3[%c5] : memref<98xf32, #tpu.memory_space<smem>>
    %c6 = arith.constant 6 : index
    %76 = memref.load %arg3[%c6] : memref<98xf32, #tpu.memory_space<smem>>
    %c7 = arith.constant 7 : index
    %77 = memref.load %arg3[%c7] : memref<98xf32, #tpu.memory_space<smem>>
    %c8 = arith.constant 8 : index
    %78 = memref.load %arg3[%c8] : memref<98xf32, #tpu.memory_space<smem>>
    %c9 = arith.constant 9 : index
    %79 = memref.load %arg3[%c9] : memref<98xf32, #tpu.memory_space<smem>>
    %c10 = arith.constant 10 : index
    %80 = memref.load %arg3[%c10] : memref<98xf32, #tpu.memory_space<smem>>
    %c11 = arith.constant 11 : index
    %81 = memref.load %arg3[%c11] : memref<98xf32, #tpu.memory_space<smem>>
    %c12 = arith.constant 12 : index
    %82 = memref.load %arg3[%c12] : memref<98xf32, #tpu.memory_space<smem>>
    %c13 = arith.constant 13 : index
    %83 = memref.load %arg3[%c13] : memref<98xf32, #tpu.memory_space<smem>>
    %c14 = arith.constant 14 : index
    %84 = memref.load %arg3[%c14] : memref<98xf32, #tpu.memory_space<smem>>
    %c15 = arith.constant 15 : index
    %85 = memref.load %arg3[%c15] : memref<98xf32, #tpu.memory_space<smem>>
    %c16 = arith.constant 16 : index
    %86 = memref.load %arg3[%c16] : memref<98xf32, #tpu.memory_space<smem>>
    %c17 = arith.constant 17 : index
    %87 = memref.load %arg3[%c17] : memref<98xf32, #tpu.memory_space<smem>>
    %c18 = arith.constant 18 : index
    %88 = memref.load %arg3[%c18] : memref<98xf32, #tpu.memory_space<smem>>
    %c19 = arith.constant 19 : index
    %89 = memref.load %arg3[%c19] : memref<98xf32, #tpu.memory_space<smem>>
    %c20 = arith.constant 20 : index
    %90 = memref.load %arg3[%c20] : memref<98xf32, #tpu.memory_space<smem>>
    %c21 = arith.constant 21 : index
    %91 = memref.load %arg3[%c21] : memref<98xf32, #tpu.memory_space<smem>>
    %c22 = arith.constant 22 : index
    %92 = memref.load %arg3[%c22] : memref<98xf32, #tpu.memory_space<smem>>
    %c23 = arith.constant 23 : index
    %93 = memref.load %arg3[%c23] : memref<98xf32, #tpu.memory_space<smem>>
    %c24 = arith.constant 24 : index
    %94 = memref.load %arg3[%c24] : memref<98xf32, #tpu.memory_space<smem>>
    %c25 = arith.constant 25 : index
    %95 = memref.load %arg3[%c25] : memref<98xf32, #tpu.memory_space<smem>>
    %c26 = arith.constant 26 : index
    %96 = memref.load %arg3[%c26] : memref<98xf32, #tpu.memory_space<smem>>
    %c27 = arith.constant 27 : index
    %97 = memref.load %arg3[%c27] : memref<98xf32, #tpu.memory_space<smem>>
    %c28 = arith.constant 28 : index
    %98 = memref.load %arg3[%c28] : memref<98xf32, #tpu.memory_space<smem>>
    %c29 = arith.constant 29 : index
    %99 = memref.load %arg3[%c29] : memref<98xf32, #tpu.memory_space<smem>>
    %c30 = arith.constant 30 : index
    %100 = memref.load %arg3[%c30] : memref<98xf32, #tpu.memory_space<smem>>
    %c31 = arith.constant 31 : index
    %101 = memref.load %arg3[%c31] : memref<98xf32, #tpu.memory_space<smem>>
    %c32 = arith.constant 32 : index
    %102 = memref.load %arg3[%c32] : memref<98xf32, #tpu.memory_space<smem>>
    %c33 = arith.constant 33 : index
    %103 = memref.load %arg3[%c33] : memref<98xf32, #tpu.memory_space<smem>>
    %c34 = arith.constant 34 : index
    %104 = memref.load %arg3[%c34] : memref<98xf32, #tpu.memory_space<smem>>
    %c35 = arith.constant 35 : index
    %105 = memref.load %arg3[%c35] : memref<98xf32, #tpu.memory_space<smem>>
    %c36 = arith.constant 36 : index
    %106 = memref.load %arg3[%c36] : memref<98xf32, #tpu.memory_space<smem>>
    %c37 = arith.constant 37 : index
    %107 = memref.load %arg3[%c37] : memref<98xf32, #tpu.memory_space<smem>>
    %c38 = arith.constant 38 : index
    %108 = memref.load %arg3[%c38] : memref<98xf32, #tpu.memory_space<smem>>
    %c39 = arith.constant 39 : index
    %109 = memref.load %arg3[%c39] : memref<98xf32, #tpu.memory_space<smem>>
    %c40 = arith.constant 40 : index
    %110 = memref.load %arg3[%c40] : memref<98xf32, #tpu.memory_space<smem>>
    %c41 = arith.constant 41 : index
    %111 = memref.load %arg3[%c41] : memref<98xf32, #tpu.memory_space<smem>>
    %c42 = arith.constant 42 : index
    %112 = memref.load %arg3[%c42] : memref<98xf32, #tpu.memory_space<smem>>
    %c43 = arith.constant 43 : index
    %113 = memref.load %arg3[%c43] : memref<98xf32, #tpu.memory_space<smem>>
    %c44 = arith.constant 44 : index
    %114 = memref.load %arg3[%c44] : memref<98xf32, #tpu.memory_space<smem>>
    %c45 = arith.constant 45 : index
    %115 = memref.load %arg3[%c45] : memref<98xf32, #tpu.memory_space<smem>>
    %c46 = arith.constant 46 : index
    %116 = memref.load %arg3[%c46] : memref<98xf32, #tpu.memory_space<smem>>
    %c47 = arith.constant 47 : index
    %117 = memref.load %arg3[%c47] : memref<98xf32, #tpu.memory_space<smem>>
    %c48 = arith.constant 48 : index
    %118 = memref.load %arg3[%c48] : memref<98xf32, #tpu.memory_space<smem>>
    %c49 = arith.constant 49 : index
    %119 = memref.load %arg3[%c49] : memref<98xf32, #tpu.memory_space<smem>>
    %c50 = arith.constant 50 : index
    %120 = memref.load %arg3[%c50] : memref<98xf32, #tpu.memory_space<smem>>
    %c51 = arith.constant 51 : index
    %121 = memref.load %arg3[%c51] : memref<98xf32, #tpu.memory_space<smem>>
    %c52 = arith.constant 52 : index
    %122 = memref.load %arg3[%c52] : memref<98xf32, #tpu.memory_space<smem>>
    %c53 = arith.constant 53 : index
    %123 = memref.load %arg3[%c53] : memref<98xf32, #tpu.memory_space<smem>>
    %c54 = arith.constant 54 : index
    %124 = memref.load %arg3[%c54] : memref<98xf32, #tpu.memory_space<smem>>
    %c55 = arith.constant 55 : index
    %125 = memref.load %arg3[%c55] : memref<98xf32, #tpu.memory_space<smem>>
    %c56 = arith.constant 56 : index
    %126 = memref.load %arg3[%c56] : memref<98xf32, #tpu.memory_space<smem>>
    %c57 = arith.constant 57 : index
    %127 = memref.load %arg3[%c57] : memref<98xf32, #tpu.memory_space<smem>>
    %c58 = arith.constant 58 : index
    %128 = memref.load %arg3[%c58] : memref<98xf32, #tpu.memory_space<smem>>
    %c59 = arith.constant 59 : index
    %129 = memref.load %arg3[%c59] : memref<98xf32, #tpu.memory_space<smem>>
    %c60 = arith.constant 60 : index
    %130 = memref.load %arg3[%c60] : memref<98xf32, #tpu.memory_space<smem>>
    %c61 = arith.constant 61 : index
    %131 = memref.load %arg3[%c61] : memref<98xf32, #tpu.memory_space<smem>>
    %c62 = arith.constant 62 : index
    %132 = memref.load %arg3[%c62] : memref<98xf32, #tpu.memory_space<smem>>
    %c63 = arith.constant 63 : index
    %133 = memref.load %arg3[%c63] : memref<98xf32, #tpu.memory_space<smem>>
    %c64 = arith.constant 64 : index
    %134 = memref.load %arg3[%c64] : memref<98xf32, #tpu.memory_space<smem>>
    %c65 = arith.constant 65 : index
    %135 = memref.load %arg3[%c65] : memref<98xf32, #tpu.memory_space<smem>>
    %c66 = arith.constant 66 : index
    %136 = memref.load %arg3[%c66] : memref<98xf32, #tpu.memory_space<smem>>
    %c67 = arith.constant 67 : index
    %137 = memref.load %arg3[%c67] : memref<98xf32, #tpu.memory_space<smem>>
    %c68 = arith.constant 68 : index
    %138 = memref.load %arg3[%c68] : memref<98xf32, #tpu.memory_space<smem>>
    %c69 = arith.constant 69 : index
    %139 = memref.load %arg3[%c69] : memref<98xf32, #tpu.memory_space<smem>>
    %c70 = arith.constant 70 : index
    %140 = memref.load %arg3[%c70] : memref<98xf32, #tpu.memory_space<smem>>
    %c71 = arith.constant 71 : index
    %141 = memref.load %arg3[%c71] : memref<98xf32, #tpu.memory_space<smem>>
    %c72 = arith.constant 72 : index
    %142 = memref.load %arg3[%c72] : memref<98xf32, #tpu.memory_space<smem>>
    %c73 = arith.constant 73 : index
    %143 = memref.load %arg3[%c73] : memref<98xf32, #tpu.memory_space<smem>>
    %c74 = arith.constant 74 : index
    %144 = memref.load %arg3[%c74] : memref<98xf32, #tpu.memory_space<smem>>
    %c75 = arith.constant 75 : index
    %145 = memref.load %arg3[%c75] : memref<98xf32, #tpu.memory_space<smem>>
    %c76 = arith.constant 76 : index
    %146 = memref.load %arg3[%c76] : memref<98xf32, #tpu.memory_space<smem>>
    %c77 = arith.constant 77 : index
    %147 = memref.load %arg3[%c77] : memref<98xf32, #tpu.memory_space<smem>>
    %c78 = arith.constant 78 : index
    %148 = memref.load %arg3[%c78] : memref<98xf32, #tpu.memory_space<smem>>
    %c79 = arith.constant 79 : index
    %149 = memref.load %arg3[%c79] : memref<98xf32, #tpu.memory_space<smem>>
    %c80 = arith.constant 80 : index
    %150 = memref.load %arg3[%c80] : memref<98xf32, #tpu.memory_space<smem>>
    %c81 = arith.constant 81 : index
    %151 = memref.load %arg3[%c81] : memref<98xf32, #tpu.memory_space<smem>>
    %c82 = arith.constant 82 : index
    %152 = memref.load %arg3[%c82] : memref<98xf32, #tpu.memory_space<smem>>
    %c83 = arith.constant 83 : index
    %153 = memref.load %arg3[%c83] : memref<98xf32, #tpu.memory_space<smem>>
    %c84 = arith.constant 84 : index
    %154 = memref.load %arg3[%c84] : memref<98xf32, #tpu.memory_space<smem>>
    %c85 = arith.constant 85 : index
    %155 = memref.load %arg3[%c85] : memref<98xf32, #tpu.memory_space<smem>>
    %c86 = arith.constant 86 : index
    %156 = memref.load %arg3[%c86] : memref<98xf32, #tpu.memory_space<smem>>
    %c87 = arith.constant 87 : index
    %157 = memref.load %arg3[%c87] : memref<98xf32, #tpu.memory_space<smem>>
    %c88 = arith.constant 88 : index
    %158 = memref.load %arg3[%c88] : memref<98xf32, #tpu.memory_space<smem>>
    %c89 = arith.constant 89 : index
    %159 = memref.load %arg3[%c89] : memref<98xf32, #tpu.memory_space<smem>>
    %c90 = arith.constant 90 : index
    %160 = memref.load %arg3[%c90] : memref<98xf32, #tpu.memory_space<smem>>
    %c91 = arith.constant 91 : index
    %161 = memref.load %arg3[%c91] : memref<98xf32, #tpu.memory_space<smem>>
    %c92 = arith.constant 92 : index
    %162 = memref.load %arg3[%c92] : memref<98xf32, #tpu.memory_space<smem>>
    %c93 = arith.constant 93 : index
    %163 = memref.load %arg3[%c93] : memref<98xf32, #tpu.memory_space<smem>>
    %c94 = arith.constant 94 : index
    %164 = memref.load %arg3[%c94] : memref<98xf32, #tpu.memory_space<smem>>
    %c95 = arith.constant 95 : index
    %165 = memref.load %arg3[%c95] : memref<98xf32, #tpu.memory_space<smem>>
    %c96 = arith.constant 96 : index
    %166 = memref.load %arg3[%c96] : memref<98xf32, #tpu.memory_space<smem>>
    %c97 = arith.constant 97 : index
    %167 = memref.load %arg3[%c97] : memref<98xf32, #tpu.memory_space<smem>>
    %cst_23 = arith.constant 0.000000e+00 : f32
    %168 = vector.broadcast %cst_23 : f32 to vector<1x256xf32>
    %cst_24 = arith.constant 0.000000e+00 : f32
    %169 = vector.broadcast %cst_24 : f32 to vector<1x256xf32>
    %170 = vector.extract_strided_slice %64 {offsets = [0, 0], sizes = [1, 256], strides = [1, 1]} : vector<1x358xf32> to vector<1x256xf32>
    %171 = vector.broadcast %70 : f32 to vector<1x256xf32>
    %172 = arith.mulf %171, %170 : vector<1x256xf32>
    %173 = arith.addf %169, %172 : vector<1x256xf32>
    %174 = vector.extract_strided_slice %69 {offsets = [0, 0], sizes = [1, 256], strides = [1, 1]} : vector<1x358xf32> to vector<1x256xf32>
    %175 = vector.broadcast %119 : f32 to vector<1x256xf32>
    %176 = arith.mulf %175, %174 : vector<1x256xf32>
    %177 = arith.addf %173, %176 : vector<1x256xf32>
    %178 = vector.extract_strided_slice %64 {offsets = [0, 16], sizes = [1, 256], strides = [1, 1]} : vector<1x358xf32> to vector<1x256xf32>
    %179 = vector.broadcast %77 : f32 to vector<1x256xf32>
    %180 = arith.mulf %179, %178 : vector<1x256xf32>
    %181 = arith.addf %177, %180 : vector<1x256xf32>
    %182 = vector.extract_strided_slice %69 {offsets = [0, 16], sizes = [1, 256], strides = [1, 1]} : vector<1x358xf32> to vector<1x256xf32>
    %183 = vector.broadcast %126 : f32 to vector<1x256xf32>
    %184 = arith.mulf %183, %182 : vector<1x256xf32>
    %185 = arith.addf %181, %184 : vector<1x256xf32>
    %186 = vector.extract_strided_slice %64 {offsets = [0, 32], sizes = [1, 256], strides = [1, 1]} : vector<1x358xf32> to vector<1x256xf32>
    %187 = vector.broadcast %84 : f32 to vector<1x256xf32>
    %188 = arith.mulf %187, %186 : vector<1x256xf32>
    %189 = arith.addf %185, %188 : vector<1x256xf32>
    %190 = vector.extract_strided_slice %69 {offsets = [0, 32], sizes = [1, 256], strides = [1, 1]} : vector<1x358xf32> to vector<1x256xf32>
    %191 = vector.broadcast %133 : f32 to vector<1x256xf32>
    %192 = arith.mulf %191, %190 : vector<1x256xf32>
    %193 = arith.addf %189, %192 : vector<1x256xf32>
    %194 = vector.extract_strided_slice %64 {offsets = [0, 48], sizes = [1, 256], strides = [1, 1]} : vector<1x358xf32> to vector<1x256xf32>
    %195 = vector.broadcast %91 : f32 to vector<1x256xf32>
    %196 = arith.mulf %195, %194 : vector<1x256xf32>
    %197 = arith.addf %193, %196 : vector<1x256xf32>
    %198 = vector.extract_strided_slice %69 {offsets = [0, 48], sizes = [1, 256], strides = [1, 1]} : vector<1x358xf32> to vector<1x256xf32>
    %199 = vector.broadcast %140 : f32 to vector<1x256xf32>
    %200 = arith.mulf %199, %198 : vector<1x256xf32>
    %201 = arith.addf %197, %200 : vector<1x256xf32>
    %202 = vector.extract_strided_slice %64 {offsets = [0, 64], sizes = [1, 256], strides = [1, 1]} : vector<1x358xf32> to vector<1x256xf32>
    %203 = vector.broadcast %98 : f32 to vector<1x256xf32>
    %204 = arith.mulf %203, %202 : vector<1x256xf32>
    %205 = arith.addf %201, %204 : vector<1x256xf32>
    %206 = vector.extract_strided_slice %69 {offsets = [0, 64], sizes = [1, 256], strides = [1, 1]} : vector<1x358xf32> to vector<1x256xf32>
    %207 = vector.broadcast %147 : f32 to vector<1x256xf32>
    %208 = arith.mulf %207, %206 : vector<1x256xf32>
    %209 = arith.addf %205, %208 : vector<1x256xf32>
    %210 = vector.extract_strided_slice %64 {offsets = [0, 80], sizes = [1, 256], strides = [1, 1]} : vector<1x358xf32> to vector<1x256xf32>
    %211 = vector.broadcast %105 : f32 to vector<1x256xf32>
    %212 = arith.mulf %211, %210 : vector<1x256xf32>
    %213 = arith.addf %209, %212 : vector<1x256xf32>
    %214 = vector.extract_strided_slice %69 {offsets = [0, 80], sizes = [1, 256], strides = [1, 1]} : vector<1x358xf32> to vector<1x256xf32>
    %215 = vector.broadcast %154 : f32 to vector<1x256xf32>
    %216 = arith.mulf %215, %214 : vector<1x256xf32>
    %217 = arith.addf %213, %216 : vector<1x256xf32>
    %218 = vector.extract_strided_slice %64 {offsets = [0, 96], sizes = [1, 256], strides = [1, 1]} : vector<1x358xf32> to vector<1x256xf32>
    %219 = vector.broadcast %112 : f32 to vector<1x256xf32>
    %220 = arith.mulf %219, %218 : vector<1x256xf32>
    %221 = arith.addf %217, %220 : vector<1x256xf32>
    %222 = vector.extract_strided_slice %69 {offsets = [0, 96], sizes = [1, 256], strides = [1, 1]} : vector<1x358xf32> to vector<1x256xf32>
    %223 = vector.broadcast %161 : f32 to vector<1x256xf32>
    %224 = arith.mulf %223, %222 : vector<1x256xf32>
    %225 = arith.addf %221, %224 : vector<1x256xf32>
    %c-3_i32 = arith.constant -3 : i32
    %226 = vector.broadcast %c-3_i32 : i32 to vector<1x256xi32>
    %227 = arith.addi %16, %226 : vector<1x256xi32>
    %c0_i32_25 = arith.constant 0 : i32
    %228 = vector.broadcast %c0_i32_25 : i32 to vector<1x256xi32>
    %229 = arith.cmpi sge, %227, %228 : vector<1x256xi32>
    %c-3_i32_26 = arith.constant -3 : i32
    %230 = vector.broadcast %c-3_i32_26 : i32 to vector<1x256xi32>
    %231 = arith.addi %16, %230 : vector<1x256xi32>
    %c16_i32_27 = arith.constant 16 : i32
    %232 = vector.broadcast %c16_i32_27 : i32 to vector<1x256xi32>
    %233 = arith.cmpi slt, %231, %232 : vector<1x256xi32>
    %234 = arith.andi %229, %233 : vector<1x256xi1>
    %cst_28 = arith.constant 0.000000e+00 : f32
    %235 = vector.broadcast %cst_28 : f32 to vector<1x256xf32>
    %236 = arith.select %234, %225, %235 : vector<1x256xi1>, vector<1x256xf32>
    %237 = arith.addf %168, %236 : vector<1x256xf32>
    %cst_29 = arith.constant 0.000000e+00 : f32
    %238 = vector.broadcast %cst_29 : f32 to vector<1x256xf32>
    %239 = vector.extract_strided_slice %64 {offsets = [0, 1], sizes = [1, 256], strides = [1, 1]} : vector<1x358xf32> to vector<1x256xf32>
    %240 = vector.broadcast %71 : f32 to vector<1x256xf32>
    %241 = arith.mulf %240, %239 : vector<1x256xf32>
    %242 = arith.addf %238, %241 : vector<1x256xf32>
    %243 = vector.extract_strided_slice %69 {offsets = [0, 1], sizes = [1, 256], strides = [1, 1]} : vector<1x358xf32> to vector<1x256xf32>
    %244 = vector.broadcast %120 : f32 to vector<1x256xf32>
    %245 = arith.mulf %244, %243 : vector<1x256xf32>
    %246 = arith.addf %242, %245 : vector<1x256xf32>
    %247 = vector.extract_strided_slice %64 {offsets = [0, 17], sizes = [1, 256], strides = [1, 1]} : vector<1x358xf32> to vector<1x256xf32>
    %248 = vector.broadcast %78 : f32 to vector<1x256xf32>
    %249 = arith.mulf %248, %247 : vector<1x256xf32>
    %250 = arith.addf %246, %249 : vector<1x256xf32>
    %251 = vector.extract_strided_slice %69 {offsets = [0, 17], sizes = [1, 256], strides = [1, 1]} : vector<1x358xf32> to vector<1x256xf32>
    %252 = vector.broadcast %127 : f32 to vector<1x256xf32>
    %253 = arith.mulf %252, %251 : vector<1x256xf32>
    %254 = arith.addf %250, %253 : vector<1x256xf32>
    %255 = vector.extract_strided_slice %64 {offsets = [0, 33], sizes = [1, 256], strides = [1, 1]} : vector<1x358xf32> to vector<1x256xf32>
    %256 = vector.broadcast %85 : f32 to vector<1x256xf32>
    %257 = arith.mulf %256, %255 : vector<1x256xf32>
    %258 = arith.addf %254, %257 : vector<1x256xf32>
    %259 = vector.extract_strided_slice %69 {offsets = [0, 33], sizes = [1, 256], strides = [1, 1]} : vector<1x358xf32> to vector<1x256xf32>
    %260 = vector.broadcast %134 : f32 to vector<1x256xf32>
    %261 = arith.mulf %260, %259 : vector<1x256xf32>
    %262 = arith.addf %258, %261 : vector<1x256xf32>
    %263 = vector.extract_strided_slice %64 {offsets = [0, 49], sizes = [1, 256], strides = [1, 1]} : vector<1x358xf32> to vector<1x256xf32>
    %264 = vector.broadcast %92 : f32 to vector<1x256xf32>
    %265 = arith.mulf %264, %263 : vector<1x256xf32>
    %266 = arith.addf %262, %265 : vector<1x256xf32>
    %267 = vector.extract_strided_slice %69 {offsets = [0, 49], sizes = [1, 256], strides = [1, 1]} : vector<1x358xf32> to vector<1x256xf32>
    %268 = vector.broadcast %141 : f32 to vector<1x256xf32>
    %269 = arith.mulf %268, %267 : vector<1x256xf32>
    %270 = arith.addf %266, %269 : vector<1x256xf32>
    %271 = vector.extract_strided_slice %64 {offsets = [0, 65], sizes = [1, 256], strides = [1, 1]} : vector<1x358xf32> to vector<1x256xf32>
    %272 = vector.broadcast %99 : f32 to vector<1x256xf32>
    %273 = arith.mulf %272, %271 : vector<1x256xf32>
    %274 = arith.addf %270, %273 : vector<1x256xf32>
    %275 = vector.extract_strided_slice %69 {offsets = [0, 65], sizes = [1, 256], strides = [1, 1]} : vector<1x358xf32> to vector<1x256xf32>
    %276 = vector.broadcast %148 : f32 to vector<1x256xf32>
    %277 = arith.mulf %276, %275 : vector<1x256xf32>
    %278 = arith.addf %274, %277 : vector<1x256xf32>
    %279 = vector.extract_strided_slice %64 {offsets = [0, 81], sizes = [1, 256], strides = [1, 1]} : vector<1x358xf32> to vector<1x256xf32>
    %280 = vector.broadcast %106 : f32 to vector<1x256xf32>
    %281 = arith.mulf %280, %279 : vector<1x256xf32>
    %282 = arith.addf %278, %281 : vector<1x256xf32>
    %283 = vector.extract_strided_slice %69 {offsets = [0, 81], sizes = [1, 256], strides = [1, 1]} : vector<1x358xf32> to vector<1x256xf32>
    %284 = vector.broadcast %155 : f32 to vector<1x256xf32>
    %285 = arith.mulf %284, %283 : vector<1x256xf32>
    %286 = arith.addf %282, %285 : vector<1x256xf32>
    %287 = vector.extract_strided_slice %64 {offsets = [0, 97], sizes = [1, 256], strides = [1, 1]} : vector<1x358xf32> to vector<1x256xf32>
    %288 = vector.broadcast %113 : f32 to vector<1x256xf32>
    %289 = arith.mulf %288, %287 : vector<1x256xf32>
    %290 = arith.addf %286, %289 : vector<1x256xf32>
    %291 = vector.extract_strided_slice %69 {offsets = [0, 97], sizes = [1, 256], strides = [1, 1]} : vector<1x358xf32> to vector<1x256xf32>
    %292 = vector.broadcast %162 : f32 to vector<1x256xf32>
    %293 = arith.mulf %292, %291 : vector<1x256xf32>
    %294 = arith.addf %290, %293 : vector<1x256xf32>
    %c-2_i32 = arith.constant -2 : i32
    %295 = vector.broadcast %c-2_i32 : i32 to vector<1x256xi32>
    %296 = arith.addi %16, %295 : vector<1x256xi32>
    %c0_i32_30 = arith.constant 0 : i32
    %297 = vector.broadcast %c0_i32_30 : i32 to vector<1x256xi32>
    %298 = arith.cmpi sge, %296, %297 : vector<1x256xi32>
    %c-2_i32_31 = arith.constant -2 : i32
    %299 = vector.broadcast %c-2_i32_31 : i32 to vector<1x256xi32>
    %300 = arith.addi %16, %299 : vector<1x256xi32>
    %c16_i32_32 = arith.constant 16 : i32
    %301 = vector.broadcast %c16_i32_32 : i32 to vector<1x256xi32>
    %302 = arith.cmpi slt, %300, %301 : vector<1x256xi32>
    %303 = arith.andi %298, %302 : vector<1x256xi1>
    %cst_33 = arith.constant 0.000000e+00 : f32
    %304 = vector.broadcast %cst_33 : f32 to vector<1x256xf32>
    %305 = arith.select %303, %294, %304 : vector<1x256xi1>, vector<1x256xf32>
    %306 = arith.addf %237, %305 : vector<1x256xf32>
    %cst_34 = arith.constant 0.000000e+00 : f32
    %307 = vector.broadcast %cst_34 : f32 to vector<1x256xf32>
    %308 = vector.extract_strided_slice %64 {offsets = [0, 2], sizes = [1, 256], strides = [1, 1]} : vector<1x358xf32> to vector<1x256xf32>
    %309 = vector.broadcast %72 : f32 to vector<1x256xf32>
    %310 = arith.mulf %309, %308 : vector<1x256xf32>
    %311 = arith.addf %307, %310 : vector<1x256xf32>
    %312 = vector.extract_strided_slice %69 {offsets = [0, 2], sizes = [1, 256], strides = [1, 1]} : vector<1x358xf32> to vector<1x256xf32>
    %313 = vector.broadcast %121 : f32 to vector<1x256xf32>
    %314 = arith.mulf %313, %312 : vector<1x256xf32>
    %315 = arith.addf %311, %314 : vector<1x256xf32>
    %316 = vector.extract_strided_slice %64 {offsets = [0, 18], sizes = [1, 256], strides = [1, 1]} : vector<1x358xf32> to vector<1x256xf32>
    %317 = vector.broadcast %79 : f32 to vector<1x256xf32>
    %318 = arith.mulf %317, %316 : vector<1x256xf32>
    %319 = arith.addf %315, %318 : vector<1x256xf32>
    %320 = vector.extract_strided_slice %69 {offsets = [0, 18], sizes = [1, 256], strides = [1, 1]} : vector<1x358xf32> to vector<1x256xf32>
    %321 = vector.broadcast %128 : f32 to vector<1x256xf32>
    %322 = arith.mulf %321, %320 : vector<1x256xf32>
    %323 = arith.addf %319, %322 : vector<1x256xf32>
    %324 = vector.extract_strided_slice %64 {offsets = [0, 34], sizes = [1, 256], strides = [1, 1]} : vector<1x358xf32> to vector<1x256xf32>
    %325 = vector.broadcast %86 : f32 to vector<1x256xf32>
    %326 = arith.mulf %325, %324 : vector<1x256xf32>
    %327 = arith.addf %323, %326 : vector<1x256xf32>
    %328 = vector.extract_strided_slice %69 {offsets = [0, 34], sizes = [1, 256], strides = [1, 1]} : vector<1x358xf32> to vector<1x256xf32>
    %329 = vector.broadcast %135 : f32 to vector<1x256xf32>
    %330 = arith.mulf %329, %328 : vector<1x256xf32>
    %331 = arith.addf %327, %330 : vector<1x256xf32>
    %332 = vector.extract_strided_slice %64 {offsets = [0, 50], sizes = [1, 256], strides = [1, 1]} : vector<1x358xf32> to vector<1x256xf32>
    %333 = vector.broadcast %93 : f32 to vector<1x256xf32>
    %334 = arith.mulf %333, %332 : vector<1x256xf32>
    %335 = arith.addf %331, %334 : vector<1x256xf32>
    %336 = vector.extract_strided_slice %69 {offsets = [0, 50], sizes = [1, 256], strides = [1, 1]} : vector<1x358xf32> to vector<1x256xf32>
    %337 = vector.broadcast %142 : f32 to vector<1x256xf32>
    %338 = arith.mulf %337, %336 : vector<1x256xf32>
    %339 = arith.addf %335, %338 : vector<1x256xf32>
    %340 = vector.extract_strided_slice %64 {offsets = [0, 66], sizes = [1, 256], strides = [1, 1]} : vector<1x358xf32> to vector<1x256xf32>
    %341 = vector.broadcast %100 : f32 to vector<1x256xf32>
    %342 = arith.mulf %341, %340 : vector<1x256xf32>
    %343 = arith.addf %339, %342 : vector<1x256xf32>
    %344 = vector.extract_strided_slice %69 {offsets = [0, 66], sizes = [1, 256], strides = [1, 1]} : vector<1x358xf32> to vector<1x256xf32>
    %345 = vector.broadcast %149 : f32 to vector<1x256xf32>
    %346 = arith.mulf %345, %344 : vector<1x256xf32>
    %347 = arith.addf %343, %346 : vector<1x256xf32>
    %348 = vector.extract_strided_slice %64 {offsets = [0, 82], sizes = [1, 256], strides = [1, 1]} : vector<1x358xf32> to vector<1x256xf32>
    %349 = vector.broadcast %107 : f32 to vector<1x256xf32>
    %350 = arith.mulf %349, %348 : vector<1x256xf32>
    %351 = arith.addf %347, %350 : vector<1x256xf32>
    %352 = vector.extract_strided_slice %69 {offsets = [0, 82], sizes = [1, 256], strides = [1, 1]} : vector<1x358xf32> to vector<1x256xf32>
    %353 = vector.broadcast %156 : f32 to vector<1x256xf32>
    %354 = arith.mulf %353, %352 : vector<1x256xf32>
    %355 = arith.addf %351, %354 : vector<1x256xf32>
    %356 = vector.extract_strided_slice %64 {offsets = [0, 98], sizes = [1, 256], strides = [1, 1]} : vector<1x358xf32> to vector<1x256xf32>
    %357 = vector.broadcast %114 : f32 to vector<1x256xf32>
    %358 = arith.mulf %357, %356 : vector<1x256xf32>
    %359 = arith.addf %355, %358 : vector<1x256xf32>
    %360 = vector.extract_strided_slice %69 {offsets = [0, 98], sizes = [1, 256], strides = [1, 1]} : vector<1x358xf32> to vector<1x256xf32>
    %361 = vector.broadcast %163 : f32 to vector<1x256xf32>
    %362 = arith.mulf %361, %360 : vector<1x256xf32>
    %363 = arith.addf %359, %362 : vector<1x256xf32>
    %c-1_i32 = arith.constant -1 : i32
    %364 = vector.broadcast %c-1_i32 : i32 to vector<1x256xi32>
    %365 = arith.addi %16, %364 : vector<1x256xi32>
    %c0_i32_35 = arith.constant 0 : i32
    %366 = vector.broadcast %c0_i32_35 : i32 to vector<1x256xi32>
    %367 = arith.cmpi sge, %365, %366 : vector<1x256xi32>
    %c-1_i32_36 = arith.constant -1 : i32
    %368 = vector.broadcast %c-1_i32_36 : i32 to vector<1x256xi32>
    %369 = arith.addi %16, %368 : vector<1x256xi32>
    %c16_i32_37 = arith.constant 16 : i32
    %370 = vector.broadcast %c16_i32_37 : i32 to vector<1x256xi32>
    %371 = arith.cmpi slt, %369, %370 : vector<1x256xi32>
    %372 = arith.andi %367, %371 : vector<1x256xi1>
    %cst_38 = arith.constant 0.000000e+00 : f32
    %373 = vector.broadcast %cst_38 : f32 to vector<1x256xf32>
    %374 = arith.select %372, %363, %373 : vector<1x256xi1>, vector<1x256xf32>
    %375 = arith.addf %306, %374 : vector<1x256xf32>
    %cst_39 = arith.constant 0.000000e+00 : f32
    %376 = vector.broadcast %cst_39 : f32 to vector<1x256xf32>
    %377 = vector.extract_strided_slice %64 {offsets = [0, 3], sizes = [1, 256], strides = [1, 1]} : vector<1x358xf32> to vector<1x256xf32>
    %378 = vector.broadcast %73 : f32 to vector<1x256xf32>
    %379 = arith.mulf %378, %377 : vector<1x256xf32>
    %380 = arith.addf %376, %379 : vector<1x256xf32>
    %381 = vector.extract_strided_slice %69 {offsets = [0, 3], sizes = [1, 256], strides = [1, 1]} : vector<1x358xf32> to vector<1x256xf32>
    %382 = vector.broadcast %122 : f32 to vector<1x256xf32>
    %383 = arith.mulf %382, %381 : vector<1x256xf32>
    %384 = arith.addf %380, %383 : vector<1x256xf32>
    %385 = vector.extract_strided_slice %64 {offsets = [0, 19], sizes = [1, 256], strides = [1, 1]} : vector<1x358xf32> to vector<1x256xf32>
    %386 = vector.broadcast %80 : f32 to vector<1x256xf32>
    %387 = arith.mulf %386, %385 : vector<1x256xf32>
    %388 = arith.addf %384, %387 : vector<1x256xf32>
    %389 = vector.extract_strided_slice %69 {offsets = [0, 19], sizes = [1, 256], strides = [1, 1]} : vector<1x358xf32> to vector<1x256xf32>
    %390 = vector.broadcast %129 : f32 to vector<1x256xf32>
    %391 = arith.mulf %390, %389 : vector<1x256xf32>
    %392 = arith.addf %388, %391 : vector<1x256xf32>
    %393 = vector.extract_strided_slice %64 {offsets = [0, 35], sizes = [1, 256], strides = [1, 1]} : vector<1x358xf32> to vector<1x256xf32>
    %394 = vector.broadcast %87 : f32 to vector<1x256xf32>
    %395 = arith.mulf %394, %393 : vector<1x256xf32>
    %396 = arith.addf %392, %395 : vector<1x256xf32>
    %397 = vector.extract_strided_slice %69 {offsets = [0, 35], sizes = [1, 256], strides = [1, 1]} : vector<1x358xf32> to vector<1x256xf32>
    %398 = vector.broadcast %136 : f32 to vector<1x256xf32>
    %399 = arith.mulf %398, %397 : vector<1x256xf32>
    %400 = arith.addf %396, %399 : vector<1x256xf32>
    %401 = vector.extract_strided_slice %64 {offsets = [0, 51], sizes = [1, 256], strides = [1, 1]} : vector<1x358xf32> to vector<1x256xf32>
    %402 = vector.broadcast %94 : f32 to vector<1x256xf32>
    %403 = arith.mulf %402, %401 : vector<1x256xf32>
    %404 = arith.addf %400, %403 : vector<1x256xf32>
    %405 = vector.extract_strided_slice %69 {offsets = [0, 51], sizes = [1, 256], strides = [1, 1]} : vector<1x358xf32> to vector<1x256xf32>
    %406 = vector.broadcast %143 : f32 to vector<1x256xf32>
    %407 = arith.mulf %406, %405 : vector<1x256xf32>
    %408 = arith.addf %404, %407 : vector<1x256xf32>
    %409 = vector.extract_strided_slice %64 {offsets = [0, 67], sizes = [1, 256], strides = [1, 1]} : vector<1x358xf32> to vector<1x256xf32>
    %410 = vector.broadcast %101 : f32 to vector<1x256xf32>
    %411 = arith.mulf %410, %409 : vector<1x256xf32>
    %412 = arith.addf %408, %411 : vector<1x256xf32>
    %413 = vector.extract_strided_slice %69 {offsets = [0, 67], sizes = [1, 256], strides = [1, 1]} : vector<1x358xf32> to vector<1x256xf32>
    %414 = vector.broadcast %150 : f32 to vector<1x256xf32>
    %415 = arith.mulf %414, %413 : vector<1x256xf32>
    %416 = arith.addf %412, %415 : vector<1x256xf32>
    %417 = vector.extract_strided_slice %64 {offsets = [0, 83], sizes = [1, 256], strides = [1, 1]} : vector<1x358xf32> to vector<1x256xf32>
    %418 = vector.broadcast %108 : f32 to vector<1x256xf32>
    %419 = arith.mulf %418, %417 : vector<1x256xf32>
    %420 = arith.addf %416, %419 : vector<1x256xf32>
    %421 = vector.extract_strided_slice %69 {offsets = [0, 83], sizes = [1, 256], strides = [1, 1]} : vector<1x358xf32> to vector<1x256xf32>
    %422 = vector.broadcast %157 : f32 to vector<1x256xf32>
    %423 = arith.mulf %422, %421 : vector<1x256xf32>
    %424 = arith.addf %420, %423 : vector<1x256xf32>
    %425 = vector.extract_strided_slice %64 {offsets = [0, 99], sizes = [1, 256], strides = [1, 1]} : vector<1x358xf32> to vector<1x256xf32>
    %426 = vector.broadcast %115 : f32 to vector<1x256xf32>
    %427 = arith.mulf %426, %425 : vector<1x256xf32>
    %428 = arith.addf %424, %427 : vector<1x256xf32>
    %429 = vector.extract_strided_slice %69 {offsets = [0, 99], sizes = [1, 256], strides = [1, 1]} : vector<1x358xf32> to vector<1x256xf32>
    %430 = vector.broadcast %164 : f32 to vector<1x256xf32>
    %431 = arith.mulf %430, %429 : vector<1x256xf32>
    %432 = arith.addf %428, %431 : vector<1x256xf32>
    %c0_i32_40 = arith.constant 0 : i32
    %433 = vector.broadcast %c0_i32_40 : i32 to vector<1x256xi32>
    %434 = arith.addi %16, %433 : vector<1x256xi32>
    %c0_i32_41 = arith.constant 0 : i32
    %435 = vector.broadcast %c0_i32_41 : i32 to vector<1x256xi32>
    %436 = arith.cmpi sge, %434, %435 : vector<1x256xi32>
    %c0_i32_42 = arith.constant 0 : i32
    %437 = vector.broadcast %c0_i32_42 : i32 to vector<1x256xi32>
    %438 = arith.addi %16, %437 : vector<1x256xi32>
    %c16_i32_43 = arith.constant 16 : i32
    %439 = vector.broadcast %c16_i32_43 : i32 to vector<1x256xi32>
    %440 = arith.cmpi slt, %438, %439 : vector<1x256xi32>
    %441 = arith.andi %436, %440 : vector<1x256xi1>
    %cst_44 = arith.constant 0.000000e+00 : f32
    %442 = vector.broadcast %cst_44 : f32 to vector<1x256xf32>
    %443 = arith.select %441, %432, %442 : vector<1x256xi1>, vector<1x256xf32>
    %444 = arith.addf %375, %443 : vector<1x256xf32>
    %cst_45 = arith.constant 0.000000e+00 : f32
    %445 = vector.broadcast %cst_45 : f32 to vector<1x256xf32>
    %446 = vector.extract_strided_slice %64 {offsets = [0, 4], sizes = [1, 256], strides = [1, 1]} : vector<1x358xf32> to vector<1x256xf32>
    %447 = vector.broadcast %74 : f32 to vector<1x256xf32>
    %448 = arith.mulf %447, %446 : vector<1x256xf32>
    %449 = arith.addf %445, %448 : vector<1x256xf32>
    %450 = vector.extract_strided_slice %69 {offsets = [0, 4], sizes = [1, 256], strides = [1, 1]} : vector<1x358xf32> to vector<1x256xf32>
    %451 = vector.broadcast %123 : f32 to vector<1x256xf32>
    %452 = arith.mulf %451, %450 : vector<1x256xf32>
    %453 = arith.addf %449, %452 : vector<1x256xf32>
    %454 = vector.extract_strided_slice %64 {offsets = [0, 20], sizes = [1, 256], strides = [1, 1]} : vector<1x358xf32> to vector<1x256xf32>
    %455 = vector.broadcast %81 : f32 to vector<1x256xf32>
    %456 = arith.mulf %455, %454 : vector<1x256xf32>
    %457 = arith.addf %453, %456 : vector<1x256xf32>
    %458 = vector.extract_strided_slice %69 {offsets = [0, 20], sizes = [1, 256], strides = [1, 1]} : vector<1x358xf32> to vector<1x256xf32>
    %459 = vector.broadcast %130 : f32 to vector<1x256xf32>
    %460 = arith.mulf %459, %458 : vector<1x256xf32>
    %461 = arith.addf %457, %460 : vector<1x256xf32>
    %462 = vector.extract_strided_slice %64 {offsets = [0, 36], sizes = [1, 256], strides = [1, 1]} : vector<1x358xf32> to vector<1x256xf32>
    %463 = vector.broadcast %88 : f32 to vector<1x256xf32>
    %464 = arith.mulf %463, %462 : vector<1x256xf32>
    %465 = arith.addf %461, %464 : vector<1x256xf32>
    %466 = vector.extract_strided_slice %69 {offsets = [0, 36], sizes = [1, 256], strides = [1, 1]} : vector<1x358xf32> to vector<1x256xf32>
    %467 = vector.broadcast %137 : f32 to vector<1x256xf32>
    %468 = arith.mulf %467, %466 : vector<1x256xf32>
    %469 = arith.addf %465, %468 : vector<1x256xf32>
    %470 = vector.extract_strided_slice %64 {offsets = [0, 52], sizes = [1, 256], strides = [1, 1]} : vector<1x358xf32> to vector<1x256xf32>
    %471 = vector.broadcast %95 : f32 to vector<1x256xf32>
    %472 = arith.mulf %471, %470 : vector<1x256xf32>
    %473 = arith.addf %469, %472 : vector<1x256xf32>
    %474 = vector.extract_strided_slice %69 {offsets = [0, 52], sizes = [1, 256], strides = [1, 1]} : vector<1x358xf32> to vector<1x256xf32>
    %475 = vector.broadcast %144 : f32 to vector<1x256xf32>
    %476 = arith.mulf %475, %474 : vector<1x256xf32>
    %477 = arith.addf %473, %476 : vector<1x256xf32>
    %478 = vector.extract_strided_slice %64 {offsets = [0, 68], sizes = [1, 256], strides = [1, 1]} : vector<1x358xf32> to vector<1x256xf32>
    %479 = vector.broadcast %102 : f32 to vector<1x256xf32>
    %480 = arith.mulf %479, %478 : vector<1x256xf32>
    %481 = arith.addf %477, %480 : vector<1x256xf32>
    %482 = vector.extract_strided_slice %69 {offsets = [0, 68], sizes = [1, 256], strides = [1, 1]} : vector<1x358xf32> to vector<1x256xf32>
    %483 = vector.broadcast %151 : f32 to vector<1x256xf32>
    %484 = arith.mulf %483, %482 : vector<1x256xf32>
    %485 = arith.addf %481, %484 : vector<1x256xf32>
    %486 = vector.extract_strided_slice %64 {offsets = [0, 84], sizes = [1, 256], strides = [1, 1]} : vector<1x358xf32> to vector<1x256xf32>
    %487 = vector.broadcast %109 : f32 to vector<1x256xf32>
    %488 = arith.mulf %487, %486 : vector<1x256xf32>
    %489 = arith.addf %485, %488 : vector<1x256xf32>
    %490 = vector.extract_strided_slice %69 {offsets = [0, 84], sizes = [1, 256], strides = [1, 1]} : vector<1x358xf32> to vector<1x256xf32>
    %491 = vector.broadcast %158 : f32 to vector<1x256xf32>
    %492 = arith.mulf %491, %490 : vector<1x256xf32>
    %493 = arith.addf %489, %492 : vector<1x256xf32>
    %494 = vector.extract_strided_slice %64 {offsets = [0, 100], sizes = [1, 256], strides = [1, 1]} : vector<1x358xf32> to vector<1x256xf32>
    %495 = vector.broadcast %116 : f32 to vector<1x256xf32>
    %496 = arith.mulf %495, %494 : vector<1x256xf32>
    %497 = arith.addf %493, %496 : vector<1x256xf32>
    %498 = vector.extract_strided_slice %69 {offsets = [0, 100], sizes = [1, 256], strides = [1, 1]} : vector<1x358xf32> to vector<1x256xf32>
    %499 = vector.broadcast %165 : f32 to vector<1x256xf32>
    %500 = arith.mulf %499, %498 : vector<1x256xf32>
    %501 = arith.addf %497, %500 : vector<1x256xf32>
    %c1_i32_46 = arith.constant 1 : i32
    %502 = vector.broadcast %c1_i32_46 : i32 to vector<1x256xi32>
    %503 = arith.addi %16, %502 : vector<1x256xi32>
    %c0_i32_47 = arith.constant 0 : i32
    %504 = vector.broadcast %c0_i32_47 : i32 to vector<1x256xi32>
    %505 = arith.cmpi sge, %503, %504 : vector<1x256xi32>
    %c1_i32_48 = arith.constant 1 : i32
    %506 = vector.broadcast %c1_i32_48 : i32 to vector<1x256xi32>
    %507 = arith.addi %16, %506 : vector<1x256xi32>
    %c16_i32_49 = arith.constant 16 : i32
    %508 = vector.broadcast %c16_i32_49 : i32 to vector<1x256xi32>
    %509 = arith.cmpi slt, %507, %508 : vector<1x256xi32>
    %510 = arith.andi %505, %509 : vector<1x256xi1>
    %cst_50 = arith.constant 0.000000e+00 : f32
    %511 = vector.broadcast %cst_50 : f32 to vector<1x256xf32>
    %512 = arith.select %510, %501, %511 : vector<1x256xi1>, vector<1x256xf32>
    %513 = arith.addf %444, %512 : vector<1x256xf32>
    %cst_51 = arith.constant 0.000000e+00 : f32
    %514 = vector.broadcast %cst_51 : f32 to vector<1x256xf32>
    %515 = vector.extract_strided_slice %64 {offsets = [0, 5], sizes = [1, 256], strides = [1, 1]} : vector<1x358xf32> to vector<1x256xf32>
    %516 = vector.broadcast %75 : f32 to vector<1x256xf32>
    %517 = arith.mulf %516, %515 : vector<1x256xf32>
    %518 = arith.addf %514, %517 : vector<1x256xf32>
    %519 = vector.extract_strided_slice %69 {offsets = [0, 5], sizes = [1, 256], strides = [1, 1]} : vector<1x358xf32> to vector<1x256xf32>
    %520 = vector.broadcast %124 : f32 to vector<1x256xf32>
    %521 = arith.mulf %520, %519 : vector<1x256xf32>
    %522 = arith.addf %518, %521 : vector<1x256xf32>
    %523 = vector.extract_strided_slice %64 {offsets = [0, 21], sizes = [1, 256], strides = [1, 1]} : vector<1x358xf32> to vector<1x256xf32>
    %524 = vector.broadcast %82 : f32 to vector<1x256xf32>
    %525 = arith.mulf %524, %523 : vector<1x256xf32>
    %526 = arith.addf %522, %525 : vector<1x256xf32>
    %527 = vector.extract_strided_slice %69 {offsets = [0, 21], sizes = [1, 256], strides = [1, 1]} : vector<1x358xf32> to vector<1x256xf32>
    %528 = vector.broadcast %131 : f32 to vector<1x256xf32>
    %529 = arith.mulf %528, %527 : vector<1x256xf32>
    %530 = arith.addf %526, %529 : vector<1x256xf32>
    %531 = vector.extract_strided_slice %64 {offsets = [0, 37], sizes = [1, 256], strides = [1, 1]} : vector<1x358xf32> to vector<1x256xf32>
    %532 = vector.broadcast %89 : f32 to vector<1x256xf32>
    %533 = arith.mulf %532, %531 : vector<1x256xf32>
    %534 = arith.addf %530, %533 : vector<1x256xf32>
    %535 = vector.extract_strided_slice %69 {offsets = [0, 37], sizes = [1, 256], strides = [1, 1]} : vector<1x358xf32> to vector<1x256xf32>
    %536 = vector.broadcast %138 : f32 to vector<1x256xf32>
    %537 = arith.mulf %536, %535 : vector<1x256xf32>
    %538 = arith.addf %534, %537 : vector<1x256xf32>
    %539 = vector.extract_strided_slice %64 {offsets = [0, 53], sizes = [1, 256], strides = [1, 1]} : vector<1x358xf32> to vector<1x256xf32>
    %540 = vector.broadcast %96 : f32 to vector<1x256xf32>
    %541 = arith.mulf %540, %539 : vector<1x256xf32>
    %542 = arith.addf %538, %541 : vector<1x256xf32>
    %543 = vector.extract_strided_slice %69 {offsets = [0, 53], sizes = [1, 256], strides = [1, 1]} : vector<1x358xf32> to vector<1x256xf32>
    %544 = vector.broadcast %145 : f32 to vector<1x256xf32>
    %545 = arith.mulf %544, %543 : vector<1x256xf32>
    %546 = arith.addf %542, %545 : vector<1x256xf32>
    %547 = vector.extract_strided_slice %64 {offsets = [0, 69], sizes = [1, 256], strides = [1, 1]} : vector<1x358xf32> to vector<1x256xf32>
    %548 = vector.broadcast %103 : f32 to vector<1x256xf32>
    %549 = arith.mulf %548, %547 : vector<1x256xf32>
    %550 = arith.addf %546, %549 : vector<1x256xf32>
    %551 = vector.extract_strided_slice %69 {offsets = [0, 69], sizes = [1, 256], strides = [1, 1]} : vector<1x358xf32> to vector<1x256xf32>
    %552 = vector.broadcast %152 : f32 to vector<1x256xf32>
    %553 = arith.mulf %552, %551 : vector<1x256xf32>
    %554 = arith.addf %550, %553 : vector<1x256xf32>
    %555 = vector.extract_strided_slice %64 {offsets = [0, 85], sizes = [1, 256], strides = [1, 1]} : vector<1x358xf32> to vector<1x256xf32>
    %556 = vector.broadcast %110 : f32 to vector<1x256xf32>
    %557 = arith.mulf %556, %555 : vector<1x256xf32>
    %558 = arith.addf %554, %557 : vector<1x256xf32>
    %559 = vector.extract_strided_slice %69 {offsets = [0, 85], sizes = [1, 256], strides = [1, 1]} : vector<1x358xf32> to vector<1x256xf32>
    %560 = vector.broadcast %159 : f32 to vector<1x256xf32>
    %561 = arith.mulf %560, %559 : vector<1x256xf32>
    %562 = arith.addf %558, %561 : vector<1x256xf32>
    %563 = vector.extract_strided_slice %64 {offsets = [0, 101], sizes = [1, 256], strides = [1, 1]} : vector<1x358xf32> to vector<1x256xf32>
    %564 = vector.broadcast %117 : f32 to vector<1x256xf32>
    %565 = arith.mulf %564, %563 : vector<1x256xf32>
    %566 = arith.addf %562, %565 : vector<1x256xf32>
    %567 = vector.extract_strided_slice %69 {offsets = [0, 101], sizes = [1, 256], strides = [1, 1]} : vector<1x358xf32> to vector<1x256xf32>
    %568 = vector.broadcast %166 : f32 to vector<1x256xf32>
    %569 = arith.mulf %568, %567 : vector<1x256xf32>
    %570 = arith.addf %566, %569 : vector<1x256xf32>
    %c2_i32 = arith.constant 2 : i32
    %571 = vector.broadcast %c2_i32 : i32 to vector<1x256xi32>
    %572 = arith.addi %16, %571 : vector<1x256xi32>
    %c0_i32_52 = arith.constant 0 : i32
    %573 = vector.broadcast %c0_i32_52 : i32 to vector<1x256xi32>
    %574 = arith.cmpi sge, %572, %573 : vector<1x256xi32>
    %c2_i32_53 = arith.constant 2 : i32
    %575 = vector.broadcast %c2_i32_53 : i32 to vector<1x256xi32>
    %576 = arith.addi %16, %575 : vector<1x256xi32>
    %c16_i32_54 = arith.constant 16 : i32
    %577 = vector.broadcast %c16_i32_54 : i32 to vector<1x256xi32>
    %578 = arith.cmpi slt, %576, %577 : vector<1x256xi32>
    %579 = arith.andi %574, %578 : vector<1x256xi1>
    %cst_55 = arith.constant 0.000000e+00 : f32
    %580 = vector.broadcast %cst_55 : f32 to vector<1x256xf32>
    %581 = arith.select %579, %570, %580 : vector<1x256xi1>, vector<1x256xf32>
    %582 = arith.addf %513, %581 : vector<1x256xf32>
    %cst_56 = arith.constant 0.000000e+00 : f32
    %583 = vector.broadcast %cst_56 : f32 to vector<1x256xf32>
    %584 = vector.extract_strided_slice %64 {offsets = [0, 6], sizes = [1, 256], strides = [1, 1]} : vector<1x358xf32> to vector<1x256xf32>
    %585 = vector.broadcast %76 : f32 to vector<1x256xf32>
    %586 = arith.mulf %585, %584 : vector<1x256xf32>
    %587 = arith.addf %583, %586 : vector<1x256xf32>
    %588 = vector.extract_strided_slice %69 {offsets = [0, 6], sizes = [1, 256], strides = [1, 1]} : vector<1x358xf32> to vector<1x256xf32>
    %589 = vector.broadcast %125 : f32 to vector<1x256xf32>
    %590 = arith.mulf %589, %588 : vector<1x256xf32>
    %591 = arith.addf %587, %590 : vector<1x256xf32>
    %592 = vector.extract_strided_slice %64 {offsets = [0, 22], sizes = [1, 256], strides = [1, 1]} : vector<1x358xf32> to vector<1x256xf32>
    %593 = vector.broadcast %83 : f32 to vector<1x256xf32>
    %594 = arith.mulf %593, %592 : vector<1x256xf32>
    %595 = arith.addf %591, %594 : vector<1x256xf32>
    %596 = vector.extract_strided_slice %69 {offsets = [0, 22], sizes = [1, 256], strides = [1, 1]} : vector<1x358xf32> to vector<1x256xf32>
    %597 = vector.broadcast %132 : f32 to vector<1x256xf32>
    %598 = arith.mulf %597, %596 : vector<1x256xf32>
    %599 = arith.addf %595, %598 : vector<1x256xf32>
    %600 = vector.extract_strided_slice %64 {offsets = [0, 38], sizes = [1, 256], strides = [1, 1]} : vector<1x358xf32> to vector<1x256xf32>
    %601 = vector.broadcast %90 : f32 to vector<1x256xf32>
    %602 = arith.mulf %601, %600 : vector<1x256xf32>
    %603 = arith.addf %599, %602 : vector<1x256xf32>
    %604 = vector.extract_strided_slice %69 {offsets = [0, 38], sizes = [1, 256], strides = [1, 1]} : vector<1x358xf32> to vector<1x256xf32>
    %605 = vector.broadcast %139 : f32 to vector<1x256xf32>
    %606 = arith.mulf %605, %604 : vector<1x256xf32>
    %607 = arith.addf %603, %606 : vector<1x256xf32>
    %608 = vector.extract_strided_slice %64 {offsets = [0, 54], sizes = [1, 256], strides = [1, 1]} : vector<1x358xf32> to vector<1x256xf32>
    %609 = vector.broadcast %97 : f32 to vector<1x256xf32>
    %610 = arith.mulf %609, %608 : vector<1x256xf32>
    %611 = arith.addf %607, %610 : vector<1x256xf32>
    %612 = vector.extract_strided_slice %69 {offsets = [0, 54], sizes = [1, 256], strides = [1, 1]} : vector<1x358xf32> to vector<1x256xf32>
    %613 = vector.broadcast %146 : f32 to vector<1x256xf32>
    %614 = arith.mulf %613, %612 : vector<1x256xf32>
    %615 = arith.addf %611, %614 : vector<1x256xf32>
    %616 = vector.extract_strided_slice %64 {offsets = [0, 70], sizes = [1, 256], strides = [1, 1]} : vector<1x358xf32> to vector<1x256xf32>
    %617 = vector.broadcast %104 : f32 to vector<1x256xf32>
    %618 = arith.mulf %617, %616 : vector<1x256xf32>
    %619 = arith.addf %615, %618 : vector<1x256xf32>
    %620 = vector.extract_strided_slice %69 {offsets = [0, 70], sizes = [1, 256], strides = [1, 1]} : vector<1x358xf32> to vector<1x256xf32>
    %621 = vector.broadcast %153 : f32 to vector<1x256xf32>
    %622 = arith.mulf %621, %620 : vector<1x256xf32>
    %623 = arith.addf %619, %622 : vector<1x256xf32>
    %624 = vector.extract_strided_slice %64 {offsets = [0, 86], sizes = [1, 256], strides = [1, 1]} : vector<1x358xf32> to vector<1x256xf32>
    %625 = vector.broadcast %111 : f32 to vector<1x256xf32>
    %626 = arith.mulf %625, %624 : vector<1x256xf32>
    %627 = arith.addf %623, %626 : vector<1x256xf32>
    %628 = vector.extract_strided_slice %69 {offsets = [0, 86], sizes = [1, 256], strides = [1, 1]} : vector<1x358xf32> to vector<1x256xf32>
    %629 = vector.broadcast %160 : f32 to vector<1x256xf32>
    %630 = arith.mulf %629, %628 : vector<1x256xf32>
    %631 = arith.addf %627, %630 : vector<1x256xf32>
    %632 = vector.extract_strided_slice %64 {offsets = [0, 102], sizes = [1, 256], strides = [1, 1]} : vector<1x358xf32> to vector<1x256xf32>
    %633 = vector.broadcast %118 : f32 to vector<1x256xf32>
    %634 = arith.mulf %633, %632 : vector<1x256xf32>
    %635 = arith.addf %631, %634 : vector<1x256xf32>
    %636 = vector.extract_strided_slice %69 {offsets = [0, 102], sizes = [1, 256], strides = [1, 1]} : vector<1x358xf32> to vector<1x256xf32>
    %637 = vector.broadcast %167 : f32 to vector<1x256xf32>
    %638 = arith.mulf %637, %636 : vector<1x256xf32>
    %639 = arith.addf %635, %638 : vector<1x256xf32>
    %c3_i32 = arith.constant 3 : i32
    %640 = vector.broadcast %c3_i32 : i32 to vector<1x256xi32>
    %641 = arith.addi %16, %640 : vector<1x256xi32>
    %c0_i32_57 = arith.constant 0 : i32
    %642 = vector.broadcast %c0_i32_57 : i32 to vector<1x256xi32>
    %643 = arith.cmpi sge, %641, %642 : vector<1x256xi32>
    %c3_i32_58 = arith.constant 3 : i32
    %644 = vector.broadcast %c3_i32_58 : i32 to vector<1x256xi32>
    %645 = arith.addi %16, %644 : vector<1x256xi32>
    %c16_i32_59 = arith.constant 16 : i32
    %646 = vector.broadcast %c16_i32_59 : i32 to vector<1x256xi32>
    %647 = arith.cmpi slt, %645, %646 : vector<1x256xi32>
    %648 = arith.andi %643, %647 : vector<1x256xi1>
    %cst_60 = arith.constant 0.000000e+00 : f32
    %649 = vector.broadcast %cst_60 : f32 to vector<1x256xf32>
    %650 = arith.select %648, %639, %649 : vector<1x256xi1>, vector<1x256xf32>
    %651 = arith.addf %582, %650 : vector<1x256xf32>
    %c0_61 = arith.constant 0 : index
    %652 = memref.load %arg4[%c0_61] : memref<1xf32, #tpu.memory_space<smem>>
    %653 = vector.broadcast %652 : f32 to vector<1x256xf32>
    %654 = arith.addf %651, %653 : vector<1x256xf32>
    %655 = arith.negf %654 : vector<1x256xf32>
    %656 = math.exp %655 : vector<1x256xf32>
    %cst_62 = arith.constant 1.000000e+00 : f32
    %657 = vector.broadcast %cst_62 : f32 to vector<1x256xf32>
    %658 = arith.addf %657, %656 : vector<1x256xf32>
    %659 = arith.divf %657, %658 : vector<1x256xf32>
    %cst_63 = arith.constant 2.000000e-01 : f32
    %660 = vector.broadcast %cst_63 : f32 to vector<1x256xf32>
    %661 = arith.cmpf oge, %659, %660 : vector<1x256xf32>
    %cst_64 = arith.constant 0.000000e+00 : f32
    %662 = vector.broadcast %cst_64 : f32 to vector<1x256xf32>
    %663 = arith.select %661, %659, %662 : vector<1x256xi1>, vector<1x256xf32>
    %664 = vector.shape_cast %663 : vector<1x256xf32> to vector<1x1x256xf32>
    %c0_65 = arith.constant 0 : index
    %c0_66 = arith.constant 0 : index
    %c0_67 = arith.constant 0 : index
    %665 = vector.load %arg1[%c0_65, %c0_66, %c0_67] : memref<1x8x256xf32, #tpu.memory_space<vmem>>, vector<1x8x256xf32>
    %666 = vector.broadcast %48 : vector<1x8x1xf32> to vector<1x8x256xf32>
    %667 = arith.mulf %665, %666 : vector<1x8x256xf32>
    %668 = vector.broadcast %664 : vector<1x1x256xf32> to vector<1x8x256xf32>
    %669 = arith.mulf %667, %668 : vector<1x8x256xf32>
    %c0_68 = arith.constant 0 : index
    %c0_69 = arith.constant 0 : index
    %c0_70 = arith.constant 0 : index
    %670 = vector.load %arg5[%c0_68, %c0_69, %c0_70] : memref<1x8x256xf32, #tpu.memory_space<vmem>>, vector<1x8x256xf32>
    tpu.vector_store %arg5[%c0_68, %c0_69, %c0_70], %669 {strides = array<i32>} : memref<1x8x256xf32, #tpu.memory_space<vmem>>, vector<1x8x256xf32>,
    return
  }
  func.func @transform_0(%arg0: i32) -> (i32, i32, i32) {
    %c0_i32 = arith.constant 0 : i32
    %c0_i32_0 = arith.constant 0 : i32
    %c0_i32_1 = arith.constant 0 : i32
    return %arg0, %c0_i32, %c0_i32_0 : i32, i32, i32
  }
  func.func @transform_1(%arg0: i32) -> i32 {
    %c0_i32 = arith.constant 0 : i32
    %c0_i32_0 = arith.constant 0 : i32
    return %c0_i32 : i32
  }
  func.func @transform_2(%arg0: i32) -> i32 {
    %c0_i32 = arith.constant 0 : i32
    %c0_i32_0 = arith.constant 0 : i32
    return %c0_i32 : i32
  }
  func.func @transform_3(%arg0: i32) -> i32 {
    %c0_i32 = arith.constant 0 : i32
    %c0_i32_0 = arith.constant 0 : i32
    return %c0_i32 : i32
  }
  func.func @transform_4(%arg0: i32) -> (i32, i32, i32) {
    %c0_i32 = arith.constant 0 : i32
    %c0_i32_0 = arith.constant 0 : i32
    %c0_i32_1 = arith.constant 0 : i32
    return %arg0, %c0_i32, %c0_i32_0 : i32, i32, i32
  }
}

</mosaic_0001>

<llo_original>
// kernel: tpu_custom_call.1
$region0: #{tpu_custom_call.1}
  #allocation0 [shape = 'u32[]', space=smem, size = 0x4, offset = 0x4, fixed_abs, tag = 'smem constant byte address 0x4 - core index']
  #allocation1 [shape = 'u32[144,128]{1,0:T(1,128)}', space=vmem, size = 0x12000, scoped, tag = 'internal scratch']
  #allocation2 [shape = 'f32[1]{0:T(128)S(6)}', space=smem, size = 0x200, scoped, tag = 'scoped memory for tpu_custom_call.1']
  %s0 = inlined_call_operand.hbm [shape: f32[2,8,256], index: 0, kind: input, shape index: {}]
  %s1 = inlined_call_operand.vmem [shape: f32[3], index: 1, kind: input, shape index: {}]
  %s2 = inlined_call_operand.vmem [shape: f32[98], index: 2, kind: input, shape index: {}]
  %s3 = inlined_call_operand.<no memory space> [shape: f32[1], index: 3, kind: input, shape index: {}]
  %s4 = inlined_call_operand.hbm [shape: f32[2,8,256], index: 4, kind: output, shape index: {}]
  %s5 = sld [smem:[#allocation0]]
  $region61: #{tpu_custom_call.1} parent=0
    _
  %s7 = ssub.s32 1, %s5
  %s8 = scalar_select 0, %s7, %s5
  %9 = sst [smem:[#allocation2]] %s3
  $region1: #{tpu_custom_call.1} parent=0
    #allocation3 [shape = 'u8[16384]{0}', space=vmem, size = 0x4000, scoped, tag = 'input window, operand 0']
    #allocation4 [shape = 's32[2]{0}', space=sflag, size = 0x8, scoped, tag = 'scoped memory for tpu_custom_call.1']
    #allocation5 [shape = 's32[2]{0}', space=sflag, size = 0x8, scoped, tag = 'scoped memory for tpu_custom_call.1']
    #allocation6 [shape = 's32[2]{0}', space=sflag, size = 0x8, scoped, tag = 'scoped memory for tpu_custom_call.1']
    #allocation7 [shape = 'u8[512]{0}', space=smem, size = 0x200, scoped, tag = 'input window, operand 1, single buffered']
    #allocation8 [shape = 'u8[512]{0}', space=smem, size = 0x200, scoped, tag = 'input window, operand 2, single buffered']
    #allocation9 [shape = 's32[1]{0}', space=sflag, size = 0x4, scoped, tag = 'scoped memory for tpu_custom_call.1']
    #allocation10 [shape = 'u8[16384]{0}', space=vmem, size = 0x4000, scoped, tag = 'output window, operand 0']
    %10 = vsyncpa [#allocation4], 0
    %s11 = scalar_lea.sflag [#allocation4], 1
    %12 = vsyncpa %s11, 0
    %13 = vsyncpa [#allocation6], 0
    %14 = vsyncpa [#allocation9], 0
    %15 = vsyncpa [#allocation5], 0
    %s16 = scalar_lea.sflag [#allocation5], 1
    %17 = vsyncpa %s16, 0
    loop: start=0, step=1, limit=4
    $region2: #{tpu_custom_call.1} parent=1 // loop_pre_header
      _
    $region3: #{tpu_custom_call.1} parent=1 // loop_header
      %s19 = sphi 0, %s23
      %p20 = scmp.ge.s32.totalorder %s19, 4
      %s29 = sphi 0, %s31
      %s32 = sphi 0, %s29
      %s33 = sphi 0, %s32
      %s49 = sphi 0, %s33
      %s53 = sphi 0, %s53
      %s55 = sphi 0, %s53
      %s56 = sphi 0, %s55
      %s70 = sphi 0, %s56
      %s74 = sphi 0, %s74
      %s76 = sphi 0, %s74
      %s77 = sphi 0, %s76
      %s91 = sphi 0, %s77
      %s95 = sphi 0, %s95
      %s97 = sphi 0, %s95
      %s98 = sphi 0, %s97
      %s112 = sphi 0, %s98
      %s118 = sphi 0, %s120
      %s121 = sphi 0, %s118
      %s122 = sphi 0, %s121
      %s138 = sphi 0, %s122
    $region4: #{tpu_custom_call.1} parent=1 // loop_header_branch
      %22 = sbr.rel (%p20) target = $region8
    $region5: #{tpu_custom_call.1} parent=1 // loop_body
      %s24 = ssub.s32 %s19, 1
      %s25 = ssub.s32 %s19, 2
      %s26 = sadd.s32 %s19, 1
      %s27 = ssub.s32 %s19, %s26
      %p28 = scmp.eq.s32.totalorder %s27, 0
      %s30 = sadd.s32 %s29, 1
      %s31 = scalar_select %p28, %s29, %s30
      %p34 = pneg %p28
      %p35 = scmp.eq.s32.totalorder %s19, 1
      %p36 = por %p34, %p35
      %p37 = scmp.ne.s32.totalorder %s29, %s32
      %p38 = scmp.eq.s32.totalorder %s19, 0
      %p39 = por %p37, %p38
      %p40 = scmp.ne.s32.totalorder %s29, %s32
      %p41 = scmp.eq.s32.totalorder %s24, 1
      %p42 = por %p40, %p41
      %p43 = scmp.ne.s32.totalorder %s32, %s33
      %p44 = scmp.eq.s32.totalorder %s24, 0
      %p45 = por %p43, %p44
      %p46 = scmp.ne.s32.totalorder %s32, %s33
      %p47 = scmp.eq.s32.totalorder %s25, 1
      %p48 = por %p46, %p47
      %p50 = scmp.ne.s32.totalorder %s33, %s49
      %p51 = scmp.eq.s32.totalorder %s25, 0
      %p52 = por %p50, %p51
      %s54 = sadd.s32 %s53, 1
      %p57 = scmp.eq.s32.totalorder %s19, 1
      %p58 = scmp.ne.s32.totalorder %s53, %s55
      %p59 = scmp.eq.s32.totalorder %s19, 0
      %p60 = por %p58, %p59
      %p61 = scmp.ne.s32.totalorder %s53, %s55
      %p62 = scmp.eq.s32.totalorder %s24, 1
      %p63 = por %p61, %p62
      %p64 = scmp.ne.s32.totalorder %s55, %s56
      %p65 = scmp.eq.s32.totalorder %s24, 0
      %p66 = por %p64, %p65
      %p67 = scmp.ne.s32.totalorder %s55, %s56
      %p68 = scmp.eq.s32.totalorder %s25, 1
      %p69 = por %p67, %p68
      %p71 = scmp.ne.s32.totalorder %s56, %s70
      %p72 = scmp.eq.s32.totalorder %s25, 0
      %p73 = por %p71, %p72
      %s75 = sadd.s32 %s74, 1
      %p78 = scmp.eq.s32.totalorder %s19, 1
      %p79 = scmp.ne.s32.totalorder %s74, %s76
      %p80 = scmp.eq.s32.totalorder %s19, 0
      %p81 = por %p79, %p80
      %p82 = scmp.ne.s32.totalorder %s74, %s76
      %p83 = scmp.eq.s32.totalorder %s24, 1
      %p84 = por %p82, %p83
      %p85 = scmp.ne.s32.totalorder %s76, %s77
      %p86 = scmp.eq.s32.totalorder %s24, 0
      %p87 = por %p85, %p86
      %p88 = scmp.ne.s32.totalorder %s76, %s77
      %p89 = scmp.eq.s32.totalorder %s25, 1
      %p90 = por %p88, %p89
      %p92 = scmp.ne.s32.totalorder %s77, %s91
      %p93 = scmp.eq.s32.totalorder %s25, 0
      %p94 = por %p92, %p93
      %s96 = sadd.s32 %s95, 1
      %p99 = scmp.eq.s32.totalorder %s19, 1
      %p100 = scmp.ne.s32.totalorder %s95, %s97
      %p101 = scmp.eq.s32.totalorder %s19, 0
      %p102 = por %p100, %p101
      %p103 = scmp.ne.s32.totalorder %s95, %s97
      %p104 = scmp.eq.s32.totalorder %s24, 1
      %p105 = por %p103, %p104
      %p106 = scmp.ne.s32.totalorder %s97, %s98
      %p107 = scmp.eq.s32.totalorder %s24, 0
      %p108 = por %p106, %p107
      %p109 = scmp.ne.s32.totalorder %s97, %s98
      %p110 = scmp.eq.s32.totalorder %s25, 1
      %p111 = por %p109, %p110
      %p113 = scmp.ne.s32.totalorder %s98, %s112
      %p114 = scmp.eq.s32.totalorder %s25, 0
      %p115 = por %p113, %p114
      %s116 = ssub.s32 %s19, %s26
      %p117 = scmp.eq.s32.totalorder %s116, 0
      %s119 = sadd.s32 %s118, 1
      %s120 = scalar_select %p117, %s118, %s119
      %p123 = pneg %p117
      %p124 = scmp.eq.s32.totalorder %s19, 1
      %p125 = por %p123, %p124
      %p126 = scmp.ne.s32.totalorder %s118, %s121
      %p127 = scmp.eq.s32.totalorder %s19, 0
      %p128 = por %p126, %p127
      %p129 = scmp.ne.s32.totalorder %s118, %s121
      %p130 = scmp.eq.s32.totalorder %s24, 1
      %p131 = por %p129, %p130
      %p132 = scmp.ne.s32.totalorder %s121, %s122
      %p133 = scmp.eq.s32.totalorder %s24, 0
      %p134 = por %p132, %p133
      %p135 = scmp.ne.s32.totalorder %s121, %s122
      %p136 = scmp.eq.s32.totalorder %s25, 1
      %p137 = por %p135, %p136
      %p139 = scmp.ne.s32.totalorder %s122, %s138
      %p140 = scmp.eq.s32.totalorder %s25, 0
      %p141 = por %p139, %p140
      %p142 = scmp.le.s32.totalorder 1, %s19
      %p143 = scmp.lt.s32.totalorder %s19, 3
      %p144 = pnand %p142, %p143
      %p145 = pneg %p144
      // Predicated region
      $region9: #{tpu_custom_call.1} parent=5 // pred_check
        _
      $region10: #{tpu_custom_call.1} parent=5 // pred_check_branch
        %147 = sbr.rel (%p144) target = $region12
      $region11: #{tpu_custom_call.1} parent=5 // pred_region
        %s148 = ssub.s32 %s19, 1
        // Predicated region
        $region13: #{tpu_custom_call.1} parent=11 // pred_check
          %p149 = pneg %p66
        $region14: #{tpu_custom_call.1} parent=11 // pred_check_branch
          %151 = sbr.rel (%p149) target = $region16
        $region15: #{tpu_custom_call.1} parent=11 // pred_region
          %s153 = ssub.s32 16, 16
          %154 = vsyncadd [#allocation6], %s153
          %s156 = sshll.u32 %s1, 4
          %s157 = int_to_ptr.vmem [resolvable:$true] %s156
          %159 = dma.vmem_to_smem %s157, 16, [#allocation7], [#allocation6]
        $region16: #{tpu_custom_call.1} parent=11 // pred_fallthru
          _
        // Predicated region
        $region17: #{tpu_custom_call.1} parent=11 // pred_check
          %p160 = pneg %p87
        $region18: #{tpu_custom_call.1} parent=11 // pred_check_branch
          %162 = sbr.rel (%p160) target = $region20
        $region19: #{tpu_custom_call.1} parent=11 // pred_region
          %s164 = ssub.s32 16, 16
          %165 = vsyncadd [#allocation9], %s164
          %s167 = sshll.u32 %s2, 4
          %s168 = int_to_ptr.vmem [resolvable:$true] %s167
          %170 = dma.vmem_to_smem %s168, 16, [#allocation8], [#allocation9]
        $region20: #{tpu_custom_call.1} parent=11 // pred_fallthru
          _
        // Predicated region
        $region21: #{tpu_custom_call.1} parent=11 // pred_check
          %p171 = pneg %p108
        $region22: #{tpu_custom_call.1} parent=11 // pred_check_branch
          %173 = sbr.rel (%p171) target = $region24
        $region23: #{tpu_custom_call.1} parent=11 // pred_region
          _
        $region24: #{tpu_custom_call.1} parent=11 // pred_fallthru
          _
      $region12: #{tpu_custom_call.1} parent=5 // pred_fallthru
        _
      %p174 = scmp.lt.s32.totalorder %s19, 2
      // Predicated region
      $region25: #{tpu_custom_call.1} parent=5 // pred_check
        %p175 = pneg %p174
      $region26: #{tpu_custom_call.1} parent=5 // pred_check_branch
        %177 = sbr.rel (%p175) target = $region28
      $region27: #{tpu_custom_call.1} parent=5 // pred_region
        // Predicated region
        $region29: #{tpu_custom_call.1} parent=27 // pred_check
          %p178 = pneg %p39
        $region30: #{tpu_custom_call.1} parent=27 // pred_check_branch
          %180 = sbr.rel (%p178) target = $region32
        $region31: #{tpu_custom_call.1} parent=27 // pred_region
          %s181 = sand.u32 %s29, 1
          %s182 = scalar_lea.sflag [#allocation4], %s181
          %s183 = sand.u32 %s29, 1
          %s184 = smul.addr %s183, 16
          %s185 = scalar_lea.vmem [#allocation3], %s184
          %s187 = ssub.s32 256, 256
          %188 = vsyncadd %s182, %s187
          %s189 = smul.addr %s19, 2
          %s190 = smul.addr %s189, 128
          %s191 = scalar_lea.hbm %s0, %s190
          %s193 = sshll.u32 %s185, 4
          %s194 = int_to_ptr.vmem [resolvable:$true] %s193
          %196 = dma.hbm_to_vmem [thread:$0]  %s191, 256, %s194, %s182
        $region32: #{tpu_custom_call.1} parent=27 // pred_fallthru
          _
      $region28: #{tpu_custom_call.1} parent=5 // pred_fallthru
        _
      %p197 = scmp.le.s32.totalorder 1, %s19
      %p198 = scmp.lt.s32.totalorder %s19, 3
      %p199 = pnand %p197, %p198
      %p200 = pneg %p199
      // Predicated region
      $region33: #{tpu_custom_call.1} parent=5 // pred_check
        _
      $region34: #{tpu_custom_call.1} parent=5 // pred_check_branch
        %202 = sbr.rel (%p199) target = $region36
      $region35: #{tpu_custom_call.1} parent=5 // pred_region
        %s203 = ssub.s32 %s19, 1
        %s204 = sand.u32 %s32, 1
        %s205 = scalar_lea.sflag [#allocation4], %s204
        %s206 = sand.u32 %s32, 1
        %s207 = smul.addr %s206, 16
        %s208 = scalar_lea.vmem [#allocation3], %s207
        // Predicated region
        $region37: #{tpu_custom_call.1} parent=35 // pred_check
          %p209 = pneg %p45
        $region38: #{tpu_custom_call.1} parent=35 // pred_check_branch
          %211 = sbr.rel (%p209) target = $region40
        $region39: #{tpu_custom_call.1} parent=35 // pred_region
          %212 = dma.done %s205, 256
        $region40: #{tpu_custom_call.1} parent=35 // pred_fallthru
          _
        // Predicated region
        $region41: #{tpu_custom_call.1} parent=35 // pred_check
          %p213 = pneg %p66
        $region42: #{tpu_custom_call.1} parent=35 // pred_check_branch
          %215 = sbr.rel (%p213) target = $region44
        $region43: #{tpu_custom_call.1} parent=35 // pred_region
          %216 = dma.done [#allocation6], 16
        $region44: #{tpu_custom_call.1} parent=35 // pred_fallthru
          _
        // Predicated region
        $region45: #{tpu_custom_call.1} parent=35 // pred_check
          %p217 = pneg %p87
        $region46: #{tpu_custom_call.1} parent=35 // pred_check_branch
          %219 = sbr.rel (%p217) target = $region48
        $region47: #{tpu_custom_call.1} parent=35 // pred_region
          %220 = dma.done [#allocation9], 16
        $region48: #{tpu_custom_call.1} parent=35 // pred_fallthru
          _
        %221 = sfence
        %s222 = sand.u32 %s32, 1
        %s223 = scalar_lea.sflag [#allocation4], %s222
        %s224 = sand.u32 %s32, 1
        %s225 = smul.addr %s224, 16
        %s226 = scalar_lea.vmem [#allocation3], %s225
        %p227 = pneg %p45
        %p228 = pneg %p42
        %p229 = pneg %p66
        %p230 = pneg %p63
        %p231 = pneg %p87
        %p232 = pneg %p84
        %p233 = pneg %p108
        %p234 = pneg %p105
        %p235 = pneg %p134
        %p236 = pneg %p131
        %s237 = sand.u32 %s121, 1
        %s238 = scalar_lea.sflag [#allocation5], %s237
        %s239 = sand.u32 %s121, 1
        %s240 = smul.addr %s239, 16
        %s241 = scalar_lea.vmem [#allocation10], %s240
        %v242 = vlaneseq
        %v243 = vand.u32 %v242, 127
        %v244 = vadd.s32 %v243, 128
        %vm245 = vcmp.lt.s32.totalorder %v243, 0
        %v246 = vsub.s32 0, %v243
        %v247 = vsel %vm245, %v246, %v243
        %v248 = vshrl.u32 %v247, 4
        %v249 = vand.u32 %v247, 15
        %v250 = vsub.s32 0, %v249
        %v251 = vsel %vm245, %v250, %v249
        %vm252 = vcmp.lt.s32.totalorder %v244, 0
        %v253 = vsub.s32 0, %v244
        %v254 = vsel %vm252, %v253, %v244
        %v255 = vshrl.u32 %v254, 4
        %v256 = vand.u32 %v254, 15
        %v257 = vsub.s32 0, %v256
        %v258 = vsel %vm252, %v257, %v256
        %vm259 = vcmp.ne.s32.totalorder %v251, 0
        %vm260 = vcmp.ne.s32.totalorder %v258, 0
        %vm261 = vcmp.lt.s32.totalorder %v251, 0
        %vm262 = vcmp.lt.s32.totalorder %v258, 0
        %vm263 = vmand %vm261, %vm259
        %vm264 = vmand %vm262, %vm260
        %v265 = vadd.s32 %v251, 16
        %v266 = vadd.s32 %v258, 16
        %v267 = vsel %vm263, %v265, %v251
        %v268 = vsel %vm264, %v266, %v258
        %v269 = vld [vmem:[%s208] sm:$0xff]
        %v270 = vld [vmem:[%s208 + $0x8] sm:$0xff]
        %v271 = vadd.f32 %v269, %v270
        %272 = vadd.xlane.f32.xlu0 %v271
        %v273 = vpop.xlane.xlu0 %272
        %v274 = vmul.f32 %v273, 0.00390625
        %v275 = vmax.f32 %v269, %v270
        %276 = vmax.xlane.f32.xlu0 %v275
        %v277 = vpop.xlane.xlu0 %276
        %v278 = vadd.f32 %v274, %v277
        %v280 = vrot.slane %v278, 7
        %vm282 = vcmask 1040384
        %v283 = vsel %vm282, 0.0, %v280
        %v284 = vsel %vm282, %v280, 0.0
        %s285 = sld [smem:[#allocation7]]
        %s286 = sld [smem:[#allocation7 + $0x1]]
        %s287 = sld [smem:[#allocation7 + $0x2]]
        %v288 = vstv %s285
        %v289 = vmul.f32 %v288, %v283
        %v290 = vstv %s286
        %v291 = vmul.f32 %v290, %v283
        %v292 = vmul.f32 %v290, %v284
        %vm295 = vcmask 1046528
        %v296 = vrot.slane %v291, 1
        %v297 = vrot.slane %v292, 1
        %v298 = vsel %vm295, %v296, %v297
        %v300 = vadd.f32 %v289, %v298
        %v301 = vstv %s287
        %v302 = vmul.f32 %v301, %v283
        %v303 = vmul.f32 %v301, %v284
        %vm306 = vcmask 1045504
        %v307 = vrot.slane %v302, 2
        %v308 = vrot.slane %v303, 2
        %v309 = vsel %vm306, %v307, %v308
        %v311 = vadd.f32 %v300, %v309
        %v312 = vxor.u32 %v311, 2147483648
        %v313 = vmul.f32 %v312, 1.442695
        %v314 = vpow.pop %v313
        %v315 = vadd.f32 %v314, 1.0
        %v316 = vrcp.pop %v315
        %v317 = vmul.f32 1.0, %v316
        %319 = vset.pattern.permute.xlu0 0
        %320 = vperm.xlu0 %319, %v317
        %v321 = vpop.permute.xlu0 %320
        %v323 = vmul.f32 %v269, %v321
        %v324 = vmul.f32 %v270, %v321
        %v325 = vrot.slane %v323, 4
        %v326 = vadd.f32 %v323, %v325
        %v327 = vrot.slane %v326, 2
        %v328 = vadd.f32 %v326, %v327
        %v329 = vrot.slane %v328, 1
        %v330 = vadd.f32 %v328, %v329
        %v331 = vrot.slane %v324, 4
        %v332 = vadd.f32 %v324, %v331
        %v333 = vrot.slane %v332, 2
        %v334 = vadd.f32 %v332, %v333
        %v335 = vrot.slane %v334, 1
        %v336 = vadd.f32 %v334, %v335
        %v337 = vadd.f32 %v330, 0.0
        %v338 = vadd.f32 %v336, 0.0
        %v339 = vrot.slane %v323, 4
        %v340 = vmax.f32 %v323, %v339
        %v341 = vrot.slane %v340, 2
        %v342 = vmax.f32 %v340, %v341
        %v343 = vrot.slane %v342, 1
        %v344 = vmax.f32 %v342, %v343
        %v345 = vrot.slane %v324, 4
        %v346 = vmax.f32 %v324, %v345
        %v347 = vrot.slane %v346, 2
        %v348 = vmax.f32 %v346, %v347
        %v349 = vrot.slane %v348, 1
        %v350 = vmax.f32 %v348, %v349
        %v351 = vmul.f32 %v337, 0.125
        %v352 = vmul.f32 %v338, 0.125
        %355 = vrot.lane.b32.xlu0 %v351, 51
        %v356 = vpop.permute.xlu0 %355
        %357 = vrot.lane.b32.xlu0 %v352, 51
        %v358 = vpop.permute.xlu0 %357
        %vm359 = vcmask 416768
        %v360 = vsel %vm359, %v356, %v358
        %v364 = vsel %vm359, 0.0, %v356
        %v365 = vsel %vm359, %v358, 0.0
        %368 = vrot.lane.b32.xlu0 %v344, 51
        %v369 = vpop.permute.xlu0 %368
        %370 = vrot.lane.b32.xlu0 %v350, 51
        %v371 = vpop.permute.xlu0 %370
        %v372 = vsel %vm359, %v369, %v371
        %v376 = vsel %vm359, 0.0, %v369
        %v377 = vsel %vm359, %v371, 0.0
        %s378 = sld [smem:[#allocation8]]
        %s379 = sld [smem:[#allocation8 + $0x1]]
        %s380 = sld [smem:[#allocation8 + $0x2]]
        %s381 = sld [smem:[#allocation8 + $0x3]]
        %s382 = sld [smem:[#allocation8 + $0x4]]
        %s383 = sld [smem:[#allocation8 + $0x5]]
        %s384 = sld [smem:[#allocation8 + $0x6]]
        %s385 = sld [smem:[#allocation8 + $0x7]]
        %s386 = sld [smem:[#allocation8 + $0x8]]
        %s387 = sld [smem:[#allocation8 + $0x9]]
        %s388 = sld [smem:[#allocation8 + $0xa]]
        %s389 = sld [smem:[#allocation8 + $0xb]]
        %s390 = sld [smem:[#allocation8 + $0xc]]
        %s391 = sld [smem:[#allocation8 + $0xd]]
        %s392 = sld [smem:[#allocation8 + $0xe]]
        %s393 = sld [smem:[#allocation8 + $0xf]]
        %s394 = sld [smem:[#allocation8 + $0x10]]
        %s395 = sld [smem:[#allocation8 + $0x11]]
        %s396 = sld [smem:[#allocation8 + $0x12]]
        %s397 = sld [smem:[#allocation8 + $0x13]]
        %s398 = sld [smem:[#allocation8 + $0x14]]
        %s399 = sld [smem:[#allocation8 + $0x15]]
        %s400 = sld [smem:[#allocation8 + $0x16]]
        %s401 = sld [smem:[#allocation8 + $0x17]]
        %s402 = sld [smem:[#allocation8 + $0x18]]
        %s403 = sld [smem:[#allocation8 + $0x19]]
        %s404 = sld [smem:[#allocation8 + $0x1a]]
        %s405 = sld [smem:[#allocation8 + $0x1b]]
        %s406 = sld [smem:[#allocation8 + $0x1c]]
        %s407 = sld [smem:[#allocation8 + $0x1d]]
        %s408 = sld [smem:[#allocation8 + $0x1e]]
        %s409 = sld [smem:[#allocation8 + $0x1f]]
        %s410 = sld [smem:[#allocation8 + $0x20]]
        %s411 = sld [smem:[#allocation8 + $0x21]]
        %s412 = sld [smem:[#allocation8 + $0x22]]
        %s413 = sld [smem:[#allocation8 + $0x23]]
        %s414 = sld [smem:[#allocation8 + $0x24]]
        %s415 = sld [smem:[#allocation8 + $0x25]]
        %s416 = sld [smem:[#allocation8 + $0x26]]
        %s417 = sld [smem:[#allocation8 + $0x27]]
        %s418 = sld [smem:[#allocation8 + $0x28]]
        %s419 = sld [smem:[#allocation8 + $0x29]]
        %s420 = sld [smem:[#allocation8 + $0x2a]]
        %s421 = sld [smem:[#allocation8 + $0x2b]]
        %s422 = sld [smem:[#allocation8 + $0x2c]]
        %s423 = sld [smem:[#allocation8 + $0x2d]]
        %s424 = sld [smem:[#allocation8 + $0x2e]]
        %s425 = sld [smem:[#allocation8 + $0x2f]]
        %s426 = sld [smem:[#allocation8 + $0x30]]
        %s427 = sld [smem:[#allocation8 + $0x31]]
        %s428 = sld [smem:[#allocation8 + $0x32]]
        %s429 = sld [smem:[#allocation8 + $0x33]]
        %s430 = sld [smem:[#allocation8 + $0x34]]
        %s431 = sld [smem:[#allocation8 + $0x35]]
        %s432 = sld [smem:[#allocation8 + $0x36]]
        %s433 = sld [smem:[#allocation8 + $0x37]]
        %s434 = sld [smem:[#allocation8 + $0x38]]
        %s435 = sld [smem:[#allocation8 + $0x39]]
        %s436 = sld [smem:[#allocation8 + $0x3a]]
        %s437 = sld [smem:[#allocation8 + $0x3b]]
        %s438 = sld [smem:[#allocation8 + $0x3c]]
        %s439 = sld [smem:[#allocation8 + $0x3d]]
        %s440 = sld [smem:[#allocation8 + $0x3e]]
        %s441 = sld [smem:[#allocation8 + $0x3f]]
        %s442 = sld [smem:[#allocation8 + $0x40]]
        %s443 = sld [smem:[#allocation8 + $0x41]]
        %s444 = sld [smem:[#allocation8 + $0x42]]
        %s445 = sld [smem:[#allocation8 + $0x43]]
        %s446 = sld [smem:[#allocation8 + $0x44]]
        %s447 = sld [smem:[#allocation8 + $0x45]]
        %s448 = sld [smem:[#allocation8 + $0x46]]
        %s449 = sld [smem:[#allocation8 + $0x47]]
        %s450 = sld [smem:[#allocation8 + $0x48]]
        %s451 = sld [smem:[#allocation8 + $0x49]]
        %s452 = sld [smem:[#allocation8 + $0x4a]]
        %s453 = sld [smem:[#allocation8 + $0x4b]]
        %s454 = sld [smem:[#allocation8 + $0x4c]]
        %s455 = sld [smem:[#allocation8 + $0x4d]]
        %s456 = sld [smem:[#allocation8 + $0x4e]]
        %s457 = sld [smem:[#allocation8 + $0x4f]]
        %s458 = sld [smem:[#allocation8 + $0x50]]
        %s459 = sld [smem:[#allocation8 + $0x51]]
        %s460 = sld [smem:[#allocation8 + $0x52]]
        %s461 = sld [smem:[#allocation8 + $0x53]]
        %s462 = sld [smem:[#allocation8 + $0x54]]
        %s463 = sld [smem:[#allocation8 + $0x55]]
        %s464 = sld [smem:[#allocation8 + $0x56]]
        %s465 = sld [smem:[#allocation8 + $0x57]]
        %s466 = sld [smem:[#allocation8 + $0x58]]
        %s467 = sld [smem:[#allocation8 + $0x59]]
        %s468 = sld [smem:[#allocation8 + $0x5a]]
        %s469 = sld [smem:[#allocation8 + $0x5b]]
        %s470 = sld [smem:[#allocation8 + $0x5c]]
        %s471 = sld [smem:[#allocation8 + $0x5d]]
        %s472 = sld [smem:[#allocation8 + $0x5e]]
        %s473 = sld [smem:[#allocation8 + $0x5f]]
        %s474 = sld [smem:[#allocation8 + $0x60]]
        %s475 = sld [smem:[#allocation8 + $0x61]]
        %v476 = vstv %s378
        %v477 = vmul.f32 %v476, %v364
        %v478 = vmul.f32 %v476, %v360
        %v479 = vadd.f32 %v477, 0.0
        %v480 = vadd.f32 %v478, 0.0
        %v481 = vstv %s427
        %v482 = vmul.f32 %v481, %v376
        %v483 = vmul.f32 %v481, %v372
        %v484 = vadd.f32 %v479, %v482
        %v485 = vadd.f32 %v480, %v483
        %v486 = vstv %s385
        %v487 = vmul.f32 %v486, %v364
        %v488 = vmul.f32 %v486, %v360
        %v489 = vmul.f32 %v486, %v365
        %493 = vrot.lane.b32.xlu0 %v487, 112
        %v494 = vpop.permute.xlu0 %493
        %495 = vrot.lane.b32.xlu0 %v488, 112
        %v496 = vpop.permute.xlu0 %495
        %497 = vrot.lane.b32.xlu0 %v489, 112
        %v498 = vpop.permute.xlu0 %497
        %vm499 = vcmask 916480
        %v500 = vsel %vm499, %v494, %v496
        %v501 = vsel %vm499, %v496, %v498
        %v504 = vadd.f32 %v484, %v500
        %v505 = vadd.f32 %v485, %v501
        %v506 = vstv %s434
        %v507 = vmul.f32 %v506, %v376
        %v508 = vmul.f32 %v506, %v372
        %v509 = vmul.f32 %v506, %v377
        %513 = vrot.lane.b32.xlu0 %v507, 112
        %v514 = vpop.permute.xlu0 %513
        %515 = vrot.lane.b32.xlu0 %v508, 112
        %v516 = vpop.permute.xlu0 %515
        %517 = vrot.lane.b32.xlu0 %v509, 112
        %v518 = vpop.permute.xlu0 %517
        %v519 = vsel %vm499, %v514, %v516
        %v520 = vsel %vm499, %v516, %v518
        %v523 = vadd.f32 %v504, %v519
        %v524 = vadd.f32 %v505, %v520
        %v525 = vstv %s392
        %v526 = vmul.f32 %v525, %v364
        %v527 = vmul.f32 %v525, %v360
        %v528 = vmul.f32 %v525, %v365
        %532 = vrot.lane.b32.xlu0 %v526, 96
        %v533 = vpop.permute.xlu0 %532
        %534 = vrot.lane.b32.xlu0 %v527, 96
        %v535 = vpop.permute.xlu0 %534
        %536 = vrot.lane.b32.xlu0 %v528, 96
        %v537 = vpop.permute.xlu0 %536
        %vm538 = vcmask 785408
        %v539 = vsel %vm538, %v533, %v535
        %v540 = vsel %vm538, %v535, %v537
        %v543 = vadd.f32 %v523, %v539
        %v544 = vadd.f32 %v524, %v540
        %v545 = vstv %s441
        %v546 = vmul.f32 %v545, %v376
        %v547 = vmul.f32 %v545, %v372
        %v548 = vmul.f32 %v545, %v377
        %552 = vrot.lane.b32.xlu0 %v546, 96
        %v553 = vpop.permute.xlu0 %552
        %554 = vrot.lane.b32.xlu0 %v547, 96
        %v555 = vpop.permute.xlu0 %554
        %556 = vrot.lane.b32.xlu0 %v548, 96
        %v557 = vpop.permute.xlu0 %556
        %v558 = vsel %vm538, %v553, %v555
        %v559 = vsel %vm538, %v555, %v557
        %v562 = vadd.f32 %v543, %v558
        %v563 = vadd.f32 %v544, %v559
        %v564 = vstv %s399
        %v565 = vmul.f32 %v564, %v364
        %v566 = vmul.f32 %v564, %v360
        %v567 = vmul.f32 %v564, %v365
        %571 = vrot.lane.b32.xlu0 %v565, 80
        %v572 = vpop.permute.xlu0 %571
        %573 = vrot.lane.b32.xlu0 %v566, 80
        %v574 = vpop.permute.xlu0 %573
        %575 = vrot.lane.b32.xlu0 %v567, 80
        %v576 = vpop.permute.xlu0 %575
        %vm577 = vcmask 654336
        %v578 = vsel %vm577, %v572, %v574
        %v579 = vsel %vm577, %v574, %v576
        %v582 = vadd.f32 %v562, %v578
        %v583 = vadd.f32 %v563, %v579
        %v584 = vstv %s448
        %v585 = vmul.f32 %v584, %v376
        %v586 = vmul.f32 %v584, %v372
        %v587 = vmul.f32 %v584, %v377
        %591 = vrot.lane.b32.xlu0 %v585, 80
        %v592 = vpop.permute.xlu0 %591
        %593 = vrot.lane.b32.xlu0 %v586, 80
        %v594 = vpop.permute.xlu0 %593
        %595 = vrot.lane.b32.xlu0 %v587, 80
        %v596 = vpop.permute.xlu0 %595
        %v597 = vsel %vm577, %v592, %v594
        %v598 = vsel %vm577, %v594, %v596
        %v601 = vadd.f32 %v582, %v597
        %v602 = vadd.f32 %v583, %v598
        %v603 = vstv %s406
        %v604 = vmul.f32 %v603, %v364
        %v605 = vmul.f32 %v603, %v360
        %v606 = vmul.f32 %v603, %v365
        %610 = vrot.lane.b32.xlu0 %v604, 64
        %v611 = vpop.permute.xlu0 %610
        %612 = vrot.lane.b32.xlu0 %v605, 64
        %v613 = vpop.permute.xlu0 %612
        %614 = vrot.lane.b32.xlu0 %v606, 64
        %v615 = vpop.permute.xlu0 %614
        %vm616 = vcmask 523264
        %v617 = vsel %vm616, %v611, %v613
        %v618 = vsel %vm616, %v613, %v615
        %v621 = vadd.f32 %v601, %v617
        %v622 = vadd.f32 %v602, %v618
        %v623 = vstv %s455
        %v624 = vmul.f32 %v623, %v376
        %v625 = vmul.f32 %v623, %v372
        %v626 = vmul.f32 %v623, %v377
        %630 = vrot.lane.b32.xlu0 %v624, 64
        %v631 = vpop.permute.xlu0 %630
        %632 = vrot.lane.b32.xlu0 %v625, 64
        %v633 = vpop.permute.xlu0 %632
        %634 = vrot.lane.b32.xlu0 %v626, 64
        %v635 = vpop.permute.xlu0 %634
        %v636 = vsel %vm616, %v631, %v633
        %v637 = vsel %vm616, %v633, %v635
        %v640 = vadd.f32 %v621, %v636
        %v641 = vadd.f32 %v622, %v637
        %v642 = vstv %s413
        %v643 = vmul.f32 %v642, %v364
        %v644 = vmul.f32 %v642, %v360
        %v645 = vmul.f32 %v642, %v365
        %649 = vrot.lane.b32.xlu0 %v643, 48
        %v650 = vpop.permute.xlu0 %649
        %651 = vrot.lane.b32.xlu0 %v644, 48
        %v652 = vpop.permute.xlu0 %651
        %653 = vrot.lane.b32.xlu0 %v645, 48
        %v654 = vpop.permute.xlu0 %653
        %vm655 = vcmask 392192
        %v656 = vsel %vm655, %v650, %v652
        %v657 = vsel %vm655, %v652, %v654
        %v660 = vadd.f32 %v640, %v656
        %v661 = vadd.f32 %v641, %v657
        %v662 = vstv %s462
        %v663 = vmul.f32 %v662, %v376
        %v664 = vmul.f32 %v662, %v372
        %v665 = vmul.f32 %v662, %v377
        %669 = vrot.lane.b32.xlu0 %v663, 48
        %v670 = vpop.permute.xlu0 %669
        %671 = vrot.lane.b32.xlu0 %v664, 48
        %v672 = vpop.permute.xlu0 %671
        %673 = vrot.lane.b32.xlu0 %v665, 48
        %v674 = vpop.permute.xlu0 %673
        %v675 = vsel %vm655, %v670, %v672
        %v676 = vsel %vm655, %v672, %v674
        %v679 = vadd.f32 %v660, %v675
        %v680 = vadd.f32 %v661, %v676
        %v681 = vstv %s420
        %v682 = vmul.f32 %v681, %v364
        %v683 = vmul.f32 %v681, %v360
        %v684 = vmul.f32 %v681, %v365
        %688 = vrot.lane.b32.xlu0 %v682, 32
        %v689 = vpop.permute.xlu0 %688
        %690 = vrot.lane.b32.xlu0 %v683, 32
        %v691 = vpop.permute.xlu0 %690
        %692 = vrot.lane.b32.xlu0 %v684, 32
        %v693 = vpop.permute.xlu0 %692
        %vm694 = vcmask 261120
        %v695 = vsel %vm694, %v689, %v691
        %v696 = vsel %vm694, %v691, %v693
        %v699 = vadd.f32 %v679, %v695
        %v700 = vadd.f32 %v680, %v696
        %v701 = vstv %s469
        %v702 = vmul.f32 %v701, %v376
        %v703 = vmul.f32 %v701, %v372
        %v704 = vmul.f32 %v701, %v377
        %708 = vrot.lane.b32.xlu0 %v702, 32
        %v709 = vpop.permute.xlu0 %708
        %710 = vrot.lane.b32.xlu0 %v703, 32
        %v711 = vpop.permute.xlu0 %710
        %712 = vrot.lane.b32.xlu0 %v704, 32
        %v713 = vpop.permute.xlu0 %712
        %v714 = vsel %vm694, %v709, %v711
        %v715 = vsel %vm694, %v711, %v713
        %v718 = vadd.f32 %v699, %v714
        %v719 = vadd.f32 %v700, %v715
        %v720 = vadd.s32 %v267, 4294967293
        %v721 = vadd.s32 %v268, 4294967293
        %vm722 = vcmp.ge.s32.totalorder %v720, 0
        %vm723 = vcmp.ge.s32.totalorder %v721, 0
        %vm724 = vcmp.lt.s32.totalorder %v720, 16
        %vm725 = vcmp.lt.s32.totalorder %v721, 16
        %vm726 = vmand %vm722, %vm724
        %vm727 = vmand %vm723, %vm725
        %v728 = vsel %vm726, %v718, 0.0
        %v729 = vsel %vm727, %v719, 0.0
        %v730 = vadd.f32 %v728, 0.0
        %v731 = vadd.f32 %v729, 0.0
        %v732 = vstv %s379
        %v733 = vmul.f32 %v732, %v364
        %v734 = vmul.f32 %v732, %v360
        %v735 = vmul.f32 %v732, %v365
        %v736 = vadd.f32 %v733, 0.0
        %v737 = vadd.f32 %v734, 0.0
        %v738 = vadd.f32 %v735, 0.0
        %v739 = vstv %s428
        %v740 = vmul.f32 %v739, %v376
        %v741 = vmul.f32 %v739, %v372
        %v742 = vmul.f32 %v739, %v377
        %v743 = vadd.f32 %v736, %v740
        %v744 = vadd.f32 %v737, %v741
        %v745 = vadd.f32 %v738, %v742
        %v746 = vstv %s386
        %v747 = vmul.f32 %v746, %v364
        %v748 = vmul.f32 %v746, %v360
        %v749 = vmul.f32 %v746, %v365
        %753 = vrot.lane.b32.xlu0 %v747, 112
        %v754 = vpop.permute.xlu0 %753
        %755 = vrot.lane.b32.xlu0 %v748, 112
        %v756 = vpop.permute.xlu0 %755
        %757 = vrot.lane.b32.xlu0 %v749, 112
        %v758 = vpop.permute.xlu0 %757
        %v759 = vsel %vm499, %v754, %v756
        %v760 = vsel %vm499, %v756, %v758
        %v764 = vadd.f32 %v743, %v759
        %v765 = vadd.f32 %v744, %v760
        %v766 = vadd.f32 %v745, %v758
        %v767 = vstv %s435
        %v768 = vmul.f32 %v767, %v376
        %v769 = vmul.f32 %v767, %v372
        %v770 = vmul.f32 %v767, %v377
        %774 = vrot.lane.b32.xlu0 %v768, 112
        %v775 = vpop.permute.xlu0 %774
        %776 = vrot.lane.b32.xlu0 %v769, 112
        %v777 = vpop.permute.xlu0 %776
        %778 = vrot.lane.b32.xlu0 %v770, 112
        %v779 = vpop.permute.xlu0 %778
        %v780 = vsel %vm499, %v775, %v777
        %v781 = vsel %vm499, %v777, %v779
        %v785 = vadd.f32 %v764, %v780
        %v786 = vadd.f32 %v765, %v781
        %v787 = vadd.f32 %v766, %v779
        %v788 = vstv %s393
        %v789 = vmul.f32 %v788, %v364
        %v790 = vmul.f32 %v788, %v360
        %v791 = vmul.f32 %v788, %v365
        %795 = vrot.lane.b32.xlu0 %v789, 96
        %v796 = vpop.permute.xlu0 %795
        %797 = vrot.lane.b32.xlu0 %v790, 96
        %v798 = vpop.permute.xlu0 %797
        %799 = vrot.lane.b32.xlu0 %v791, 96
        %v800 = vpop.permute.xlu0 %799
        %v801 = vsel %vm538, %v796, %v798
        %v802 = vsel %vm538, %v798, %v800
        %v806 = vadd.f32 %v785, %v801
        %v807 = vadd.f32 %v786, %v802
        %v808 = vadd.f32 %v787, %v800
        %v809 = vstv %s442
        %v810 = vmul.f32 %v809, %v376
        %v811 = vmul.f32 %v809, %v372
        %v812 = vmul.f32 %v809, %v377
        %816 = vrot.lane.b32.xlu0 %v810, 96
        %v817 = vpop.permute.xlu0 %816
        %818 = vrot.lane.b32.xlu0 %v811, 96
        %v819 = vpop.permute.xlu0 %818
        %820 = vrot.lane.b32.xlu0 %v812, 96
        %v821 = vpop.permute.xlu0 %820
        %v822 = vsel %vm538, %v817, %v819
        %v823 = vsel %vm538, %v819, %v821
        %v827 = vadd.f32 %v806, %v822
        %v828 = vadd.f32 %v807, %v823
        %v829 = vadd.f32 %v808, %v821
        %v830 = vstv %s400
        %v831 = vmul.f32 %v830, %v364
        %v832 = vmul.f32 %v830, %v360
        %v833 = vmul.f32 %v830, %v365
        %837 = vrot.lane.b32.xlu0 %v831, 80
        %v838 = vpop.permute.xlu0 %837
        %839 = vrot.lane.b32.xlu0 %v832, 80
        %v840 = vpop.permute.xlu0 %839
        %841 = vrot.lane.b32.xlu0 %v833, 80
        %v842 = vpop.permute.xlu0 %841
        %v843 = vsel %vm577, %v838, %v840
        %v844 = vsel %vm577, %v840, %v842
        %v848 = vadd.f32 %v827, %v843
        %v849 = vadd.f32 %v828, %v844
        %v850 = vadd.f32 %v829, %v842
        %v851 = vstv %s449
        %v852 = vmul.f32 %v851, %v376
        %v853 = vmul.f32 %v851, %v372
        %v854 = vmul.f32 %v851, %v377
        %858 = vrot.lane.b32.xlu0 %v852, 80
        %v859 = vpop.permute.xlu0 %858
        %860 = vrot.lane.b32.xlu0 %v853, 80
        %v861 = vpop.permute.xlu0 %860
        %862 = vrot.lane.b32.xlu0 %v854, 80
        %v863 = vpop.permute.xlu0 %862
        %v864 = vsel %vm577, %v859, %v861
        %v865 = vsel %vm577, %v861, %v863
        %v869 = vadd.f32 %v848, %v864
        %v870 = vadd.f32 %v849, %v865
        %v871 = vadd.f32 %v850, %v863
        %v872 = vstv %s407
        %v873 = vmul.f32 %v872, %v364
        %v874 = vmul.f32 %v872, %v360
        %v875 = vmul.f32 %v872, %v365
        %879 = vrot.lane.b32.xlu0 %v873, 64
        %v880 = vpop.permute.xlu0 %879
        %881 = vrot.lane.b32.xlu0 %v874, 64
        %v882 = vpop.permute.xlu0 %881
        %883 = vrot.lane.b32.xlu0 %v875, 64
        %v884 = vpop.permute.xlu0 %883
        %v885 = vsel %vm616, %v880, %v882
        %v886 = vsel %vm616, %v882, %v884
        %v890 = vadd.f32 %v869, %v885
        %v891 = vadd.f32 %v870, %v886
        %v892 = vadd.f32 %v871, %v884
        %v893 = vstv %s456
        %v894 = vmul.f32 %v893, %v376
        %v895 = vmul.f32 %v893, %v372
        %v896 = vmul.f32 %v893, %v377
        %900 = vrot.lane.b32.xlu0 %v894, 64
        %v901 = vpop.permute.xlu0 %900
        %902 = vrot.lane.b32.xlu0 %v895, 64
        %v903 = vpop.permute.xlu0 %902
        %904 = vrot.lane.b32.xlu0 %v896, 64
        %v905 = vpop.permute.xlu0 %904
        %v906 = vsel %vm616, %v901, %v903
        %v907 = vsel %vm616, %v903, %v905
        %v911 = vadd.f32 %v890, %v906
        %v912 = vadd.f32 %v891, %v907
        %v913 = vadd.f32 %v892, %v905
        %v914 = vstv %s414
        %v915 = vmul.f32 %v914, %v364
        %v916 = vmul.f32 %v914, %v360
        %v917 = vmul.f32 %v914, %v365
        %921 = vrot.lane.b32.xlu0 %v915, 48
        %v922 = vpop.permute.xlu0 %921
        %923 = vrot.lane.b32.xlu0 %v916, 48
        %v924 = vpop.permute.xlu0 %923
        %925 = vrot.lane.b32.xlu0 %v917, 48
        %v926 = vpop.permute.xlu0 %925
        %v927 = vsel %vm655, %v922, %v924
        %v928 = vsel %vm655, %v924, %v926
        %v932 = vadd.f32 %v911, %v927
        %v933 = vadd.f32 %v912, %v928
        %v934 = vadd.f32 %v913, %v926
        %v935 = vstv %s463
        %v936 = vmul.f32 %v935, %v376
        %v937 = vmul.f32 %v935, %v372
        %v938 = vmul.f32 %v935, %v377
        %942 = vrot.lane.b32.xlu0 %v936, 48
        %v943 = vpop.permute.xlu0 %942
        %944 = vrot.lane.b32.xlu0 %v937, 48
        %v945 = vpop.permute.xlu0 %944
        %946 = vrot.lane.b32.xlu0 %v938, 48
        %v947 = vpop.permute.xlu0 %946
        %v948 = vsel %vm655, %v943, %v945
        %v949 = vsel %vm655, %v945, %v947
        %v953 = vadd.f32 %v932, %v948
        %v954 = vadd.f32 %v933, %v949
        %v955 = vadd.f32 %v934, %v947
        %v956 = vstv %s421
        %v957 = vmul.f32 %v956, %v364
        %v958 = vmul.f32 %v956, %v360
        %v959 = vmul.f32 %v956, %v365
        %963 = vrot.lane.b32.xlu0 %v957, 32
        %v964 = vpop.permute.xlu0 %963
        %965 = vrot.lane.b32.xlu0 %v958, 32
        %v966 = vpop.permute.xlu0 %965
        %967 = vrot.lane.b32.xlu0 %v959, 32
        %v968 = vpop.permute.xlu0 %967
        %v969 = vsel %vm694, %v964, %v966
        %v970 = vsel %vm694, %v966, %v968
        %v974 = vadd.f32 %v953, %v969
        %v975 = vadd.f32 %v954, %v970
        %v976 = vadd.f32 %v955, %v968
        %v977 = vstv %s470
        %v978 = vmul.f32 %v977, %v376
        %v979 = vmul.f32 %v977, %v372
        %v980 = vmul.f32 %v977, %v377
        %984 = vrot.lane.b32.xlu0 %v978, 32
        %v985 = vpop.permute.xlu0 %984
        %986 = vrot.lane.b32.xlu0 %v979, 32
        %v987 = vpop.permute.xlu0 %986
        %988 = vrot.lane.b32.xlu0 %v980, 32
        %v989 = vpop.permute.xlu0 %988
        %v990 = vsel %vm694, %v985, %v987
        %v991 = vsel %vm694, %v987, %v989
        %v995 = vadd.f32 %v974, %v990
        %v996 = vadd.f32 %v975, %v991
        %v997 = vadd.f32 %v976, %v989
        %v998 = vadd.s32 %v267, 4294967294
        %v999 = vadd.s32 %v268, 4294967294
        %vm1000 = vcmp.ge.s32.totalorder %v998, 0
        %vm1001 = vcmp.ge.s32.totalorder %v999, 0
        %vm1002 = vcmp.lt.s32.totalorder %v998, 16
        %vm1003 = vcmp.lt.s32.totalorder %v999, 16
        %vm1004 = vmand %vm1000, %vm1002
        %vm1005 = vmand %vm1001, %vm1003
        %1009 = vrot.lane.b32.xlu0 %v995, 127
        %v1010 = vpop.permute.xlu0 %1009
        %1011 = vrot.lane.b32.xlu0 %v996, 127
        %v1012 = vpop.permute.xlu0 %1011
        %1013 = vrot.lane.b32.xlu0 %v997, 127
        %v1014 = vpop.permute.xlu0 %1013
        %vm1015 = vcmask 1039360
        %v1016 = vsel %vm1015, %v1010, %v1012
        %v1017 = vsel %vm1015, %v1012, %v1014
        %v1020 = vsel %vm1004, %v1016, 0.0
        %v1021 = vsel %vm1005, %v1017, 0.0
        %v1022 = vadd.f32 %v730, %v1020
        %v1023 = vadd.f32 %v731, %v1021
        %v1024 = vstv %s380
        %v1025 = vmul.f32 %v1024, %v364
        %v1026 = vmul.f32 %v1024, %v360
        %v1027 = vmul.f32 %v1024, %v365
        %v1028 = vadd.f32 %v1025, 0.0
        %v1029 = vadd.f32 %v1026, 0.0
        %v1030 = vadd.f32 %v1027, 0.0
        %v1031 = vstv %s429
        %v1032 = vmul.f32 %v1031, %v376
        %v1033 = vmul.f32 %v1031, %v372
        %v1034 = vmul.f32 %v1031, %v377
        %v1035 = vadd.f32 %v1028, %v1032
        %v1036 = vadd.f32 %v1029, %v1033
        %v1037 = vadd.f32 %v1030, %v1034
        %v1038 = vstv %s387
        %v1039 = vmul.f32 %v1038, %v364
        %v1040 = vmul.f32 %v1038, %v360
        %v1041 = vmul.f32 %v1038, %v365
        %1045 = vrot.lane.b32.xlu0 %v1039, 112
        %v1046 = vpop.permute.xlu0 %1045
        %1047 = vrot.lane.b32.xlu0 %v1040, 112
        %v1048 = vpop.permute.xlu0 %1047
        %1049 = vrot.lane.b32.xlu0 %v1041, 112
        %v1050 = vpop.permute.xlu0 %1049
        %v1051 = vsel %vm499, %v1046, %v1048
        %v1052 = vsel %vm499, %v1048, %v1050
        %v1056 = vadd.f32 %v1035, %v1051
        %v1057 = vadd.f32 %v1036, %v1052
        %v1058 = vadd.f32 %v1037, %v1050
        %v1059 = vstv %s436
        %v1060 = vmul.f32 %v1059, %v376
        %v1061 = vmul.f32 %v1059, %v372
        %v1062 = vmul.f32 %v1059, %v377
        %1066 = vrot.lane.b32.xlu0 %v1060, 112
        %v1067 = vpop.permute.xlu0 %1066
        %1068 = vrot.lane.b32.xlu0 %v1061, 112
        %v1069 = vpop.permute.xlu0 %1068
        %1070 = vrot.lane.b32.xlu0 %v1062, 112
        %v1071 = vpop.permute.xlu0 %1070
        %v1072 = vsel %vm499, %v1067, %v1069
        %v1073 = vsel %vm499, %v1069, %v1071
        %v1077 = vadd.f32 %v1056, %v1072
        %v1078 = vadd.f32 %v1057, %v1073
        %v1079 = vadd.f32 %v1058, %v1071
        %v1080 = vstv %s394
        %v1081 = vmul.f32 %v1080, %v364
        %v1082 = vmul.f32 %v1080, %v360
        %v1083 = vmul.f32 %v1080, %v365
        %1087 = vrot.lane.b32.xlu0 %v1081, 96
        %v1088 = vpop.permute.xlu0 %1087
        %1089 = vrot.lane.b32.xlu0 %v1082, 96
        %v1090 = vpop.permute.xlu0 %1089
        %1091 = vrot.lane.b32.xlu0 %v1083, 96
        %v1092 = vpop.permute.xlu0 %1091
        %v1093 = vsel %vm538, %v1088, %v1090
        %v1094 = vsel %vm538, %v1090, %v1092
        %v1098 = vadd.f32 %v1077, %v1093
        %v1099 = vadd.f32 %v1078, %v1094
        %v1100 = vadd.f32 %v1079, %v1092
        %v1101 = vstv %s443
        %v1102 = vmul.f32 %v1101, %v376
        %v1103 = vmul.f32 %v1101, %v372
        %v1104 = vmul.f32 %v1101, %v377
        %1108 = vrot.lane.b32.xlu0 %v1102, 96
        %v1109 = vpop.permute.xlu0 %1108
        %1110 = vrot.lane.b32.xlu0 %v1103, 96
        %v1111 = vpop.permute.xlu0 %1110
        %1112 = vrot.lane.b32.xlu0 %v1104, 96
        %v1113 = vpop.permute.xlu0 %1112
        %v1114 = vsel %vm538, %v1109, %v1111
        %v1115 = vsel %vm538, %v1111, %v1113
        %v1119 = vadd.f32 %v1098, %v1114
        %v1120 = vadd.f32 %v1099, %v1115
        %v1121 = vadd.f32 %v1100, %v1113
        %v1122 = vstv %s401
        %v1123 = vmul.f32 %v1122, %v364
        %v1124 = vmul.f32 %v1122, %v360
        %v1125 = vmul.f32 %v1122, %v365
        %1129 = vrot.lane.b32.xlu0 %v1123, 80
        %v1130 = vpop.permute.xlu0 %1129
        %1131 = vrot.lane.b32.xlu0 %v1124, 80
        %v1132 = vpop.permute.xlu0 %1131
        %1133 = vrot.lane.b32.xlu0 %v1125, 80
        %v1134 = vpop.permute.xlu0 %1133
        %v1135 = vsel %vm577, %v1130, %v1132
        %v1136 = vsel %vm577, %v1132, %v1134
        %v1140 = vadd.f32 %v1119, %v1135
        %v1141 = vadd.f32 %v1120, %v1136
        %v1142 = vadd.f32 %v1121, %v1134
        %v1143 = vstv %s450
        %v1144 = vmul.f32 %v1143, %v376
        %v1145 = vmul.f32 %v1143, %v372
        %v1146 = vmul.f32 %v1143, %v377
        %1150 = vrot.lane.b32.xlu0 %v1144, 80
        %v1151 = vpop.permute.xlu0 %1150
        %1152 = vrot.lane.b32.xlu0 %v1145, 80
        %v1153 = vpop.permute.xlu0 %1152
        %1154 = vrot.lane.b32.xlu0 %v1146, 80
        %v1155 = vpop.permute.xlu0 %1154
        %v1156 = vsel %vm577, %v1151, %v1153
        %v1157 = vsel %vm577, %v1153, %v1155
        %v1161 = vadd.f32 %v1140, %v1156
        %v1162 = vadd.f32 %v1141, %v1157
        %v1163 = vadd.f32 %v1142, %v1155
        %v1164 = vstv %s408
        %v1165 = vmul.f32 %v1164, %v364
        %v1166 = vmul.f32 %v1164, %v360
        %v1167 = vmul.f32 %v1164, %v365
        %1171 = vrot.lane.b32.xlu0 %v1165, 64
        %v1172 = vpop.permute.xlu0 %1171
        %1173 = vrot.lane.b32.xlu0 %v1166, 64
        %v1174 = vpop.permute.xlu0 %1173
        %1175 = vrot.lane.b32.xlu0 %v1167, 64
        %v1176 = vpop.permute.xlu0 %1175
        %v1177 = vsel %vm616, %v1172, %v1174
        %v1178 = vsel %vm616, %v1174, %v1176
        %v1182 = vadd.f32 %v1161, %v1177
        %v1183 = vadd.f32 %v1162, %v1178
        %v1184 = vadd.f32 %v1163, %v1176
        %v1185 = vstv %s457
        %v1186 = vmul.f32 %v1185, %v376
        %v1187 = vmul.f32 %v1185, %v372
        %v1188 = vmul.f32 %v1185, %v377
        %1192 = vrot.lane.b32.xlu0 %v1186, 64
        %v1193 = vpop.permute.xlu0 %1192
        %1194 = vrot.lane.b32.xlu0 %v1187, 64
        %v1195 = vpop.permute.xlu0 %1194
        %1196 = vrot.lane.b32.xlu0 %v1188, 64
        %v1197 = vpop.permute.xlu0 %1196
        %v1198 = vsel %vm616, %v1193, %v1195
        %v1199 = vsel %vm616, %v1195, %v1197
        %v1203 = vadd.f32 %v1182, %v1198
        %v1204 = vadd.f32 %v1183, %v1199
        %v1205 = vadd.f32 %v1184, %v1197
        %v1206 = vstv %s415
        %v1207 = vmul.f32 %v1206, %v364
        %v1208 = vmul.f32 %v1206, %v360
        %v1209 = vmul.f32 %v1206, %v365
        %1213 = vrot.lane.b32.xlu0 %v1207, 48
        %v1214 = vpop.permute.xlu0 %1213
        %1215 = vrot.lane.b32.xlu0 %v1208, 48
        %v1216 = vpop.permute.xlu0 %1215
        %1217 = vrot.lane.b32.xlu0 %v1209, 48
        %v1218 = vpop.permute.xlu0 %1217
        %v1219 = vsel %vm655, %v1214, %v1216
        %v1220 = vsel %vm655, %v1216, %v1218
        %v1224 = vadd.f32 %v1203, %v1219
        %v1225 = vadd.f32 %v1204, %v1220
        %v1226 = vadd.f32 %v1205, %v1218
        %v1227 = vstv %s464
        %v1228 = vmul.f32 %v1227, %v376
        %v1229 = vmul.f32 %v1227, %v372
        %v1230 = vmul.f32 %v1227, %v377
        %1234 = vrot.lane.b32.xlu0 %v1228, 48
        %v1235 = vpop.permute.xlu0 %1234
        %1236 = vrot.lane.b32.xlu0 %v1229, 48
        %v1237 = vpop.permute.xlu0 %1236
        %1238 = vrot.lane.b32.xlu0 %v1230, 48
        %v1239 = vpop.permute.xlu0 %1238
        %v1240 = vsel %vm655, %v1235, %v1237
        %v1241 = vsel %vm655, %v1237, %v1239
        %v1245 = vadd.f32 %v1224, %v1240
        %v1246 = vadd.f32 %v1225, %v1241
        %v1247 = vadd.f32 %v1226, %v1239
        %v1248 = vstv %s422
        %v1249 = vmul.f32 %v1248, %v364
        %v1250 = vmul.f32 %v1248, %v360
        %v1251 = vmul.f32 %v1248, %v365
        %1255 = vrot.lane.b32.xlu0 %v1249, 32
        %v1256 = vpop.permute.xlu0 %1255
        %1257 = vrot.lane.b32.xlu0 %v1250, 32
        %v1258 = vpop.permute.xlu0 %1257
        %1259 = vrot.lane.b32.xlu0 %v1251, 32
        %v1260 = vpop.permute.xlu0 %1259
        %v1261 = vsel %vm694, %v1256, %v1258
        %v1262 = vsel %vm694, %v1258, %v1260
        %v1266 = vadd.f32 %v1245, %v1261
        %v1267 = vadd.f32 %v1246, %v1262
        %v1268 = vadd.f32 %v1247, %v1260
        %v1269 = vstv %s471
        %v1270 = vmul.f32 %v1269, %v376
        %v1271 = vmul.f32 %v1269, %v372
        %v1272 = vmul.f32 %v1269, %v377
        %1276 = vrot.lane.b32.xlu0 %v1270, 32
        %v1277 = vpop.permute.xlu0 %1276
        %1278 = vrot.lane.b32.xlu0 %v1271, 32
        %v1279 = vpop.permute.xlu0 %1278
        %1280 = vrot.lane.b32.xlu0 %v1272, 32
        %v1281 = vpop.permute.xlu0 %1280
        %v1282 = vsel %vm694, %v1277, %v1279
        %v1283 = vsel %vm694, %v1279, %v1281
        %v1287 = vadd.f32 %v1266, %v1282
        %v1288 = vadd.f32 %v1267, %v1283
        %v1289 = vadd.f32 %v1268, %v1281
        %v1290 = vadd.s32 %v267, 4294967295
        %v1291 = vadd.s32 %v268, 4294967295
        %vm1292 = vcmp.ge.s32.totalorder %v1290, 0
        %vm1293 = vcmp.ge.s32.totalorder %v1291, 0
        %vm1294 = vcmp.lt.s32.totalorder %v1290, 16
        %vm1295 = vcmp.lt.s32.totalorder %v1291, 16
        %vm1296 = vmand %vm1292, %vm1294
        %vm1297 = vmand %vm1293, %vm1295
        %1301 = vrot.lane.b32.xlu0 %v1287, 126
        %v1302 = vpop.permute.xlu0 %1301
        %1303 = vrot.lane.b32.xlu0 %v1288, 126
        %v1304 = vpop.permute.xlu0 %1303
        %1305 = vrot.lane.b32.xlu0 %v1289, 126
        %v1306 = vpop.permute.xlu0 %1305
        %vm1307 = vcmask 1031168
        %v1308 = vsel %vm1307, %v1302, %v1304
        %v1309 = vsel %vm1307, %v1304, %v1306
        %v1312 = vsel %vm1296, %v1308, 0.0
        %v1313 = vsel %vm1297, %v1309, 0.0
        %v1314 = vadd.f32 %v1022, %v1312
        %v1315 = vadd.f32 %v1023, %v1313
        %v1316 = vstv %s381
        %v1317 = vmul.f32 %v1316, %v364
        %v1318 = vmul.f32 %v1316, %v360
        %v1319 = vmul.f32 %v1316, %v365
        %v1320 = vadd.f32 %v1317, 0.0
        %v1321 = vadd.f32 %v1318, 0.0
        %v1322 = vadd.f32 %v1319, 0.0
        %v1323 = vstv %s430
        %v1324 = vmul.f32 %v1323, %v376
        %v1325 = vmul.f32 %v1323, %v372
        %v1326 = vmul.f32 %v1323, %v377
        %v1327 = vadd.f32 %v1320, %v1324
        %v1328 = vadd.f32 %v1321, %v1325
        %v1329 = vadd.f32 %v1322, %v1326
        %v1330 = vstv %s388
        %v1331 = vmul.f32 %v1330, %v364
        %v1332 = vmul.f32 %v1330, %v360
        %v1333 = vmul.f32 %v1330, %v365
        %1337 = vrot.lane.b32.xlu0 %v1331, 112
        %v1338 = vpop.permute.xlu0 %1337
        %1339 = vrot.lane.b32.xlu0 %v1332, 112
        %v1340 = vpop.permute.xlu0 %1339
        %1341 = vrot.lane.b32.xlu0 %v1333, 112
        %v1342 = vpop.permute.xlu0 %1341
        %v1343 = vsel %vm499, %v1338, %v1340
        %v1344 = vsel %vm499, %v1340, %v1342
        %v1348 = vadd.f32 %v1327, %v1343
        %v1349 = vadd.f32 %v1328, %v1344
        %v1350 = vadd.f32 %v1329, %v1342
        %v1351 = vstv %s437
        %v1352 = vmul.f32 %v1351, %v376
        %v1353 = vmul.f32 %v1351, %v372
        %v1354 = vmul.f32 %v1351, %v377
        %1358 = vrot.lane.b32.xlu0 %v1352, 112
        %v1359 = vpop.permute.xlu0 %1358
        %1360 = vrot.lane.b32.xlu0 %v1353, 112
        %v1361 = vpop.permute.xlu0 %1360
        %1362 = vrot.lane.b32.xlu0 %v1354, 112
        %v1363 = vpop.permute.xlu0 %1362
        %v1364 = vsel %vm499, %v1359, %v1361
        %v1365 = vsel %vm499, %v1361, %v1363
        %v1369 = vadd.f32 %v1348, %v1364
        %v1370 = vadd.f32 %v1349, %v1365
        %v1371 = vadd.f32 %v1350, %v1363
        %v1372 = vstv %s395
        %v1373 = vmul.f32 %v1372, %v364
        %v1374 = vmul.f32 %v1372, %v360
        %v1375 = vmul.f32 %v1372, %v365
        %1379 = vrot.lane.b32.xlu0 %v1373, 96
        %v1380 = vpop.permute.xlu0 %1379
        %1381 = vrot.lane.b32.xlu0 %v1374, 96
        %v1382 = vpop.permute.xlu0 %1381
        %1383 = vrot.lane.b32.xlu0 %v1375, 96
        %v1384 = vpop.permute.xlu0 %1383
        %v1385 = vsel %vm538, %v1380, %v1382
        %v1386 = vsel %vm538, %v1382, %v1384
        %v1390 = vadd.f32 %v1369, %v1385
        %v1391 = vadd.f32 %v1370, %v1386
        %v1392 = vadd.f32 %v1371, %v1384
        %v1393 = vstv %s444
        %v1394 = vmul.f32 %v1393, %v376
        %v1395 = vmul.f32 %v1393, %v372
        %v1396 = vmul.f32 %v1393, %v377
        %1400 = vrot.lane.b32.xlu0 %v1394, 96
        %v1401 = vpop.permute.xlu0 %1400
        %1402 = vrot.lane.b32.xlu0 %v1395, 96
        %v1403 = vpop.permute.xlu0 %1402
        %1404 = vrot.lane.b32.xlu0 %v1396, 96
        %v1405 = vpop.permute.xlu0 %1404
        %v1406 = vsel %vm538, %v1401, %v1403
        %v1407 = vsel %vm538, %v1403, %v1405
        %v1411 = vadd.f32 %v1390, %v1406
        %v1412 = vadd.f32 %v1391, %v1407
        %v1413 = vadd.f32 %v1392, %v1405
        %v1414 = vstv %s402
        %v1415 = vmul.f32 %v1414, %v364
        %v1416 = vmul.f32 %v1414, %v360
        %v1417 = vmul.f32 %v1414, %v365
        %1421 = vrot.lane.b32.xlu0 %v1415, 80
        %v1422 = vpop.permute.xlu0 %1421
        %1423 = vrot.lane.b32.xlu0 %v1416, 80
        %v1424 = vpop.permute.xlu0 %1423
        %1425 = vrot.lane.b32.xlu0 %v1417, 80
        %v1426 = vpop.permute.xlu0 %1425
        %v1427 = vsel %vm577, %v1422, %v1424
        %v1428 = vsel %vm577, %v1424, %v1426
        %v1432 = vadd.f32 %v1411, %v1427
        %v1433 = vadd.f32 %v1412, %v1428
        %v1434 = vadd.f32 %v1413, %v1426
        %v1435 = vstv %s451
        %v1436 = vmul.f32 %v1435, %v376
        %v1437 = vmul.f32 %v1435, %v372
        %v1438 = vmul.f32 %v1435, %v377
        %1442 = vrot.lane.b32.xlu0 %v1436, 80
        %v1443 = vpop.permute.xlu0 %1442
        %1444 = vrot.lane.b32.xlu0 %v1437, 80
        %v1445 = vpop.permute.xlu0 %1444
        %1446 = vrot.lane.b32.xlu0 %v1438, 80
        %v1447 = vpop.permute.xlu0 %1446
        %v1448 = vsel %vm577, %v1443, %v1445
        %v1449 = vsel %vm577, %v1445, %v1447
        %v1453 = vadd.f32 %v1432, %v1448
        %v1454 = vadd.f32 %v1433, %v1449
        %v1455 = vadd.f32 %v1434, %v1447
        %v1456 = vstv %s409
        %v1457 = vmul.f32 %v1456, %v364
        %v1458 = vmul.f32 %v1456, %v360
        %v1459 = vmul.f32 %v1456, %v365
        %1463 = vrot.lane.b32.xlu0 %v1457, 64
        %v1464 = vpop.permute.xlu0 %1463
        %1465 = vrot.lane.b32.xlu0 %v1458, 64
        %v1466 = vpop.permute.xlu0 %1465
        %1467 = vrot.lane.b32.xlu0 %v1459, 64
        %v1468 = vpop.permute.xlu0 %1467
        %v1469 = vsel %vm616, %v1464, %v1466
        %v1470 = vsel %vm616, %v1466, %v1468
        %v1474 = vadd.f32 %v1453, %v1469
        %v1475 = vadd.f32 %v1454, %v1470
        %v1476 = vadd.f32 %v1455, %v1468
        %v1477 = vstv %s458
        %v1478 = vmul.f32 %v1477, %v376
        %v1479 = vmul.f32 %v1477, %v372
        %v1480 = vmul.f32 %v1477, %v377
        %1484 = vrot.lane.b32.xlu0 %v1478, 64
        %v1485 = vpop.permute.xlu0 %1484
        %1486 = vrot.lane.b32.xlu0 %v1479, 64
        %v1487 = vpop.permute.xlu0 %1486
        %1488 = vrot.lane.b32.xlu0 %v1480, 64
        %v1489 = vpop.permute.xlu0 %1488
        %v1490 = vsel %vm616, %v1485, %v1487
        %v1491 = vsel %vm616, %v1487, %v1489
        %v1495 = vadd.f32 %v1474, %v1490
        %v1496 = vadd.f32 %v1475, %v1491
        %v1497 = vadd.f32 %v1476, %v1489
        %v1498 = vstv %s416
        %v1499 = vmul.f32 %v1498, %v364
        %v1500 = vmul.f32 %v1498, %v360
        %v1501 = vmul.f32 %v1498, %v365
        %1505 = vrot.lane.b32.xlu0 %v1499, 48
        %v1506 = vpop.permute.xlu0 %1505
        %1507 = vrot.lane.b32.xlu0 %v1500, 48
        %v1508 = vpop.permute.xlu0 %1507
        %1509 = vrot.lane.b32.xlu0 %v1501, 48
        %v1510 = vpop.permute.xlu0 %1509
        %v1511 = vsel %vm655, %v1506, %v1508
        %v1512 = vsel %vm655, %v1508, %v1510
        %v1516 = vadd.f32 %v1495, %v1511
        %v1517 = vadd.f32 %v1496, %v1512
        %v1518 = vadd.f32 %v1497, %v1510
        %v1519 = vstv %s465
        %v1520 = vmul.f32 %v1519, %v376
        %v1521 = vmul.f32 %v1519, %v372
        %v1522 = vmul.f32 %v1519, %v377
        %1526 = vrot.lane.b32.xlu0 %v1520, 48
        %v1527 = vpop.permute.xlu0 %1526
        %1528 = vrot.lane.b32.xlu0 %v1521, 48
        %v1529 = vpop.permute.xlu0 %1528
        %1530 = vrot.lane.b32.xlu0 %v1522, 48
        %v1531 = vpop.permute.xlu0 %1530
        %v1532 = vsel %vm655, %v1527, %v1529
        %v1533 = vsel %vm655, %v1529, %v1531
        %v1537 = vadd.f32 %v1516, %v1532
        %v1538 = vadd.f32 %v1517, %v1533
        %v1539 = vadd.f32 %v1518, %v1531
        %v1540 = vstv %s423
        %v1541 = vmul.f32 %v1540, %v364
        %v1542 = vmul.f32 %v1540, %v360
        %v1543 = vmul.f32 %v1540, %v365
        %1547 = vrot.lane.b32.xlu0 %v1541, 32
        %v1548 = vpop.permute.xlu0 %1547
        %1549 = vrot.lane.b32.xlu0 %v1542, 32
        %v1550 = vpop.permute.xlu0 %1549
        %1551 = vrot.lane.b32.xlu0 %v1543, 32
        %v1552 = vpop.permute.xlu0 %1551
        %v1553 = vsel %vm694, %v1548, %v1550
        %v1554 = vsel %vm694, %v1550, %v1552
        %v1558 = vadd.f32 %v1537, %v1553
        %v1559 = vadd.f32 %v1538, %v1554
        %v1560 = vadd.f32 %v1539, %v1552
        %v1561 = vstv %s472
        %v1562 = vmul.f32 %v1561, %v376
        %v1563 = vmul.f32 %v1561, %v372
        %v1564 = vmul.f32 %v1561, %v377
        %1568 = vrot.lane.b32.xlu0 %v1562, 32
        %v1569 = vpop.permute.xlu0 %1568
        %1570 = vrot.lane.b32.xlu0 %v1563, 32
        %v1571 = vpop.permute.xlu0 %1570
        %1572 = vrot.lane.b32.xlu0 %v1564, 32
        %v1573 = vpop.permute.xlu0 %1572
        %v1574 = vsel %vm694, %v1569, %v1571
        %v1575 = vsel %vm694, %v1571, %v1573
        %v1579 = vadd.f32 %v1558, %v1574
        %v1580 = vadd.f32 %v1559, %v1575
        %v1581 = vadd.f32 %v1560, %v1573
        %vm1582 = vcmp.ge.s32.totalorder %v267, 0
        %vm1583 = vcmp.ge.s32.totalorder %v268, 0
        %vm1584 = vcmp.lt.s32.totalorder %v267, 16
        %vm1585 = vcmp.lt.s32.totalorder %v268, 16
        %vm1586 = vmand %vm1582, %vm1584
        %vm1587 = vmand %vm1583, %vm1585
        %1591 = vrot.lane.b32.xlu0 %v1579, 125
        %v1592 = vpop.permute.xlu0 %1591
        %1593 = vrot.lane.b32.xlu0 %v1580, 125
        %v1594 = vpop.permute.xlu0 %1593
        %1595 = vrot.lane.b32.xlu0 %v1581, 125
        %v1596 = vpop.permute.xlu0 %1595
        %vm1597 = vcmask 1022976
        %v1598 = vsel %vm1597, %v1592, %v1594
        %v1599 = vsel %vm1597, %v1594, %v1596
        %v1602 = vsel %vm1586, %v1598, 0.0
        %v1603 = vsel %vm1587, %v1599, 0.0
        %v1604 = vadd.f32 %v1314, %v1602
        %v1605 = vadd.f32 %v1315, %v1603
        %v1606 = vstv %s382
        %v1607 = vmul.f32 %v1606, %v364
        %v1608 = vmul.f32 %v1606, %v360
        %v1609 = vmul.f32 %v1606, %v365
        %v1610 = vadd.f32 %v1607, 0.0
        %v1611 = vadd.f32 %v1608, 0.0
        %v1612 = vadd.f32 %v1609, 0.0
        %v1613 = vstv %s431
        %v1614 = vmul.f32 %v1613, %v376
        %v1615 = vmul.f32 %v1613, %v372
        %v1616 = vmul.f32 %v1613, %v377
        %v1617 = vadd.f32 %v1610, %v1614
        %v1618 = vadd.f32 %v1611, %v1615
        %v1619 = vadd.f32 %v1612, %v1616
        %v1620 = vstv %s389
        %v1621 = vmul.f32 %v1620, %v364
        %v1622 = vmul.f32 %v1620, %v360
        %v1623 = vmul.f32 %v1620, %v365
        %1627 = vrot.lane.b32.xlu0 %v1621, 112
        %v1628 = vpop.permute.xlu0 %1627
        %1629 = vrot.lane.b32.xlu0 %v1622, 112
        %v1630 = vpop.permute.xlu0 %1629
        %1631 = vrot.lane.b32.xlu0 %v1623, 112
        %v1632 = vpop.permute.xlu0 %1631
        %v1633 = vsel %vm499, %v1628, %v1630
        %v1634 = vsel %vm499, %v1630, %v1632
        %v1638 = vadd.f32 %v1617, %v1633
        %v1639 = vadd.f32 %v1618, %v1634
        %v1640 = vadd.f32 %v1619, %v1632
        %v1641 = vstv %s438
        %v1642 = vmul.f32 %v1641, %v376
        %v1643 = vmul.f32 %v1641, %v372
        %v1644 = vmul.f32 %v1641, %v377
        %1648 = vrot.lane.b32.xlu0 %v1642, 112
        %v1649 = vpop.permute.xlu0 %1648
        %1650 = vrot.lane.b32.xlu0 %v1643, 112
        %v1651 = vpop.permute.xlu0 %1650
        %1652 = vrot.lane.b32.xlu0 %v1644, 112
        %v1653 = vpop.permute.xlu0 %1652
        %v1654 = vsel %vm499, %v1649, %v1651
        %v1655 = vsel %vm499, %v1651, %v1653
        %v1659 = vadd.f32 %v1638, %v1654
        %v1660 = vadd.f32 %v1639, %v1655
        %v1661 = vadd.f32 %v1640, %v1653
        %v1662 = vstv %s396
        %v1663 = vmul.f32 %v1662, %v364
        %v1664 = vmul.f32 %v1662, %v360
        %v1665 = vmul.f32 %v1662, %v365
        %1669 = vrot.lane.b32.xlu0 %v1663, 96
        %v1670 = vpop.permute.xlu0 %1669
        %1671 = vrot.lane.b32.xlu0 %v1664, 96
        %v1672 = vpop.permute.xlu0 %1671
        %1673 = vrot.lane.b32.xlu0 %v1665, 96
        %v1674 = vpop.permute.xlu0 %1673
        %v1675 = vsel %vm538, %v1670, %v1672
        %v1676 = vsel %vm538, %v1672, %v1674
        %v1680 = vadd.f32 %v1659, %v1675
        %v1681 = vadd.f32 %v1660, %v1676
        %v1682 = vadd.f32 %v1661, %v1674
        %v1683 = vstv %s445
        %v1684 = vmul.f32 %v1683, %v376
        %v1685 = vmul.f32 %v1683, %v372
        %v1686 = vmul.f32 %v1683, %v377
        %1690 = vrot.lane.b32.xlu0 %v1684, 96
        %v1691 = vpop.permute.xlu0 %1690
        %1692 = vrot.lane.b32.xlu0 %v1685, 96
        %v1693 = vpop.permute.xlu0 %1692
        %1694 = vrot.lane.b32.xlu0 %v1686, 96
        %v1695 = vpop.permute.xlu0 %1694
        %v1696 = vsel %vm538, %v1691, %v1693
        %v1697 = vsel %vm538, %v1693, %v1695
        %v1701 = vadd.f32 %v1680, %v1696
        %v1702 = vadd.f32 %v1681, %v1697
        %v1703 = vadd.f32 %v1682, %v1695
        %v1704 = vstv %s403
        %v1705 = vmul.f32 %v1704, %v364
        %v1706 = vmul.f32 %v1704, %v360
        %v1707 = vmul.f32 %v1704, %v365
        %1711 = vrot.lane.b32.xlu0 %v1705, 80
        %v1712 = vpop.permute.xlu0 %1711
        %1713 = vrot.lane.b32.xlu0 %v1706, 80
        %v1714 = vpop.permute.xlu0 %1713
        %1715 = vrot.lane.b32.xlu0 %v1707, 80
        %v1716 = vpop.permute.xlu0 %1715
        %v1717 = vsel %vm577, %v1712, %v1714
        %v1718 = vsel %vm577, %v1714, %v1716
        %v1722 = vadd.f32 %v1701, %v1717
        %v1723 = vadd.f32 %v1702, %v1718
        %v1724 = vadd.f32 %v1703, %v1716
        %v1725 = vstv %s452
        %v1726 = vmul.f32 %v1725, %v376
        %v1727 = vmul.f32 %v1725, %v372
        %v1728 = vmul.f32 %v1725, %v377
        %1732 = vrot.lane.b32.xlu0 %v1726, 80
        %v1733 = vpop.permute.xlu0 %1732
        %1734 = vrot.lane.b32.xlu0 %v1727, 80
        %v1735 = vpop.permute.xlu0 %1734
        %1736 = vrot.lane.b32.xlu0 %v1728, 80
        %v1737 = vpop.permute.xlu0 %1736
        %v1738 = vsel %vm577, %v1733, %v1735
        %v1739 = vsel %vm577, %v1735, %v1737
        %v1743 = vadd.f32 %v1722, %v1738
        %v1744 = vadd.f32 %v1723, %v1739
        %v1745 = vadd.f32 %v1724, %v1737
        %v1746 = vstv %s410
        %v1747 = vmul.f32 %v1746, %v364
        %v1748 = vmul.f32 %v1746, %v360
        %v1749 = vmul.f32 %v1746, %v365
        %1753 = vrot.lane.b32.xlu0 %v1747, 64
        %v1754 = vpop.permute.xlu0 %1753
        %1755 = vrot.lane.b32.xlu0 %v1748, 64
        %v1756 = vpop.permute.xlu0 %1755
        %1757 = vrot.lane.b32.xlu0 %v1749, 64
        %v1758 = vpop.permute.xlu0 %1757
        %v1759 = vsel %vm616, %v1754, %v1756
        %v1760 = vsel %vm616, %v1756, %v1758
        %v1764 = vadd.f32 %v1743, %v1759
        %v1765 = vadd.f32 %v1744, %v1760
        %v1766 = vadd.f32 %v1745, %v1758
        %v1767 = vstv %s459
        %v1768 = vmul.f32 %v1767, %v376
        %v1769 = vmul.f32 %v1767, %v372
        %v1770 = vmul.f32 %v1767, %v377
        %1774 = vrot.lane.b32.xlu0 %v1768, 64
        %v1775 = vpop.permute.xlu0 %1774
        %1776 = vrot.lane.b32.xlu0 %v1769, 64
        %v1777 = vpop.permute.xlu0 %1776
        %1778 = vrot.lane.b32.xlu0 %v1770, 64
        %v1779 = vpop.permute.xlu0 %1778
        %v1780 = vsel %vm616, %v1775, %v1777
        %v1781 = vsel %vm616, %v1777, %v1779
        %v1785 = vadd.f32 %v1764, %v1780
        %v1786 = vadd.f32 %v1765, %v1781
        %v1787 = vadd.f32 %v1766, %v1779
        %v1788 = vstv %s417
        %v1789 = vmul.f32 %v1788, %v364
        %v1790 = vmul.f32 %v1788, %v360
        %v1791 = vmul.f32 %v1788, %v365
        %1795 = vrot.lane.b32.xlu0 %v1789, 48
        %v1796 = vpop.permute.xlu0 %1795
        %1797 = vrot.lane.b32.xlu0 %v1790, 48
        %v1798 = vpop.permute.xlu0 %1797
        %1799 = vrot.lane.b32.xlu0 %v1791, 48
        %v1800 = vpop.permute.xlu0 %1799
        %v1801 = vsel %vm655, %v1796, %v1798
        %v1802 = vsel %vm655, %v1798, %v1800
        %v1806 = vadd.f32 %v1785, %v1801
        %v1807 = vadd.f32 %v1786, %v1802
        %v1808 = vadd.f32 %v1787, %v1800
        %v1809 = vstv %s466
        %v1810 = vmul.f32 %v1809, %v376
        %v1811 = vmul.f32 %v1809, %v372
        %v1812 = vmul.f32 %v1809, %v377
        %1816 = vrot.lane.b32.xlu0 %v1810, 48
        %v1817 = vpop.permute.xlu0 %1816
        %1818 = vrot.lane.b32.xlu0 %v1811, 48
        %v1819 = vpop.permute.xlu0 %1818
        %1820 = vrot.lane.b32.xlu0 %v1812, 48
        %v1821 = vpop.permute.xlu0 %1820
        %v1822 = vsel %vm655, %v1817, %v1819
        %v1823 = vsel %vm655, %v1819, %v1821
        %v1827 = vadd.f32 %v1806, %v1822
        %v1828 = vadd.f32 %v1807, %v1823
        %v1829 = vadd.f32 %v1808, %v1821
        %v1830 = vstv %s424
        %v1831 = vmul.f32 %v1830, %v364
        %v1832 = vmul.f32 %v1830, %v360
        %v1833 = vmul.f32 %v1830, %v365
        %1837 = vrot.lane.b32.xlu0 %v1831, 32
        %v1838 = vpop.permute.xlu0 %1837
        %1839 = vrot.lane.b32.xlu0 %v1832, 32
        %v1840 = vpop.permute.xlu0 %1839
        %1841 = vrot.lane.b32.xlu0 %v1833, 32
        %v1842 = vpop.permute.xlu0 %1841
        %v1843 = vsel %vm694, %v1838, %v1840
        %v1844 = vsel %vm694, %v1840, %v1842
        %v1848 = vadd.f32 %v1827, %v1843
        %v1849 = vadd.f32 %v1828, %v1844
        %v1850 = vadd.f32 %v1829, %v1842
        %v1851 = vstv %s473
        %v1852 = vmul.f32 %v1851, %v376
        %v1853 = vmul.f32 %v1851, %v372
        %v1854 = vmul.f32 %v1851, %v377
        %1858 = vrot.lane.b32.xlu0 %v1852, 32
        %v1859 = vpop.permute.xlu0 %1858
        %1860 = vrot.lane.b32.xlu0 %v1853, 32
        %v1861 = vpop.permute.xlu0 %1860
        %1862 = vrot.lane.b32.xlu0 %v1854, 32
        %v1863 = vpop.permute.xlu0 %1862
        %v1864 = vsel %vm694, %v1859, %v1861
        %v1865 = vsel %vm694, %v1861, %v1863
        %v1869 = vadd.f32 %v1848, %v1864
        %v1870 = vadd.f32 %v1849, %v1865
        %v1871 = vadd.f32 %v1850, %v1863
        %v1872 = vadd.s32 %v267, 1
        %v1873 = vadd.s32 %v268, 1
        %vm1874 = vcmp.ge.s32.totalorder %v1872, 0
        %vm1875 = vcmp.ge.s32.totalorder %v1873, 0
        %vm1876 = vcmp.lt.s32.totalorder %v1872, 16
        %vm1877 = vcmp.lt.s32.totalorder %v1873, 16
        %vm1878 = vmand %vm1874, %vm1876
        %vm1879 = vmand %vm1875, %vm1877
        %1883 = vrot.lane.b32.xlu0 %v1869, 124
        %v1884 = vpop.permute.xlu0 %1883
        %1885 = vrot.lane.b32.xlu0 %v1870, 124
        %v1886 = vpop.permute.xlu0 %1885
        %1887 = vrot.lane.b32.xlu0 %v1871, 124
        %v1888 = vpop.permute.xlu0 %1887
        %vm1889 = vcmask 1014784
        %v1890 = vsel %vm1889, %v1884, %v1886
        %v1891 = vsel %vm1889, %v1886, %v1888
        %v1894 = vsel %vm1878, %v1890, 0.0
        %v1895 = vsel %vm1879, %v1891, 0.0
        %v1896 = vadd.f32 %v1604, %v1894
        %v1897 = vadd.f32 %v1605, %v1895
        %v1898 = vstv %s383
        %v1899 = vmul.f32 %v1898, %v364
        %v1900 = vmul.f32 %v1898, %v360
        %v1901 = vmul.f32 %v1898, %v365
        %v1902 = vadd.f32 %v1899, 0.0
        %v1903 = vadd.f32 %v1900, 0.0
        %v1904 = vadd.f32 %v1901, 0.0
        %v1905 = vstv %s432
        %v1906 = vmul.f32 %v1905, %v376
        %v1907 = vmul.f32 %v1905, %v372
        %v1908 = vmul.f32 %v1905, %v377
        %v1909 = vadd.f32 %v1902, %v1906
        %v1910 = vadd.f32 %v1903, %v1907
        %v1911 = vadd.f32 %v1904, %v1908
        %v1912 = vstv %s390
        %v1913 = vmul.f32 %v1912, %v364
        %v1914 = vmul.f32 %v1912, %v360
        %v1915 = vmul.f32 %v1912, %v365
        %1919 = vrot.lane.b32.xlu0 %v1913, 112
        %v1920 = vpop.permute.xlu0 %1919
        %1921 = vrot.lane.b32.xlu0 %v1914, 112
        %v1922 = vpop.permute.xlu0 %1921
        %1923 = vrot.lane.b32.xlu0 %v1915, 112
        %v1924 = vpop.permute.xlu0 %1923
        %v1925 = vsel %vm499, %v1920, %v1922
        %v1926 = vsel %vm499, %v1922, %v1924
        %v1930 = vadd.f32 %v1909, %v1925
        %v1931 = vadd.f32 %v1910, %v1926
        %v1932 = vadd.f32 %v1911, %v1924
        %v1933 = vstv %s439
        %v1934 = vmul.f32 %v1933, %v376
        %v1935 = vmul.f32 %v1933, %v372
        %v1936 = vmul.f32 %v1933, %v377
        %1940 = vrot.lane.b32.xlu0 %v1934, 112
        %v1941 = vpop.permute.xlu0 %1940
        %1942 = vrot.lane.b32.xlu0 %v1935, 112
        %v1943 = vpop.permute.xlu0 %1942
        %1944 = vrot.lane.b32.xlu0 %v1936, 112
        %v1945 = vpop.permute.xlu0 %1944
        %v1946 = vsel %vm499, %v1941, %v1943
        %v1947 = vsel %vm499, %v1943, %v1945
        %v1951 = vadd.f32 %v1930, %v1946
        %v1952 = vadd.f32 %v1931, %v1947
        %v1953 = vadd.f32 %v1932, %v1945
        %v1954 = vstv %s397
        %v1955 = vmul.f32 %v1954, %v364
        %v1956 = vmul.f32 %v1954, %v360
        %v1957 = vmul.f32 %v1954, %v365
        %1961 = vrot.lane.b32.xlu0 %v1955, 96
        %v1962 = vpop.permute.xlu0 %1961
        %1963 = vrot.lane.b32.xlu0 %v1956, 96
        %v1964 = vpop.permute.xlu0 %1963
        %1965 = vrot.lane.b32.xlu0 %v1957, 96
        %v1966 = vpop.permute.xlu0 %1965
        %v1967 = vsel %vm538, %v1962, %v1964
        %v1968 = vsel %vm538, %v1964, %v1966
        %v1972 = vadd.f32 %v1951, %v1967
        %v1973 = vadd.f32 %v1952, %v1968
        %v1974 = vadd.f32 %v1953, %v1966
        %v1975 = vstv %s446
        %v1976 = vmul.f32 %v1975, %v376
        %v1977 = vmul.f32 %v1975, %v372
        %v1978 = vmul.f32 %v1975, %v377
        %1982 = vrot.lane.b32.xlu0 %v1976, 96
        %v1983 = vpop.permute.xlu0 %1982
        %1984 = vrot.lane.b32.xlu0 %v1977, 96
        %v1985 = vpop.permute.xlu0 %1984
        %1986 = vrot.lane.b32.xlu0 %v1978, 96
        %v1987 = vpop.permute.xlu0 %1986
        %v1988 = vsel %vm538, %v1983, %v1985
        %v1989 = vsel %vm538, %v1985, %v1987
        %v1993 = vadd.f32 %v1972, %v1988
        %v1994 = vadd.f32 %v1973, %v1989
        %v1995 = vadd.f32 %v1974, %v1987
        %v1996 = vstv %s404
        %v1997 = vmul.f32 %v1996, %v364
        %v1998 = vmul.f32 %v1996, %v360
        %v1999 = vmul.f32 %v1996, %v365
        %2003 = vrot.lane.b32.xlu0 %v1997, 80
        %v2004 = vpop.permute.xlu0 %2003
        %2005 = vrot.lane.b32.xlu0 %v1998, 80
        %v2006 = vpop.permute.xlu0 %2005
        %2007 = vrot.lane.b32.xlu0 %v1999, 80
        %v2008 = vpop.permute.xlu0 %2007
        %v2009 = vsel %vm577, %v2004, %v2006
        %v2010 = vsel %vm577, %v2006, %v2008
        %v2014 = vadd.f32 %v1993, %v2009
        %v2015 = vadd.f32 %v1994, %v2010
        %v2016 = vadd.f32 %v1995, %v2008
        %v2017 = vstv %s453
        %v2018 = vmul.f32 %v2017, %v376
        %v2019 = vmul.f32 %v2017, %v372
        %v2020 = vmul.f32 %v2017, %v377
        %2024 = vrot.lane.b32.xlu0 %v2018, 80
        %v2025 = vpop.permute.xlu0 %2024
        %2026 = vrot.lane.b32.xlu0 %v2019, 80
        %v2027 = vpop.permute.xlu0 %2026
        %2028 = vrot.lane.b32.xlu0 %v2020, 80
        %v2029 = vpop.permute.xlu0 %2028
        %v2030 = vsel %vm577, %v2025, %v2027
        %v2031 = vsel %vm577, %v2027, %v2029
        %v2035 = vadd.f32 %v2014, %v2030
        %v2036 = vadd.f32 %v2015, %v2031
        %v2037 = vadd.f32 %v2016, %v2029
        %v2038 = vstv %s411
        %v2039 = vmul.f32 %v2038, %v364
        %v2040 = vmul.f32 %v2038, %v360
        %v2041 = vmul.f32 %v2038, %v365
        %2045 = vrot.lane.b32.xlu0 %v2039, 64
        %v2046 = vpop.permute.xlu0 %2045
        %2047 = vrot.lane.b32.xlu0 %v2040, 64
        %v2048 = vpop.permute.xlu0 %2047
        %2049 = vrot.lane.b32.xlu0 %v2041, 64
        %v2050 = vpop.permute.xlu0 %2049
        %v2051 = vsel %vm616, %v2046, %v2048
        %v2052 = vsel %vm616, %v2048, %v2050
        %v2056 = vadd.f32 %v2035, %v2051
        %v2057 = vadd.f32 %v2036, %v2052
        %v2058 = vadd.f32 %v2037, %v2050
        %v2059 = vstv %s460
        %v2060 = vmul.f32 %v2059, %v376
        %v2061 = vmul.f32 %v2059, %v372
        %v2062 = vmul.f32 %v2059, %v377
        %2066 = vrot.lane.b32.xlu0 %v2060, 64
        %v2067 = vpop.permute.xlu0 %2066
        %2068 = vrot.lane.b32.xlu0 %v2061, 64
        %v2069 = vpop.permute.xlu0 %2068
        %2070 = vrot.lane.b32.xlu0 %v2062, 64
        %v2071 = vpop.permute.xlu0 %2070
        %v2072 = vsel %vm616, %v2067, %v2069
        %v2073 = vsel %vm616, %v2069, %v2071
        %v2077 = vadd.f32 %v2056, %v2072
        %v2078 = vadd.f32 %v2057, %v2073
        %v2079 = vadd.f32 %v2058, %v2071
        %v2080 = vstv %s418
        %v2081 = vmul.f32 %v2080, %v364
        %v2082 = vmul.f32 %v2080, %v360
        %v2083 = vmul.f32 %v2080, %v365
        %2087 = vrot.lane.b32.xlu0 %v2081, 48
        %v2088 = vpop.permute.xlu0 %2087
        %2089 = vrot.lane.b32.xlu0 %v2082, 48
        %v2090 = vpop.permute.xlu0 %2089
        %2091 = vrot.lane.b32.xlu0 %v2083, 48
        %v2092 = vpop.permute.xlu0 %2091
        %v2093 = vsel %vm655, %v2088, %v2090
        %v2094 = vsel %vm655, %v2090, %v2092
        %v2098 = vadd.f32 %v2077, %v2093
        %v2099 = vadd.f32 %v2078, %v2094
        %v2100 = vadd.f32 %v2079, %v2092
        %v2101 = vstv %s467
        %v2102 = vmul.f32 %v2101, %v376
        %v2103 = vmul.f32 %v2101, %v372
        %v2104 = vmul.f32 %v2101, %v377
        %2108 = vrot.lane.b32.xlu0 %v2102, 48
        %v2109 = vpop.permute.xlu0 %2108
        %2110 = vrot.lane.b32.xlu0 %v2103, 48
        %v2111 = vpop.permute.xlu0 %2110
        %2112 = vrot.lane.b32.xlu0 %v2104, 48
        %v2113 = vpop.permute.xlu0 %2112
        %v2114 = vsel %vm655, %v2109, %v2111
        %v2115 = vsel %vm655, %v2111, %v2113
        %v2119 = vadd.f32 %v2098, %v2114
        %v2120 = vadd.f32 %v2099, %v2115
        %v2121 = vadd.f32 %v2100, %v2113
        %v2122 = vstv %s425
        %v2123 = vmul.f32 %v2122, %v364
        %v2124 = vmul.f32 %v2122, %v360
        %v2125 = vmul.f32 %v2122, %v365
        %2129 = vrot.lane.b32.xlu0 %v2123, 32
        %v2130 = vpop.permute.xlu0 %2129
        %2131 = vrot.lane.b32.xlu0 %v2124, 32
        %v2132 = vpop.permute.xlu0 %2131
        %2133 = vrot.lane.b32.xlu0 %v2125, 32
        %v2134 = vpop.permute.xlu0 %2133
        %v2135 = vsel %vm694, %v2130, %v2132
        %v2136 = vsel %vm694, %v2132, %v2134
        %v2140 = vadd.f32 %v2119, %v2135
        %v2141 = vadd.f32 %v2120, %v2136
        %v2142 = vadd.f32 %v2121, %v2134
        %v2143 = vstv %s474
        %v2144 = vmul.f32 %v2143, %v376
        %v2145 = vmul.f32 %v2143, %v372
        %v2146 = vmul.f32 %v2143, %v377
        %2150 = vrot.lane.b32.xlu0 %v2144, 32
        %v2151 = vpop.permute.xlu0 %2150
        %2152 = vrot.lane.b32.xlu0 %v2145, 32
        %v2153 = vpop.permute.xlu0 %2152
        %2154 = vrot.lane.b32.xlu0 %v2146, 32
        %v2155 = vpop.permute.xlu0 %2154
        %v2156 = vsel %vm694, %v2151, %v2153
        %v2157 = vsel %vm694, %v2153, %v2155
        %v2161 = vadd.f32 %v2140, %v2156
        %v2162 = vadd.f32 %v2141, %v2157
        %v2163 = vadd.f32 %v2142, %v2155
        %v2164 = vadd.s32 %v267, 2
        %v2165 = vadd.s32 %v268, 2
        %vm2166 = vcmp.ge.s32.totalorder %v2164, 0
        %vm2167 = vcmp.ge.s32.totalorder %v2165, 0
        %vm2168 = vcmp.lt.s32.totalorder %v2164, 16
        %vm2169 = vcmp.lt.s32.totalorder %v2165, 16
        %vm2170 = vmand %vm2166, %vm2168
        %vm2171 = vmand %vm2167, %vm2169
        %2175 = vrot.lane.b32.xlu0 %v2161, 123
        %v2176 = vpop.permute.xlu0 %2175
        %2177 = vrot.lane.b32.xlu0 %v2162, 123
        %v2178 = vpop.permute.xlu0 %2177
        %2179 = vrot.lane.b32.xlu0 %v2163, 123
        %v2180 = vpop.permute.xlu0 %2179
        %vm2181 = vcmask 1006592
        %v2182 = vsel %vm2181, %v2176, %v2178
        %v2183 = vsel %vm2181, %v2178, %v2180
        %v2186 = vsel %vm2170, %v2182, 0.0
        %v2187 = vsel %vm2171, %v2183, 0.0
        %v2188 = vadd.f32 %v1896, %v2186
        %v2189 = vadd.f32 %v1897, %v2187
        %v2190 = vstv %s384
        %v2191 = vmul.f32 %v2190, %v364
        %v2192 = vmul.f32 %v2190, %v360
        %v2193 = vmul.f32 %v2190, %v365
        %v2194 = vadd.f32 %v2191, 0.0
        %v2195 = vadd.f32 %v2192, 0.0
        %v2196 = vadd.f32 %v2193, 0.0
        %v2197 = vstv %s433
        %v2198 = vmul.f32 %v2197, %v376
        %v2199 = vmul.f32 %v2197, %v372
        %v2200 = vmul.f32 %v2197, %v377
        %v2201 = vadd.f32 %v2194, %v2198
        %v2202 = vadd.f32 %v2195, %v2199
        %v2203 = vadd.f32 %v2196, %v2200
        %v2204 = vstv %s391
        %v2205 = vmul.f32 %v2204, %v364
        %v2206 = vmul.f32 %v2204, %v360
        %v2207 = vmul.f32 %v2204, %v365
        %2211 = vrot.lane.b32.xlu0 %v2205, 112
        %v2212 = vpop.permute.xlu0 %2211
        %2213 = vrot.lane.b32.xlu0 %v2206, 112
        %v2214 = vpop.permute.xlu0 %2213
        %2215 = vrot.lane.b32.xlu0 %v2207, 112
        %v2216 = vpop.permute.xlu0 %2215
        %v2217 = vsel %vm499, %v2212, %v2214
        %v2218 = vsel %vm499, %v2214, %v2216
        %v2222 = vadd.f32 %v2201, %v2217
        %v2223 = vadd.f32 %v2202, %v2218
        %v2224 = vadd.f32 %v2203, %v2216
        %v2225 = vstv %s440
        %v2226 = vmul.f32 %v2225, %v376
        %v2227 = vmul.f32 %v2225, %v372
        %v2228 = vmul.f32 %v2225, %v377
        %2232 = vrot.lane.b32.xlu0 %v2226, 112
        %v2233 = vpop.permute.xlu0 %2232
        %2234 = vrot.lane.b32.xlu0 %v2227, 112
        %v2235 = vpop.permute.xlu0 %2234
        %2236 = vrot.lane.b32.xlu0 %v2228, 112
        %v2237 = vpop.permute.xlu0 %2236
        %v2238 = vsel %vm499, %v2233, %v2235
        %v2239 = vsel %vm499, %v2235, %v2237
        %v2243 = vadd.f32 %v2222, %v2238
        %v2244 = vadd.f32 %v2223, %v2239
        %v2245 = vadd.f32 %v2224, %v2237
        %v2246 = vstv %s398
        %v2247 = vmul.f32 %v2246, %v364
        %v2248 = vmul.f32 %v2246, %v360
        %v2249 = vmul.f32 %v2246, %v365
        %2253 = vrot.lane.b32.xlu0 %v2247, 96
        %v2254 = vpop.permute.xlu0 %2253
        %2255 = vrot.lane.b32.xlu0 %v2248, 96
        %v2256 = vpop.permute.xlu0 %2255
        %2257 = vrot.lane.b32.xlu0 %v2249, 96
        %v2258 = vpop.permute.xlu0 %2257
        %v2259 = vsel %vm538, %v2254, %v2256
        %v2260 = vsel %vm538, %v2256, %v2258
        %v2264 = vadd.f32 %v2243, %v2259
        %v2265 = vadd.f32 %v2244, %v2260
        %v2266 = vadd.f32 %v2245, %v2258
        %v2267 = vstv %s447
        %v2268 = vmul.f32 %v2267, %v376
        %v2269 = vmul.f32 %v2267, %v372
        %v2270 = vmul.f32 %v2267, %v377
        %2274 = vrot.lane.b32.xlu0 %v2268, 96
        %v2275 = vpop.permute.xlu0 %2274
        %2276 = vrot.lane.b32.xlu0 %v2269, 96
        %v2277 = vpop.permute.xlu0 %2276
        %2278 = vrot.lane.b32.xlu0 %v2270, 96
        %v2279 = vpop.permute.xlu0 %2278
        %v2280 = vsel %vm538, %v2275, %v2277
        %v2281 = vsel %vm538, %v2277, %v2279
        %v2285 = vadd.f32 %v2264, %v2280
        %v2286 = vadd.f32 %v2265, %v2281
        %v2287 = vadd.f32 %v2266, %v2279
        %v2288 = vstv %s405
        %v2289 = vmul.f32 %v2288, %v364
        %v2290 = vmul.f32 %v2288, %v360
        %v2291 = vmul.f32 %v2288, %v365
        %2295 = vrot.lane.b32.xlu0 %v2289, 80
        %v2296 = vpop.permute.xlu0 %2295
        %2297 = vrot.lane.b32.xlu0 %v2290, 80
        %v2298 = vpop.permute.xlu0 %2297
        %2299 = vrot.lane.b32.xlu0 %v2291, 80
        %v2300 = vpop.permute.xlu0 %2299
        %v2301 = vsel %vm577, %v2296, %v2298
        %v2302 = vsel %vm577, %v2298, %v2300
        %v2306 = vadd.f32 %v2285, %v2301
        %v2307 = vadd.f32 %v2286, %v2302
        %v2308 = vadd.f32 %v2287, %v2300
        %v2309 = vstv %s454
        %v2310 = vmul.f32 %v2309, %v376
        %v2311 = vmul.f32 %v2309, %v372
        %v2312 = vmul.f32 %v2309, %v377
        %2316 = vrot.lane.b32.xlu0 %v2310, 80
        %v2317 = vpop.permute.xlu0 %2316
        %2318 = vrot.lane.b32.xlu0 %v2311, 80
        %v2319 = vpop.permute.xlu0 %2318
        %2320 = vrot.lane.b32.xlu0 %v2312, 80
        %v2321 = vpop.permute.xlu0 %2320
        %v2322 = vsel %vm577, %v2317, %v2319
        %v2323 = vsel %vm577, %v2319, %v2321
        %v2327 = vadd.f32 %v2306, %v2322
        %v2328 = vadd.f32 %v2307, %v2323
        %v2329 = vadd.f32 %v2308, %v2321
        %v2330 = vstv %s412
        %v2331 = vmul.f32 %v2330, %v364
        %v2332 = vmul.f32 %v2330, %v360
        %v2333 = vmul.f32 %v2330, %v365
        %2337 = vrot.lane.b32.xlu0 %v2331, 64
        %v2338 = vpop.permute.xlu0 %2337
        %2339 = vrot.lane.b32.xlu0 %v2332, 64
        %v2340 = vpop.permute.xlu0 %2339
        %2341 = vrot.lane.b32.xlu0 %v2333, 64
        %v2342 = vpop.permute.xlu0 %2341
        %v2343 = vsel %vm616, %v2338, %v2340
        %v2344 = vsel %vm616, %v2340, %v2342
        %v2348 = vadd.f32 %v2327, %v2343
        %v2349 = vadd.f32 %v2328, %v2344
        %v2350 = vadd.f32 %v2329, %v2342
        %v2351 = vstv %s461
        %v2352 = vmul.f32 %v2351, %v376
        %v2353 = vmul.f32 %v2351, %v372
        %v2354 = vmul.f32 %v2351, %v377
        %2358 = vrot.lane.b32.xlu0 %v2352, 64
        %v2359 = vpop.permute.xlu0 %2358
        %2360 = vrot.lane.b32.xlu0 %v2353, 64
        %v2361 = vpop.permute.xlu0 %2360
        %2362 = vrot.lane.b32.xlu0 %v2354, 64
        %v2363 = vpop.permute.xlu0 %2362
        %v2364 = vsel %vm616, %v2359, %v2361
        %v2365 = vsel %vm616, %v2361, %v2363
        %v2369 = vadd.f32 %v2348, %v2364
        %v2370 = vadd.f32 %v2349, %v2365
        %v2371 = vadd.f32 %v2350, %v2363
        %v2372 = vstv %s419
        %v2373 = vmul.f32 %v2372, %v364
        %v2374 = vmul.f32 %v2372, %v360
        %v2375 = vmul.f32 %v2372, %v365
        %2379 = vrot.lane.b32.xlu0 %v2373, 48
        %v2380 = vpop.permute.xlu0 %2379
        %2381 = vrot.lane.b32.xlu0 %v2374, 48
        %v2382 = vpop.permute.xlu0 %2381
        %2383 = vrot.lane.b32.xlu0 %v2375, 48
        %v2384 = vpop.permute.xlu0 %2383
        %v2385 = vsel %vm655, %v2380, %v2382
        %v2386 = vsel %vm655, %v2382, %v2384
        %v2390 = vadd.f32 %v2369, %v2385
        %v2391 = vadd.f32 %v2370, %v2386
        %v2392 = vadd.f32 %v2371, %v2384
        %v2393 = vstv %s468
        %v2394 = vmul.f32 %v2393, %v376
        %v2395 = vmul.f32 %v2393, %v372
        %v2396 = vmul.f32 %v2393, %v377
        %2400 = vrot.lane.b32.xlu0 %v2394, 48
        %v2401 = vpop.permute.xlu0 %2400
        %2402 = vrot.lane.b32.xlu0 %v2395, 48
        %v2403 = vpop.permute.xlu0 %2402
        %2404 = vrot.lane.b32.xlu0 %v2396, 48
        %v2405 = vpop.permute.xlu0 %2404
        %v2406 = vsel %vm655, %v2401, %v2403
        %v2407 = vsel %vm655, %v2403, %v2405
        %v2411 = vadd.f32 %v2390, %v2406
        %v2412 = vadd.f32 %v2391, %v2407
        %v2413 = vadd.f32 %v2392, %v2405
        %v2414 = vstv %s426
        %v2415 = vmul.f32 %v2414, %v364
        %v2416 = vmul.f32 %v2414, %v360
        %v2417 = vmul.f32 %v2414, %v365
        %2421 = vrot.lane.b32.xlu0 %v2415, 32
        %v2422 = vpop.permute.xlu0 %2421
        %2423 = vrot.lane.b32.xlu0 %v2416, 32
        %v2424 = vpop.permute.xlu0 %2423
        %2425 = vrot.lane.b32.xlu0 %v2417, 32
        %v2426 = vpop.permute.xlu0 %2425
        %v2427 = vsel %vm694, %v2422, %v2424
        %v2428 = vsel %vm694, %v2424, %v2426
        %v2432 = vadd.f32 %v2411, %v2427
        %v2433 = vadd.f32 %v2412, %v2428
        %v2434 = vadd.f32 %v2413, %v2426
        %v2435 = vstv %s475
        %v2436 = vmul.f32 %v2435, %v376
        %v2437 = vmul.f32 %v2435, %v372
        %v2438 = vmul.f32 %v2435, %v377
        %2442 = vrot.lane.b32.xlu0 %v2436, 32
        %v2443 = vpop.permute.xlu0 %2442
        %2444 = vrot.lane.b32.xlu0 %v2437, 32
        %v2445 = vpop.permute.xlu0 %2444
        %2446 = vrot.lane.b32.xlu0 %v2438, 32
        %v2447 = vpop.permute.xlu0 %2446
        %v2448 = vsel %vm694, %v2443, %v2445
        %v2449 = vsel %vm694, %v2445, %v2447
        %v2453 = vadd.f32 %v2432, %v2448
        %v2454 = vadd.f32 %v2433, %v2449
        %v2455 = vadd.f32 %v2434, %v2447
        %v2456 = vadd.s32 %v267, 3
        %v2457 = vadd.s32 %v268, 3
        %vm2458 = vcmp.ge.s32.totalorder %v2456, 0
        %vm2459 = vcmp.ge.s32.totalorder %v2457, 0
        %vm2460 = vcmp.lt.s32.totalorder %v2456, 16
        %vm2461 = vcmp.lt.s32.totalorder %v2457, 16
        %vm2462 = vmand %vm2458, %vm2460
        %vm2463 = vmand %vm2459, %vm2461
        %2467 = vrot.lane.b32.xlu0 %v2453, 122
        %v2468 = vpop.permute.xlu0 %2467
        %2469 = vrot.lane.b32.xlu0 %v2454, 122
        %v2470 = vpop.permute.xlu0 %2469
        %2471 = vrot.lane.b32.xlu0 %v2455, 122
        %v2472 = vpop.permute.xlu0 %2471
        %vm2473 = vcmask 998400
        %v2474 = vsel %vm2473, %v2468, %v2470
        %v2475 = vsel %vm2473, %v2470, %v2472
        %v2478 = vsel %vm2462, %v2474, 0.0
        %v2479 = vsel %vm2463, %v2475, 0.0
        %v2480 = vadd.f32 %v2188, %v2478
        %v2481 = vadd.f32 %v2189, %v2479
        %s2482 = sld [smem:[#allocation2]]
        %v2483 = vstv %s2482
        %v2484 = vadd.f32 %v2480, %v2483
        %v2485 = vadd.f32 %v2481, %v2483
        %v2486 = vxor.u32 %v2484, 2147483648
        %v2487 = vxor.u32 %v2485, 2147483648
        %v2488 = vmul.f32 %v2486, 1.442695
        %v2489 = vpow.pop %v2488
        %v2490 = vmul.f32 %v2487, 1.442695
        %v2491 = vpow.pop %v2490
        %v2492 = vadd.f32 %v2489, 1.0
        %v2493 = vadd.f32 %v2491, 1.0
        %v2494 = vrcp.pop %v2492
        %v2495 = vmul.f32 1.0, %v2494
        %v2496 = vrcp.pop %v2493
        %v2497 = vmul.f32 1.0, %v2496
        %vm2498 = vcmp.ge.f32.partialorder %v2495, 0.2
        %vm2499 = vcmp.ge.f32.partialorder %v2497, 0.2
        %v2500 = vsel %vm2498, %v2495, 0.0
        %v2501 = vsel %vm2499, %v2497, 0.0
        %v2502 = vlaneseq
        %v2503 = vshrl.u32 %v2502, 7
        %v2504 = vsub.s32 0, %v2503
        %v2505 = vrot.slane %v2500, %v2504
        %v2506 = vlaneseq
        %v2507 = vshrl.u32 %v2506, 7
        %v2508 = vsub.s32 0, %v2507
        %v2509 = vrot.slane %v2501, %v2508
        %v2510 = vmul.f32 %v323, %v2505
        %v2511 = vmul.f32 %v324, %v2509
        %2512 = vst [vmem:[%s241] sm:$0xff] %v2510
        %2513 = vst [vmem:[%s241 + $0x8] sm:$0xff] %v2511
        %s2514 = sand.u32 %s121, 1
        %s2515 = scalar_lea.sflag [#allocation5], %s2514
        %s2516 = sand.u32 %s121, 1
        %s2517 = smul.addr %s2516, 16
        %s2518 = scalar_lea.vmem [#allocation10], %s2517
        // Predicated region
        $region49: #{tpu_custom_call.1} parent=35 // pred_check
          %p2519 = pneg %p131
        $region50: #{tpu_custom_call.1} parent=35 // pred_check_branch
          %2521 = sbr.rel (%p2519) target = $region52
        $region51: #{tpu_custom_call.1} parent=35 // pred_region
          %s2523 = ssub.s32 256, 256
          %2524 = vsyncadd %s2515, %s2523
          %s2525 = smul.addr %s24, 2
          %s2526 = smul.addr %s2525, 128
          %s2527 = scalar_lea.hbm %s4, %s2526
          %s2529 = sshll.u32 %s2518, 4
          %s2530 = int_to_ptr.vmem [resolvable:$true] %s2529
          %2532 = dma.vmem_to_hbm [thread:$0]  %s2530, 256, %s2527, %s2515
        $region52: #{tpu_custom_call.1} parent=35 // pred_fallthru
          _
      $region36: #{tpu_custom_call.1} parent=5 // pred_fallthru
        _
      %p2533 = scmp.le.s32.totalorder 2, %s19
      // Predicated region
      $region53: #{tpu_custom_call.1} parent=5 // pred_check
        %p2534 = pneg %p2533
      $region54: #{tpu_custom_call.1} parent=5 // pred_check_branch
        %2536 = sbr.rel (%p2534) target = $region56
      $region55: #{tpu_custom_call.1} parent=5 // pred_region
        %s2537 = ssub.s32 %s19, 2
        // Predicated region
        $region57: #{tpu_custom_call.1} parent=55 // pred_check
          %p2538 = pneg %p137
        $region58: #{tpu_custom_call.1} parent=55 // pred_check_branch
          %2540 = sbr.rel (%p2538) target = $region60
        $region59: #{tpu_custom_call.1} parent=55 // pred_region
          %s2541 = sand.u32 %s122, 1
          %s2542 = scalar_lea.sflag [#allocation5], %s2541
          %s2543 = sand.u32 %s122, 1
          %s2544 = smul.addr %s2543, 16
          %s2545 = scalar_lea.vmem [#allocation10], %s2544
          %2546 = dma.done %s2542, 256
        $region60: #{tpu_custom_call.1} parent=55 // pred_fallthru
          _
      $region56: #{tpu_custom_call.1} parent=5 // pred_fallthru
        _
    $region6: #{tpu_custom_call.1} parent=1 // loop_footer
      %s23 = sadd.s32 1, %s19
    $region7: #{tpu_custom_call.1} parent=1 // loop_footer_branch
      %18 = sbr.rel target = $region3
    $region8: #{tpu_custom_call.1} parent=1 // loop_exit
      _
    %2547 = vsyncpa [#allocation4], 1
    %s2548 = scalar_lea.sflag [#allocation4], 1
    %2549 = vsyncpa %s2548, 1
    %2550 = vsyncpa [#allocation5], 1
    %s2551 = scalar_lea.sflag [#allocation5], 1
    %2552 = vsyncpa %s2551, 1
    %2553 = vsyncpa [#allocation6], 1
    %s2554 = scalar_lea.sflag [#allocation6], 1
    %2555 = vsyncpa %s2554, 1
    %2556 = vsyncpa [#allocation9], 1

</llo_original>
